<compile_context>
chip_gen: v5e
topology: v5e:2x2
jax: 0.10.0
libtpu: 0.0.40
codegen_flags: <defaults>
</compile_context>

<pallas_src>
import functools

import jax
import jax.numpy as jnp
from jax import lax
from jax.experimental import pallas as pl
from jax.experimental.pallas import tpu as pltpu

# ---------------- TNT hyperparameters (module defaults) ----------------
TNT_STEPS = 3
TOP_K = 0.1
EPS = 1.0 / 255.0
LR = 1e-3
ALPHA = 1.0
BETA = 1.0
TEMPERATURE = 0.007
LOGIT_SCALE = 100.0          # model.logit_scale.exp() of a trained CLIP

NUM_CLASSES = 10
NC_PAD = 128                 # logits padded to a lane-dense 128-wide slab


def _vmem_spec():
    # whole-array block resident in VMEM; no grid, no pipelining, no double-buffer
    return pl.BlockSpec(memory_space=pltpu.MemorySpace.VMEM)


# ================= fused forward kernel: clamp -> encode -> logits =================
def _fused_encode_kernel(x_ref, n_ref, w_ref, t_ref,
                         feats_ref, inv_ref, logits_ref, *, final):
    x = x_ref[...]                                   # [B, P]  f32
    n = n_ref[...]                                   # [1, P]  f32 (broadcast over batch)
    if final:
        # final prediction pass: x + noise.clamp(-eps, eps), NO [0,1] clamp
        x_aug = x + jnp.clip(n, -EPS, EPS)
    else:
        x_aug = jnp.clip(x + n, 0.0, 1.0)

    # encode_image: linear projection on the MXU.  W is ALREADY bf16 (cast once
    # in the wrapper); only the small per-call activation is cast here.
    raw = jnp.dot(x_aug.astype(jnp.bfloat16), w_ref[...],
                  preferred_element_type=jnp.float32)                        # [B, D]

    # L2 normalize (normalize=True in encode_image); rsqrt -> EUP
    inv_norm = lax.rsqrt(jnp.maximum(jnp.sum(raw * raw, axis=-1, keepdims=True), 1e-24))
    feats = raw * inv_norm                                                   # [B, D]

    # logits = logit_scale * feats @ text_t   (text_t zero-padded to 128 classes, bf16)
    logits = LOGIT_SCALE * jnp.dot(feats.astype(jnp.bfloat16), t_ref[...],
                                   preferred_element_type=jnp.float32)       # [B, NC_PAD]

    feats_ref[...] = feats
    inv_ref[...] = inv_norm                           # residual for the backward
    logits_ref[...] = logits


def _fused_encode_call(x, noise, w_bf, t_pad_bf, *, final):
    B, P = x.shape
    Pw, D = w_bf.shape
    Dt, NCp = t_pad_bf.shape
    assert P == Pw and D == Dt
    kernel = functools.partial(_fused_encode_kernel, final=final)
    return pl.pallas_call(
        kernel,
        out_shape=(jax.ShapeDtypeStruct((B, D), jnp.float32),
                   jax.ShapeDtypeStruct((B, 1), jnp.float32),
                   jax.ShapeDtypeStruct((B, NCp), jnp.float32)),
        in_specs=[_vmem_spec(), _vmem_spec(), _vmem_spec(), _vmem_spec()],
        out_specs=(_vmem_spec(), _vmem_spec(), _vmem_spec()),
    )(x, noise, w_bf, t_pad_bf)


# ============ fused backward kernel (encode path -> d_noise, uses residuals) ============
def _fused_encode_bwd_kernel(x_ref, n_ref, wT_ref, tc_ref, f_ref, inv_ref,
                             gf_ref, gl_ref, dn_ref):
    s = x_ref[...] + n_ref[...]                       # [B, P] pre-clamp activation
    feats = f_ref[...]                                # [B, D] residual from fwd
    inv_norm = inv_ref[...]                           # [B, 1] residual from fwd

    # --- upstream gradient into feats: direct + through logits (feats @ text_t) ---
    # d_feats += logit_scale * g_logits @ text_cls   (text_cls is the PRE-TRANSPOSED
    # [NC_PAD, D] bf16 constant, so this is a straight MXU matmul)
    g_feats = gf_ref[...] + LOGIT_SCALE * jnp.dot(
        gl_ref[...].astype(jnp.bfloat16), tc_ref[...],
        preferred_element_type=jnp.float32)                                  # [B, D]

    # --- backward of L2 normalize: d_raw = inv_norm * (g - feats * <g, feats>) ---
    d_raw = inv_norm * (g_feats - feats * jnp.sum(g_feats * feats, axis=-1, keepdims=True))

    # --- backward of x_aug @ W_img:  d_x_aug = d_raw @ W_img^T (pre-transposed bf16) ---
    d_x_aug = jnp.dot(d_raw.astype(jnp.bfloat16), wT_ref[...],
                      preferred_element_type=jnp.float32)                    # [B, P]

    # --- backward of clamp(x + noise, 0, 1) + batch reduction for the shared noise ---
    mask = jnp.logical_and(s >= 0.0, s <= 1.0)
    d_x = jnp.where(mask, d_x_aug, 0.0)
    dn_ref[...] = jnp.sum(d_x, axis=0, keepdims=True)                        # [1, P]


def _fused_encode_bwd_call(x, noise, wT_bf, t_cls_bf, feats, inv_norm, g_feats, g_logits):
    B, P = x.shape
    D = feats.shape[1]
    NCp = t_cls_bf.shape[0]
    assert wT_bf.shape == (D, P) and g_logits.shape == (B, NCp)
    return pl.pallas_call(
        _fused_encode_bwd_kernel,
        out_shape=jax.ShapeDtypeStruct((1, P), jnp.float32),
        in_specs=[_vmem_spec()] * 8,
        out_specs=_vmem_spec(),
    )(x, noise, wT_bf, t_cls_bf, feats, inv_norm, g_feats, g_logits)


# ========================= custom VJP around the fused encode =========================
@jax.custom_vjp
def _tnt_encode_core(x, noise, w_bf, t_pad_bf, wT_bf, t_cls_bf):
    feats, _inv, logits = _fused_encode_call(x, noise, w_bf, t_pad_bf, final=False)
    return feats, logits


def _core_fwd(x, noise, w_bf, t_pad_bf, wT_bf, t_cls_bf):
    feats, inv_norm, logits = _fused_encode_call(x, noise, w_bf, t_pad_bf, final=False)
    # residuals: inputs needed for the clamp mask + pre-transposed constants
    # + forward residuals (feats, inv_norm) so the backward never recomputes them.
    return (feats, logits), (x, noise, wT_bf, t_cls_bf, feats, inv_norm)


def _core_bwd(res, g):
    x, noise, wT_bf, t_cls_bf, feats, inv_norm = res
    g_feats, g_logits = g
    dn = _fused_encode_bwd_call(x, noise, wT_bf, t_cls_bf, feats, inv_norm,
                                g_feats, g_logits)
    # Only the noise cotangent is real — matches the PyTorch reference where only
    # `noise` has requires_grad; the zero cotangents below are DCE'd by XLA.
    P = x.shape[1]
    D = feats.shape[1]
    NCp = t_cls_bf.shape[0]
    return (jnp.zeros_like(x), dn,
            jnp.zeros((P, D), jnp.bfloat16), jnp.zeros((D, NCp), jnp.bfloat16),
            jnp.zeros_like(wT_bf), jnp.zeros_like(t_cls_bf))


_tnt_encode_core.defvjp(_core_fwd, _core_bwd)


def tnt_encode_train(x, noise, w_bf, t_pad_bf, wT_bf, t_cls_bf):
    feats, logits_pad = _tnt_encode_core(x, noise, w_bf, t_pad_bf, wT_bf, t_cls_bf)
    return feats, logits_pad[:, :NUM_CLASSES]        # slice VJP re-pads the cotangent


def tnt_encode_final(x, noise, w_bf, t_pad_bf):
    # TODO(synk): the reference's final pass runs outside autocast (f32 weights);
    # we keep the bf16 constants here — only the sign/argmax path consumes it.
    feats, _inv, logits_pad = _fused_encode_call(x, noise, w_bf, t_pad_bf, final=True)
    return feats, logits_pad[:, :NUM_CLASSES]


# ============================ TNT forward logic (JAX glue) ============================
def _l2_normalize(f):
    return f / jnp.maximum(jnp.linalg.norm(f, axis=-1, keepdims=True), 1e-12)


def _select_confident_idx(logits):
    logp = jax.nn.log_softmax(logits, axis=1)
    p = jnp.exp(logp)
    batch_entropy = -jnp.sum(p * logp, axis=1)
    k = int(logits.shape[0] * TOP_K)
    assert k >= 1, "batch too small for top_k selection"
    return jnp.argsort(batch_entropy)[:k]            # ascending entropy


def tnt_loss(noise, x_flat, w_bf, t_pad_bf, wT_bf, t_cls_bf):
    feats, logits = tnt_encode_train(x_flat, noise, w_bf, t_pad_bf, wT_bf, t_cls_bf)
    idx = _select_confident_idx(logits)
    top_logits = logits[idx]
    top_feats = feats[idx]

    # entropy minimization loss
    probs = jax.nn.softmax(top_logits, axis=1)
    avg_probs = jnp.mean(probs, axis=0)
    entropy_loss = -jnp.sum(avg_probs * jnp.log(avg_probs + 1e-8))

    # inter-view consistency loss (cdist p=2, off-diagonal mean)
    K = top_feats.shape[0]
    diff = top_feats[:, None, :] - top_feats[None, :, :]
    d2 = jnp.sum(diff * diff, axis=-1)
    mask = ~jnp.eye(K, dtype=jnp.bool_)
    d = jnp.sqrt(jnp.maximum(jnp.where(mask, d2, 1.0), 1e-24))
    inter_view_loss = jnp.sum(jnp.where(mask, d, 0.0)) / (K * (K - 1))

    return ALPHA * entropy_loss + BETA * inter_view_loss


@jax.jit
def tnt_adapt_and_predict(noise0, x_flat, w_bf, t_pad_bf, wT_bf, t_cls_bf):
    # whole adaptation loop + final predict in ONE program: no per-step dispatch.
    def body(_, noise):
        g = jax.grad(tnt_loss)(noise, x_flat, w_bf, t_pad_bf, wT_bf, t_cls_bf)
        # 1x768 elementwise update: left to XLA (fuses trivially)
        return jnp.clip(noise - LR * jnp.sign(g), -EPS, EPS)

    noise = lax.fori_loop(0, TNT_STEPS, body, noise0)

    _feats, logits = tnt_encode_final(x_flat, noise, w_bf, t_pad_bf)
    idx = _select_confident_idx(logits)
    top_logits = logits[idx]
    probs = jnp.mean(jax.nn.softmax(top_logits / TEMPERATURE, axis=1), axis=0)
    return jnp.argmax(probs)


# ================================== main ==================================
if __name__ == "__main__":
    key = jax.random.PRNGKey(0)
    B, C, H, W = 32, 3, 16, 16      # B = number of augmented views
    D = 512                         # embedding dim (CLIP ViT-B/16 width; lane-dense)
    P = C * H * W

    k_x, k_w, k_t, k_n = jax.random.split(key, 4)
    x = jax.random.uniform(k_x, (B, C, H, W), jnp.float32)        # NCHW images in [0,1]
    x_flat = x.reshape(B, P)

    # deterministic synthetic "model" parameters (stand-in for the CLIP encoders)
    W_img = jax.random.normal(k_w, (P, D), jnp.float32) / jnp.sqrt(float(P))
    text_features = _l2_normalize(
        jax.random.normal(k_t, (NUM_CLASSES, D), jnp.float32))    # encode_text(normalize=True)

    # bf16 constants, cast ONCE outside all kernels; backward gets pre-transposed copies.
    w_bf = W_img.astype(jnp.bfloat16)                                        # [P, D]
    wT_bf = W_img.T.astype(jnp.bfloat16)                                     # [D, P]
    t_cls_bf = jnp.zeros((NC_PAD, D), jnp.bfloat16).at[:NUM_CLASSES, :].set(
        text_features.astype(jnp.bfloat16))                                  # [NC_PAD, D]
    t_pad_bf = jnp.zeros((D, NC_PAD), jnp.bfloat16).at[:, :NUM_CLASSES].set(
        text_features.T.astype(jnp.bfloat16))                                # [D, NC_PAD]

    # noise = randn_like(x[0]).clamp(-eps, eps), shared across the batch
    noise = jax.random.normal(k_n, (C, H, W), jnp.float32).reshape(1, P)
    noise = jnp.clip(noise, -EPS, EPS)

    pred = tnt_adapt_and_predict(noise, x_flat, w_bf, t_pad_bf, wT_bf, t_cls_bf)
    pred_class = int(jax.block_until_ready(pred))
    print("KERNEL_OK")
</pallas_src>

<mosaic_0001>
module attributes {stable_mosaic.version = 11 : i64} {
  func.func @_fused_encode_kernel(%arg0: memref<32x768xf32, #tpu.memory_space<vmem>>, %arg1: memref<1x768xf32, #tpu.memory_space<vmem>>, %arg2: memref<768x512xbf16, #tpu.memory_space<vmem>>, %arg3: memref<512x128xbf16, #tpu.memory_space<vmem>>, %arg4: memref<32x512xf32, #tpu.memory_space<vmem>>, %arg5: memref<32x1xf32, #tpu.memory_space<vmem>>, %arg6: memref<32x128xf32, #tpu.memory_space<vmem>>) attributes {dimension_semantics = [], scalar_prefetch = 0 : i64, scratch_operands = 0 : i64, tpu.core_type = #tpu.core_type<tc>} {
    %c0 = arith.constant 0 : index
    %c0_0 = arith.constant 0 : index
    %0 = vector.load %arg0[%c0, %c0_0] : memref<32x768xf32, #tpu.memory_space<vmem>>, vector<32x768xf32>
    %c0_1 = arith.constant 0 : index
    %c0_2 = arith.constant 0 : index
    %1 = vector.load %arg1[%c0_1, %c0_2] : memref<1x768xf32, #tpu.memory_space<vmem>>, vector<1x768xf32>
    %2 = vector.broadcast %1 : vector<1x768xf32> to vector<32x768xf32>
    %3 = arith.addf %0, %2 : vector<32x768xf32>
    %cst = arith.constant 0.000000e+00 : f32
    %cst_3 = arith.constant 1.000000e+00 : f32
    %4 = vector.broadcast %cst : f32 to vector<32x768xf32>
    %5 = arith.maximumf %4, %3 : vector<32x768xf32>
    %6 = vector.broadcast %cst_3 : f32 to vector<32x768xf32>
    %7 = arith.minimumf %6, %5 : vector<32x768xf32>
    %8 = arith.truncf %7 : vector<32x768xf32> to vector<32x768xbf16>
    %c0_4 = arith.constant 0 : index
    %c0_5 = arith.constant 0 : index
    %9 = vector.load %arg2[%c0_4, %c0_5] : memref<768x512xbf16, #tpu.memory_space<vmem>>, vector<768x512xbf16>
    %cst_6 = arith.constant dense<0.000000e+00> : vector<32x512xf32>
    %10 = tpu.matmul %8, %9, %cst_6 {dimension_numbers = #tpu.dot_dimension_numbers<[1], [0], [0], [1], [0, 0, 1, 1], [], []>} : vector<32x768xbf16>, vector<768x512xbf16>, vector<32x512xf32> -> vector<32x512xf32>
    %11 = arith.mulf %10, %10 : vector<32x512xf32>
    %cst_7 = arith.constant dense<0.000000e+00> : vector<32xf32>
    %12 = vector.multi_reduction <add>, %11, %cst_7 [1] : vector<32x512xf32> to vector<32xf32>
    %13 = vector.shape_cast %12 : vector<32xf32> to vector<32x1xf32>
    %cst_8 = arith.constant 1.000000e-24 : f32
    %14 = vector.broadcast %cst_8 : f32 to vector<32x1xf32>
    %15 = arith.maximumf %13, %14 : vector<32x1xf32>
    %16 = math.rsqrt %15 : vector<32x1xf32>
    %17 = vector.broadcast %16 : vector<32x1xf32> to vector<32x512xf32>
    %18 = arith.mulf %10, %17 : vector<32x512xf32>
    %19 = arith.truncf %18 : vector<32x512xf32> to vector<32x512xbf16>
    %c0_9 = arith.constant 0 : index
    %c0_10 = arith.constant 0 : index
    %20 = vector.load %arg3[%c0_9, %c0_10] : memref<512x128xbf16, #tpu.memory_space<vmem>>, vector<512x128xbf16>
    %cst_11 = arith.constant dense<0.000000e+00> : vector<32x128xf32>
    %21 = tpu.matmul %19, %20, %cst_11 {dimension_numbers = #tpu.dot_dimension_numbers<[1], [0], [0], [1], [0, 0, 1, 1], [], []>} : vector<32x512xbf16>, vector<512x128xbf16>, vector<32x128xf32> -> vector<32x128xf32>
    %cst_12 = arith.constant 1.000000e+02 : f32
    %22 = vector.broadcast %cst_12 : f32 to vector<32x128xf32>
    %23 = arith.mulf %22, %21 : vector<32x128xf32>
    %c0_13 = arith.constant 0 : index
    %c0_14 = arith.constant 0 : index
    %24 = vector.load %arg4[%c0_13, %c0_14] : memref<32x512xf32, #tpu.memory_space<vmem>>, vector<32x512xf32>
    tpu.vector_store %arg4[%c0_13, %c0_14], %18 {strides = array<i32>} : memref<32x512xf32, #tpu.memory_space<vmem>>, vector<32x512xf32>,
    %c0_15 = arith.constant 0 : index
    %c0_16 = arith.constant 0 : index
    %25 = vector.load %arg5[%c0_15, %c0_16] : memref<32x1xf32, #tpu.memory_space<vmem>>, vector<32x1xf32>
    tpu.vector_store %arg5[%c0_15, %c0_16], %16 {strides = array<i32>} : memref<32x1xf32, #tpu.memory_space<vmem>>, vector<32x1xf32>,
    %c0_17 = arith.constant 0 : index
    %c0_18 = arith.constant 0 : index
    %26 = vector.load %arg6[%c0_17, %c0_18] : memref<32x128xf32, #tpu.memory_space<vmem>>, vector<32x128xf32>
    tpu.vector_store %arg6[%c0_17, %c0_18], %23 {strides = array<i32>} : memref<32x128xf32, #tpu.memory_space<vmem>>, vector<32x128xf32>,
    return
  }
}

module attributes {stable_mosaic.version = 11 : i64} {
  func.func @_fused_encode_bwd_kernel(%arg0: memref<32x768xf32, #tpu.memory_space<vmem>>, %arg1: memref<1x768xf32, #tpu.memory_space<vmem>>, %arg2: memref<512x768xbf16, #tpu.memory_space<vmem>>, %arg3: memref<128x512xbf16, #tpu.memory_space<vmem>>, %arg4: memref<32x512xf32, #tpu.memory_space<vmem>>, %arg5: memref<32x1xf32, #tpu.memory_space<vmem>>, %arg6: memref<32x512xf32, #tpu.memory_space<vmem>>, %arg7: memref<32x128xf32, #tpu.memory_space<vmem>>, %arg8: memref<1x768xf32, #tpu.memory_space<vmem>>) attributes {dimension_semantics = [], scalar_prefetch = 0 : i64, scratch_operands = 0 : i64, tpu.core_type = #tpu.core_type<tc>} {
    %c0 = arith.constant 0 : index
    %c0_0 = arith.constant 0 : index
    %0 = vector.load %arg0[%c0, %c0_0] : memref<32x768xf32, #tpu.memory_space<vmem>>, vector<32x768xf32>
    %c0_1 = arith.constant 0 : index
    %c0_2 = arith.constant 0 : index
    %1 = vector.load %arg1[%c0_1, %c0_2] : memref<1x768xf32, #tpu.memory_space<vmem>>, vector<1x768xf32>
    %2 = vector.broadcast %1 : vector<1x768xf32> to vector<32x768xf32>
    %3 = arith.addf %0, %2 : vector<32x768xf32>
    %c0_3 = arith.constant 0 : index
    %c0_4 = arith.constant 0 : index
    %4 = vector.load %arg4[%c0_3, %c0_4] : memref<32x512xf32, #tpu.memory_space<vmem>>, vector<32x512xf32>
    %c0_5 = arith.constant 0 : index
    %c0_6 = arith.constant 0 : index
    %5 = vector.load %arg5[%c0_5, %c0_6] : memref<32x1xf32, #tpu.memory_space<vmem>>, vector<32x1xf32>
    %c0_7 = arith.constant 0 : index
    %c0_8 = arith.constant 0 : index
    %6 = vector.load %arg6[%c0_7, %c0_8] : memref<32x512xf32, #tpu.memory_space<vmem>>, vector<32x512xf32>
    %c0_9 = arith.constant 0 : index
    %c0_10 = arith.constant 0 : index
    %7 = vector.load %arg7[%c0_9, %c0_10] : memref<32x128xf32, #tpu.memory_space<vmem>>, vector<32x128xf32>
    %8 = arith.truncf %7 : vector<32x128xf32> to vector<32x128xbf16>
    %c0_11 = arith.constant 0 : index
    %c0_12 = arith.constant 0 : index
    %9 = vector.load %arg3[%c0_11, %c0_12] : memref<128x512xbf16, #tpu.memory_space<vmem>>, vector<128x512xbf16>
    %cst = arith.constant dense<0.000000e+00> : vector<32x512xf32>
    %10 = tpu.matmul %8, %9, %cst {dimension_numbers = #tpu.dot_dimension_numbers<[1], [0], [0], [1], [0, 0, 1, 1], [], []>} : vector<32x128xbf16>, vector<128x512xbf16>, vector<32x512xf32> -> vector<32x512xf32>
    %cst_13 = arith.constant 1.000000e+02 : f32
    %11 = vector.broadcast %cst_13 : f32 to vector<32x512xf32>
    %12 = arith.mulf %11, %10 : vector<32x512xf32>
    %13 = arith.addf %6, %12 : vector<32x512xf32>
    %14 = arith.mulf %13, %4 : vector<32x512xf32>
    %cst_14 = arith.constant dense<0.000000e+00> : vector<32xf32>
    %15 = vector.multi_reduction <add>, %14, %cst_14 [1] : vector<32x512xf32> to vector<32xf32>
    %16 = vector.shape_cast %15 : vector<32xf32> to vector<32x1xf32>
    %17 = vector.broadcast %16 : vector<32x1xf32> to vector<32x512xf32>
    %18 = arith.mulf %4, %17 : vector<32x512xf32>
    %19 = arith.subf %13, %18 : vector<32x512xf32>
    %20 = vector.broadcast %5 : vector<32x1xf32> to vector<32x512xf32>
    %21 = arith.mulf %20, %19 : vector<32x512xf32>
    %22 = arith.truncf %21 : vector<32x512xf32> to vector<32x512xbf16>
    %c0_15 = arith.constant 0 : index
    %c0_16 = arith.constant 0 : index
    %23 = vector.load %arg2[%c0_15, %c0_16] : memref<512x768xbf16, #tpu.memory_space<vmem>>, vector<512x768xbf16>
    %cst_17 = arith.constant dense<0.000000e+00> : vector<32x768xf32>
    %24 = tpu.matmul %22, %23, %cst_17 {dimension_numbers = #tpu.dot_dimension_numbers<[1], [0], [0], [1], [0, 0, 1, 1], [], []>} : vector<32x512xbf16>, vector<512x768xbf16>, vector<32x768xf32> -> vector<32x768xf32>
    %cst_18 = arith.constant 0.000000e+00 : f32
    %25 = vector.broadcast %cst_18 : f32 to vector<32x768xf32>
    %26 = arith.cmpf oge, %3, %25 : vector<32x768xf32>
    %cst_19 = arith.constant 1.000000e+00 : f32
    %27 = vector.broadcast %cst_19 : f32 to vector<32x768xf32>
    %28 = arith.cmpf ole, %3, %27 : vector<32x768xf32>
    %29 = arith.andi %26, %28 : vector<32x768xi1>
    %cst_20 = arith.constant 0.000000e+00 : f32
    %30 = vector.broadcast %cst_20 : f32 to vector<32x768xf32>
    %31 = arith.select %29, %24, %30 : vector<32x768xi1>, vector<32x768xf32>
    %cst_21 = arith.constant dense<0.000000e+00> : vector<768xf32>
    %32 = vector.multi_reduction <add>, %31, %cst_21 [0] : vector<32x768xf32> to vector<768xf32>
    %33 = vector.shape_cast %32 : vector<768xf32> to vector<1x768xf32>
    %c0_22 = arith.constant 0 : index
    %c0_23 = arith.constant 0 : index
    %34 = vector.load %arg8[%c0_22, %c0_23] : memref<1x768xf32, #tpu.memory_space<vmem>>, vector<1x768xf32>
    tpu.vector_store %arg8[%c0_22, %c0_23], %33 {strides = array<i32>} : memref<1x768xf32, #tpu.memory_space<vmem>>, vector<1x768xf32>,
    return
  }
}

module attributes {stable_mosaic.version = 11 : i64} {
  func.func @_fused_encode_kernel(%arg0: memref<32x768xf32, #tpu.memory_space<vmem>>, %arg1: memref<1x768xf32, #tpu.memory_space<vmem>>, %arg2: memref<768x512xbf16, #tpu.memory_space<vmem>>, %arg3: memref<512x128xbf16, #tpu.memory_space<vmem>>, %arg4: memref<32x512xf32, #tpu.memory_space<vmem>>, %arg5: memref<32x1xf32, #tpu.memory_space<vmem>>, %arg6: memref<32x128xf32, #tpu.memory_space<vmem>>) attributes {dimension_semantics = [], scalar_prefetch = 0 : i64, scratch_operands = 0 : i64, tpu.core_type = #tpu.core_type<tc>} {
    %c0 = arith.constant 0 : index
    %c0_0 = arith.constant 0 : index
    %0 = vector.load %arg0[%c0, %c0_0] : memref<32x768xf32, #tpu.memory_space<vmem>>, vector<32x768xf32>
    %c0_1 = arith.constant 0 : index
    %c0_2 = arith.constant 0 : index
    %1 = vector.load %arg1[%c0_1, %c0_2] : memref<1x768xf32, #tpu.memory_space<vmem>>, vector<1x768xf32>
    %cst = arith.constant -0.00392156886 : f32
    %cst_3 = arith.constant 0.00392156886 : f32
    %2 = vector.broadcast %cst : f32 to vector<1x768xf32>
    %3 = arith.maximumf %2, %1 : vector<1x768xf32>
    %4 = vector.broadcast %cst_3 : f32 to vector<1x768xf32>
    %5 = arith.minimumf %4, %3 : vector<1x768xf32>
    %6 = vector.broadcast %5 : vector<1x768xf32> to vector<32x768xf32>
    %7 = arith.addf %0, %6 : vector<32x768xf32>
    %8 = arith.truncf %7 : vector<32x768xf32> to vector<32x768xbf16>
    %c0_4 = arith.constant 0 : index
    %c0_5 = arith.constant 0 : index
    %9 = vector.load %arg2[%c0_4, %c0_5] : memref<768x512xbf16, #tpu.memory_space<vmem>>, vector<768x512xbf16>
    %cst_6 = arith.constant dense<0.000000e+00> : vector<32x512xf32>
    %10 = tpu.matmul %8, %9, %cst_6 {dimension_numbers = #tpu.dot_dimension_numbers<[1], [0], [0], [1], [0, 0, 1, 1], [], []>} : vector<32x768xbf16>, vector<768x512xbf16>, vector<32x512xf32> -> vector<32x512xf32>
    %11 = arith.mulf %10, %10 : vector<32x512xf32>
    %cst_7 = arith.constant dense<0.000000e+00> : vector<32xf32>
    %12 = vector.multi_reduction <add>, %11, %cst_7 [1] : vector<32x512xf32> to vector<32xf32>
    %13 = vector.shape_cast %12 : vector<32xf32> to vector<32x1xf32>
    %cst_8 = arith.constant 1.000000e-24 : f32
    %14 = vector.broadcast %cst_8 : f32 to vector<32x1xf32>
    %15 = arith.maximumf %13, %14 : vector<32x1xf32>
    %16 = math.rsqrt %15 : vector<32x1xf32>
    %17 = vector.broadcast %16 : vector<32x1xf32> to vector<32x512xf32>
    %18 = arith.mulf %10, %17 : vector<32x512xf32>
    %19 = arith.truncf %18 : vector<32x512xf32> to vector<32x512xbf16>
    %c0_9 = arith.constant 0 : index
    %c0_10 = arith.constant 0 : index
    %20 = vector.load %arg3[%c0_9, %c0_10] : memref<512x128xbf16, #tpu.memory_space<vmem>>, vector<512x128xbf16>
    %cst_11 = arith.constant dense<0.000000e+00> : vector<32x128xf32>
    %21 = tpu.matmul %19, %20, %cst_11 {dimension_numbers = #tpu.dot_dimension_numbers<[1], [0], [0], [1], [0, 0, 1, 1], [], []>} : vector<32x512xbf16>, vector<512x128xbf16>, vector<32x128xf32> -> vector<32x128xf32>
    %cst_12 = arith.constant 1.000000e+02 : f32
    %22 = vector.broadcast %cst_12 : f32 to vector<32x128xf32>
    %23 = arith.mulf %22, %21 : vector<32x128xf32>
    %c0_13 = arith.constant 0 : index
    %c0_14 = arith.constant 0 : index
    %24 = vector.load %arg4[%c0_13, %c0_14] : memref<32x512xf32, #tpu.memory_space<vmem>>, vector<32x512xf32>
    tpu.vector_store %arg4[%c0_13, %c0_14], %18 {strides = array<i32>} : memref<32x512xf32, #tpu.memory_space<vmem>>, vector<32x512xf32>,
    %c0_15 = arith.constant 0 : index
    %c0_16 = arith.constant 0 : index
    %25 = vector.load %arg5[%c0_15, %c0_16] : memref<32x1xf32, #tpu.memory_space<vmem>>, vector<32x1xf32>
    tpu.vector_store %arg5[%c0_15, %c0_16], %16 {strides = array<i32>} : memref<32x1xf32, #tpu.memory_space<vmem>>, vector<32x1xf32>,
    %c0_17 = arith.constant 0 : index
    %c0_18 = arith.constant 0 : index
    %26 = vector.load %arg6[%c0_17, %c0_18] : memref<32x128xf32, #tpu.memory_space<vmem>>, vector<32x128xf32>
    tpu.vector_store %arg6[%c0_17, %c0_18], %23 {strides = array<i32>} : memref<32x128xf32, #tpu.memory_space<vmem>>, vector<32x128xf32>,
    return
  }
}

</mosaic_0001>

<llo_original>
// kernel: neg.16
$region0: #{neg.16}
  #allocation0 [shape = 's32[1]{0}', space=sflag, size = 0x4, scoped, tag = 'scoped memory for neg.16']
  %s0 = inlined_call_operand.vmem [shape: f32[32], index: 0, kind: input, shape index: {}]
  %s1 = inlined_call_operand.vmem [shape: f32[32], index: 1, kind: output, shape index: {}]
  %v2 = vld [vmem:[%s0] sm:$0x1]
  %3 = xla_tuple %v2
  %4 = xla_tuple %3
  %v5 = vxor.u32 %v2, 2147483648
  %6 = xla_tuple %v5
  %7 = vst [vmem:[%s1] sm:$0x1] %v5

// kernel: neg.17
$region0: #{neg.17}
  #allocation0 [shape = 's32[1]{0}', space=sflag, size = 0x4, scoped, tag = 'scoped memory for neg.17']
  %s0 = inlined_call_operand.vmem [shape: f32[3], index: 0, kind: input, shape index: {}]
  %s1 = inlined_call_operand.vmem [shape: f32[3], index: 1, kind: output, shape index: {}]
  %v2 = vld [vmem:[%s0] sm:$0x1]
  %3 = xla_tuple %v2
  %4 = xla_tuple %3
  %v5 = vxor.u32 %v2, 2147483648
  %6 = xla_tuple %v5
  %7 = vst [vmem:[%s1] sm:$0x1] %v5

// kernel: jvp__.6
$region0: #{jvp__.6}
  #allocation0 [shape = 'u32[]', space=smem, size = 0x4, offset = 0x4, fixed_abs, tag = 'smem constant byte address 0x4 - core index']
  #allocation1 [shape = 'u32[72,128]{1,0:T(1,128)}', space=vmem, size = 0x9000, scoped, tag = 'internal scratch']
  %s0 = inlined_call_operand.hbm [shape: f32[32,768], index: 0, kind: input, shape index: {}]
  %s1 = inlined_call_operand.vmem [shape: f32[1,768], index: 1, kind: input, shape index: {}]
  %s2 = inlined_call_operand.hbm [shape: bf16[768,512], index: 2, kind: input, shape index: {}]
  %s3 = inlined_call_operand.hbm [shape: bf16[512,128], index: 3, kind: input, shape index: {}]
  %s4 = inlined_call_operand.vmem [shape: f32[32,512], index: 4, kind: output, shape index: {0}]
  %s5 = inlined_call_operand.vmem [shape: f32[32,1], index: 5, kind: output, shape index: {1}]
  %s6 = inlined_call_operand.vmem [shape: f32[32,128], index: 6, kind: output, shape index: {2}]
  %7 = xla_tuple %s4, %s5, %s6
  %s8 = sld [smem:[#allocation0]]
  $region54: #{jvp__.6} parent=0
    _
  %s10 = ssub.s32 1, %s8
  %s11 = scalar_select 0, %s10, %s8
  $region1: #{jvp__.6} parent=0
    #allocation2 [shape = 'u8[98304]{0}', space=vmem, size = 0x18000, scoped, tag = 'input window, operand 0, single buffered']
    #allocation3 [shape = 's32[1]{0}', space=sflag, size = 0x4, scoped, tag = 'scoped memory for jvp__.6']
    #allocation4 [shape = 'u8[786432]{0}', space=vmem, size = 0xc0000, scoped, tag = 'input window, operand 2, single buffered']
    #allocation5 [shape = 's32[1]{0}', space=sflag, size = 0x4, scoped, tag = 'scoped memory for jvp__.6']
    #allocation6 [shape = 'u8[131072]{0}', space=vmem, size = 0x20000, scoped, tag = 'input window, operand 3, single buffered']
    %12 = vsyncpa [#allocation3], 0
    %13 = vsyncpa [#allocation5], 0
    // Predicated region
    $region2: #{jvp__.6} parent=1 // pred_check
      _
    $region3: #{jvp__.6} parent=1 // pred_check_branch
      %15 = sbr.rel (0) target = $region5
    $region4: #{jvp__.6} parent=1 // pred_region
      %17 = vsyncadd [#allocation3], 0
      %s18 = sshll.u32 %s0, 4
      %s19 = int_to_ptr.hbm [resolvable:$true] %s18
      %s20 = sshll.u32 [#allocation2], 4
      %s21 = int_to_ptr.vmem [resolvable:$true] %s20
      %26 = dma.hbm_to_vmem [thread:$0]  %s19, 3072, %s21, [#allocation3], 768, 768, 48
    $region5: #{jvp__.6} parent=1 // pred_fallthru
      _
    // Predicated region
    $region6: #{jvp__.6} parent=1 // pred_check
      _
    $region7: #{jvp__.6} parent=1 // pred_check_branch
      %28 = sbr.rel (0) target = $region9
    $region8: #{jvp__.6} parent=1 // pred_region
      _
    $region9: #{jvp__.6} parent=1 // pred_fallthru
      _
    // Predicated region
    $region10: #{jvp__.6} parent=1 // pred_check
      _
    $region11: #{jvp__.6} parent=1 // pred_check_branch
      %30 = sbr.rel (0) target = $region13
    $region12: #{jvp__.6} parent=1 // pred_region
      %32 = vsyncadd [#allocation5], 0
      %s33 = sshll.u32 %s2, 4
      %s34 = int_to_ptr.hbm [resolvable:$true] %s33
      %s35 = sshll.u32 [#allocation4], 4
      %s36 = int_to_ptr.vmem [resolvable:$true] %s35
      %41 = dma.hbm_to_vmem [thread:$0]  %s34, 24576, %s36, [#allocation5], 256, 256, 16
    $region13: #{jvp__.6} parent=1 // pred_fallthru
      _
    // Predicated region
    $region14: #{jvp__.6} parent=1 // pred_check
      _
    $region15: #{jvp__.6} parent=1 // pred_check_branch
      %43 = sbr.rel (0) target = $region17
    $region16: #{jvp__.6} parent=1 // pred_region
      %45 = vsyncadd [#allocation5], 0
      %s46 = sshll.u32 %s3, 4
      %s47 = int_to_ptr.hbm [resolvable:$true] %s46
      %s48 = sshll.u32 [#allocation6], 4
      %s49 = int_to_ptr.vmem [resolvable:$true] %s48
      %54 = dma.hbm_to_vmem [thread:$0]  %s47, 4096, %s49, [#allocation5], 64, 64, 4
    $region17: #{jvp__.6} parent=1 // pred_fallthru
      _
    // Predicated region
    $region18: #{jvp__.6} parent=1 // pred_check
      _
    $region19: #{jvp__.6} parent=1 // pred_check_branch
      %56 = sbr.rel (0) target = $region21
    $region20: #{jvp__.6} parent=1 // pred_region
      %58 = dma.done [#allocation3], 3072
    $region21: #{jvp__.6} parent=1 // pred_fallthru
      _
    // Predicated region
    $region22: #{jvp__.6} parent=1 // pred_check
      _
    $region23: #{jvp__.6} parent=1 // pred_check_branch
      %60 = sbr.rel (0) target = $region25
    $region24: #{jvp__.6} parent=1 // pred_region
      %62 = dma.done [#allocation5], 24576
    $region25: #{jvp__.6} parent=1 // pred_fallthru
      _
    // Predicated region
    $region26: #{jvp__.6} parent=1 // pred_check
      _
    $region27: #{jvp__.6} parent=1 // pred_check_branch
      %64 = sbr.rel (0) target = $region29
    $region28: #{jvp__.6} parent=1 // pred_region
      %66 = dma.done [#allocation5], 4096
    $region29: #{jvp__.6} parent=1 // pred_fallthru
      _
    %v67 = vld [vmem:[#allocation2] sm:$0xff]
    %v68 = vld [vmem:[#allocation2 + $0x8] sm:$0xff]
    %v69 = vld [vmem:[#allocation2 + $0x10] sm:$0xff]
    %v70 = vld [vmem:[#allocation2 + $0x18] sm:$0xff]
    %v71 = vld [vmem:[#allocation2 + $0x20] sm:$0xff]
    %v72 = vld [vmem:[#allocation2 + $0x28] sm:$0xff]
    %v73 = vld [vmem:[#allocation2 + $0x30] sm:$0xff]
    %v74 = vld [vmem:[#allocation2 + $0x38] sm:$0xff]
    %v75 = vld [vmem:[#allocation2 + $0x40] sm:$0xff]
    %v76 = vld [vmem:[#allocation2 + $0x48] sm:$0xff]
    %v77 = vld [vmem:[#allocation2 + $0x50] sm:$0xff]
    %v78 = vld [vmem:[#allocation2 + $0x58] sm:$0xff]
    %v79 = vld [vmem:[#allocation2 + $0x60] sm:$0xff]
    %v80 = vld [vmem:[#allocation2 + $0x68] sm:$0xff]
    %v81 = vld [vmem:[#allocation2 + $0x70] sm:$0xff]
    %v82 = vld [vmem:[#allocation2 + $0x78] sm:$0xff]
    %v83 = vld [vmem:[#allocation2 + $0x80] sm:$0xff]
    %v84 = vld [vmem:[#allocation2 + $0x88] sm:$0xff]
    %v85 = vld [vmem:[#allocation2 + $0x90] sm:$0xff]
    %v86 = vld [vmem:[#allocation2 + $0x98] sm:$0xff]
    %v87 = vld [vmem:[#allocation2 + $0xa0] sm:$0xff]
    %v88 = vld [vmem:[#allocation2 + $0xa8] sm:$0xff]
    %v89 = vld [vmem:[#allocation2 + $0xb0] sm:$0xff]
    %v90 = vld [vmem:[#allocation2 + $0xb8] sm:$0xff]
    %v91 = vld [vmem:[%s1] sm:$0x3f]
    %v93 = vperm.slane %v91, 0
    %v94 = vperm.slane %v91, 1
    %v95 = vperm.slane %v91, 2
    %v96 = vperm.slane %v91, 3
    %v97 = vperm.slane %v91, 4
    %v98 = vperm.slane %v91, 5
    %v105 = vadd.f32 %v67, %v93
    %v106 = vadd.f32 %v68, %v94
    %v107 = vadd.f32 %v69, %v95
    %v108 = vadd.f32 %v70, %v96
    %v109 = vadd.f32 %v71, %v97
    %v110 = vadd.f32 %v72, %v98
    %v111 = vadd.f32 %v73, %v93
    %v112 = vadd.f32 %v74, %v94
    %v113 = vadd.f32 %v75, %v95
    %v114 = vadd.f32 %v76, %v96
    %v115 = vadd.f32 %v77, %v97
    %v116 = vadd.f32 %v78, %v98
    %v117 = vadd.f32 %v79, %v93
    %v118 = vadd.f32 %v80, %v94
    %v119 = vadd.f32 %v81, %v95
    %v120 = vadd.f32 %v82, %v96
    %v121 = vadd.f32 %v83, %v97
    %v122 = vadd.f32 %v84, %v98
    %v123 = vadd.f32 %v85, %v93
    %v124 = vadd.f32 %v86, %v94
    %v125 = vadd.f32 %v87, %v95
    %v126 = vadd.f32 %v88, %v96
    %v127 = vadd.f32 %v89, %v97
    %v128 = vadd.f32 %v90, %v98
    %v129 = vmax.f32 %v105, 0.0
    %v130 = vmax.f32 %v106, 0.0
    %v131 = vmax.f32 %v107, 0.0
    %v132 = vmax.f32 %v108, 0.0
    %v133 = vmax.f32 %v109, 0.0
    %v134 = vmax.f32 %v110, 0.0
    %v135 = vmax.f32 %v111, 0.0
    %v136 = vmax.f32 %v112, 0.0
    %v137 = vmax.f32 %v113, 0.0
    %v138 = vmax.f32 %v114, 0.0
    %v139 = vmax.f32 %v115, 0.0
    %v140 = vmax.f32 %v116, 0.0
    %v141 = vmax.f32 %v117, 0.0
    %v142 = vmax.f32 %v118, 0.0
    %v143 = vmax.f32 %v119, 0.0
    %v144 = vmax.f32 %v120, 0.0
    %v145 = vmax.f32 %v121, 0.0
    %v146 = vmax.f32 %v122, 0.0
    %v147 = vmax.f32 %v123, 0.0
    %v148 = vmax.f32 %v124, 0.0
    %v149 = vmax.f32 %v125, 0.0
    %v150 = vmax.f32 %v126, 0.0
    %v151 = vmax.f32 %v127, 0.0
    %v152 = vmax.f32 %v128, 0.0
    %v153 = vmin.f32 %v129, 1.0
    %v154 = vmin.f32 %v130, 1.0
    %v155 = vmin.f32 %v131, 1.0
    %v156 = vmin.f32 %v132, 1.0
    %v157 = vmin.f32 %v133, 1.0
    %v158 = vmin.f32 %v134, 1.0
    %v159 = vmin.f32 %v135, 1.0
    %v160 = vmin.f32 %v136, 1.0
    %v161 = vmin.f32 %v137, 1.0
    %v162 = vmin.f32 %v138, 1.0
    %v163 = vmin.f32 %v139, 1.0
    %v164 = vmin.f32 %v140, 1.0
    %v165 = vmin.f32 %v141, 1.0
    %v166 = vmin.f32 %v142, 1.0
    %v167 = vmin.f32 %v143, 1.0
    %v168 = vmin.f32 %v144, 1.0
    %v169 = vmin.f32 %v145, 1.0
    %v170 = vmin.f32 %v146, 1.0
    %v171 = vmin.f32 %v147, 1.0
    %v172 = vmin.f32 %v148, 1.0
    %v173 = vmin.f32 %v149, 1.0
    %v174 = vmin.f32 %v150, 1.0
    %v175 = vmin.f32 %v151, 1.0
    %v176 = vmin.f32 %v152, 1.0
    %v177 = vpack.c.bf16 %v159, %v153
    %v178 = vpack.c.bf16 %v160, %v154
    %v179 = vpack.c.bf16 %v161, %v155
    %v180 = vpack.c.bf16 %v162, %v156
    %v181 = vpack.c.bf16 %v163, %v157
    %v182 = vpack.c.bf16 %v164, %v158
    %v183 = vpack.c.bf16 %v171, %v165
    %v184 = vpack.c.bf16 %v172, %v166
    %v185 = vpack.c.bf16 %v173, %v167
    %v186 = vpack.c.bf16 %v174, %v168
    %v187 = vpack.c.bf16 %v175, %v169
    %v188 = vpack.c.bf16 %v176, %v170
    %v189 = vld [vmem:[#allocation4] sm:$0xff]
    %v190 = vld [vmem:[#allocation4 + $0x8] sm:$0xff]
    %v191 = vld [vmem:[#allocation4 + $0x10] sm:$0xff]
    %v192 = vld [vmem:[#allocation4 + $0x18] sm:$0xff]
    %v193 = vld [vmem:[#allocation4 + $0x20] sm:$0xff]
    %v194 = vld [vmem:[#allocation4 + $0x28] sm:$0xff]
    %v195 = vld [vmem:[#allocation4 + $0x30] sm:$0xff]
    %v196 = vld [vmem:[#allocation4 + $0x38] sm:$0xff]
    %v197 = vld [vmem:[#allocation4 + $0x40] sm:$0xff]
    %v198 = vld [vmem:[#allocation4 + $0x48] sm:$0xff]
    %v199 = vld [vmem:[#allocation4 + $0x50] sm:$0xff]
    %v200 = vld [vmem:[#allocation4 + $0x58] sm:$0xff]
    %v201 = vld [vmem:[#allocation4 + $0x60] sm:$0xff]
    %v202 = vld [vmem:[#allocation4 + $0x68] sm:$0xff]
    %v203 = vld [vmem:[#allocation4 + $0x70] sm:$0xff]
    %v204 = vld [vmem:[#allocation4 + $0x78] sm:$0xff]
    %v205 = vld [vmem:[#allocation4 + $0x80] sm:$0xff]
    %v206 = vld [vmem:[#allocation4 + $0x88] sm:$0xff]
    %v207 = vld [vmem:[#allocation4 + $0x90] sm:$0xff]
    %v208 = vld [vmem:[#allocation4 + $0x98] sm:$0xff]
    %v209 = vld [vmem:[#allocation4 + $0xa0] sm:$0xff]
    %v210 = vld [vmem:[#allocation4 + $0xa8] sm:$0xff]
    %v211 = vld [vmem:[#allocation4 + $0xb0] sm:$0xff]
    %v212 = vld [vmem:[#allocation4 + $0xb8] sm:$0xff]
    %v213 = vld [vmem:[#allocation4 + $0xc0] sm:$0xff]
    %v214 = vld [vmem:[#allocation4 + $0xc8] sm:$0xff]
    %v215 = vld [vmem:[#allocation4 + $0xd0] sm:$0xff]
    %v216 = vld [vmem:[#allocation4 + $0xd8] sm:$0xff]
    %v217 = vld [vmem:[#allocation4 + $0xe0] sm:$0xff]
    %v218 = vld [vmem:[#allocation4 + $0xe8] sm:$0xff]
    %v219 = vld [vmem:[#allocation4 + $0xf0] sm:$0xff]
    %v220 = vld [vmem:[#allocation4 + $0xf8] sm:$0xff]
    %v221 = vld [vmem:[#allocation4 + $0x100] sm:$0xff]
    %v222 = vld [vmem:[#allocation4 + $0x108] sm:$0xff]
    %v223 = vld [vmem:[#allocation4 + $0x110] sm:$0xff]
    %v224 = vld [vmem:[#allocation4 + $0x118] sm:$0xff]
    %v225 = vld [vmem:[#allocation4 + $0x120] sm:$0xff]
    %v226 = vld [vmem:[#allocation4 + $0x128] sm:$0xff]
    %v227 = vld [vmem:[#allocation4 + $0x130] sm:$0xff]
    %v228 = vld [vmem:[#allocation4 + $0x138] sm:$0xff]
    %v229 = vld [vmem:[#allocation4 + $0x140] sm:$0xff]
    %v230 = vld [vmem:[#allocation4 + $0x148] sm:$0xff]
    %v231 = vld [vmem:[#allocation4 + $0x150] sm:$0xff]
    %v232 = vld [vmem:[#allocation4 + $0x158] sm:$0xff]
    %v233 = vld [vmem:[#allocation4 + $0x160] sm:$0xff]
    %v234 = vld [vmem:[#allocation4 + $0x168] sm:$0xff]
    %v235 = vld [vmem:[#allocation4 + $0x170] sm:$0xff]
    %v236 = vld [vmem:[#allocation4 + $0x178] sm:$0xff]
    %v237 = vld [vmem:[#allocation4 + $0x180] sm:$0xff]
    %v238 = vld [vmem:[#allocation4 + $0x188] sm:$0xff]
    %v239 = vld [vmem:[#allocation4 + $0x190] sm:$0xff]
    %v240 = vld [vmem:[#allocation4 + $0x198] sm:$0xff]
    %v241 = vld [vmem:[#allocation4 + $0x1a0] sm:$0xff]
    %v242 = vld [vmem:[#allocation4 + $0x1a8] sm:$0xff]
    %v243 = vld [vmem:[#allocation4 + $0x1b0] sm:$0xff]
    %v244 = vld [vmem:[#allocation4 + $0x1b8] sm:$0xff]
    %v245 = vld [vmem:[#allocation4 + $0x1c0] sm:$0xff]
    %v246 = vld [vmem:[#allocation4 + $0x1c8] sm:$0xff]
    %v247 = vld [vmem:[#allocation4 + $0x1d0] sm:$0xff]
    %v248 = vld [vmem:[#allocation4 + $0x1d8] sm:$0xff]
    %v249 = vld [vmem:[#allocation4 + $0x1e0] sm:$0xff]
    %v250 = vld [vmem:[#allocation4 + $0x1e8] sm:$0xff]
    %v251 = vld [vmem:[#allocation4 + $0x1f0] sm:$0xff]
    %v252 = vld [vmem:[#allocation4 + $0x1f8] sm:$0xff]
    %v253 = vld [vmem:[#allocation4 + $0x200] sm:$0xff]
    %v254 = vld [vmem:[#allocation4 + $0x208] sm:$0xff]
    %v255 = vld [vmem:[#allocation4 + $0x210] sm:$0xff]
    %v256 = vld [vmem:[#allocation4 + $0x218] sm:$0xff]
    %v257 = vld [vmem:[#allocation4 + $0x220] sm:$0xff]
    %v258 = vld [vmem:[#allocation4 + $0x228] sm:$0xff]
    %v259 = vld [vmem:[#allocation4 + $0x230] sm:$0xff]
    %v260 = vld [vmem:[#allocation4 + $0x238] sm:$0xff]
    %v261 = vld [vmem:[#allocation4 + $0x240] sm:$0xff]
    %v262 = vld [vmem:[#allocation4 + $0x248] sm:$0xff]
    %v263 = vld [vmem:[#allocation4 + $0x250] sm:$0xff]
    %v264 = vld [vmem:[#allocation4 + $0x258] sm:$0xff]
    %v265 = vld [vmem:[#allocation4 + $0x260] sm:$0xff]
    %v266 = vld [vmem:[#allocation4 + $0x268] sm:$0xff]
    %v267 = vld [vmem:[#allocation4 + $0x270] sm:$0xff]
    %v268 = vld [vmem:[#allocation4 + $0x278] sm:$0xff]
    %v269 = vld [vmem:[#allocation4 + $0x280] sm:$0xff]
    %v270 = vld [vmem:[#allocation4 + $0x288] sm:$0xff]
    %v271 = vld [vmem:[#allocation4 + $0x290] sm:$0xff]
    %v272 = vld [vmem:[#allocation4 + $0x298] sm:$0xff]
    %v273 = vld [vmem:[#allocation4 + $0x2a0] sm:$0xff]
    %v274 = vld [vmem:[#allocation4 + $0x2a8] sm:$0xff]
    %v275 = vld [vmem:[#allocation4 + $0x2b0] sm:$0xff]
    %v276 = vld [vmem:[#allocation4 + $0x2b8] sm:$0xff]
    %v277 = vld [vmem:[#allocation4 + $0x2c0] sm:$0xff]
    %v278 = vld [vmem:[#allocation4 + $0x2c8] sm:$0xff]
    %v279 = vld [vmem:[#allocation4 + $0x2d0] sm:$0xff]
    %v280 = vld [vmem:[#allocation4 + $0x2d8] sm:$0xff]
    %v281 = vld [vmem:[#allocation4 + $0x2e0] sm:$0xff]
    %v282 = vld [vmem:[#allocation4 + $0x2e8] sm:$0xff]
    %v283 = vld [vmem:[#allocation4 + $0x2f0] sm:$0xff]
    %v284 = vld [vmem:[#allocation4 + $0x2f8] sm:$0xff]
    %v285 = vld [vmem:[#allocation4 + $0x300] sm:$0xff]
    %v286 = vld [vmem:[#allocation4 + $0x308] sm:$0xff]
    %v287 = vld [vmem:[#allocation4 + $0x310] sm:$0xff]
    %v288 = vld [vmem:[#allocation4 + $0x318] sm:$0xff]
    %v289 = vld [vmem:[#allocation4 + $0x320] sm:$0xff]
    %v290 = vld [vmem:[#allocation4 + $0x328] sm:$0xff]
    %v291 = vld [vmem:[#allocation4 + $0x330] sm:$0xff]
    %v292 = vld [vmem:[#allocation4 + $0x338] sm:$0xff]
    %v293 = vld [vmem:[#allocation4 + $0x340] sm:$0xff]
    %v294 = vld [vmem:[#allocation4 + $0x348] sm:$0xff]
    %v295 = vld [vmem:[#allocation4 + $0x350] sm:$0xff]
    %v296 = vld [vmem:[#allocation4 + $0x358] sm:$0xff]
    %v297 = vld [vmem:[#allocation4 + $0x360] sm:$0xff]
    %v298 = vld [vmem:[#allocation4 + $0x368] sm:$0xff]
    %v299 = vld [vmem:[#allocation4 + $0x370] sm:$0xff]
    %v300 = vld [vmem:[#allocation4 + $0x378] sm:$0xff]
    %v301 = vld [vmem:[#allocation4 + $0x380] sm:$0xff]
    %v302 = vld [vmem:[#allocation4 + $0x388] sm:$0xff]
    %v303 = vld [vmem:[#allocation4 + $0x390] sm:$0xff]
    %v304 = vld [vmem:[#allocation4 + $0x398] sm:$0xff]
    %v305 = vld [vmem:[#allocation4 + $0x3a0] sm:$0xff]
    %v306 = vld [vmem:[#allocation4 + $0x3a8] sm:$0xff]
    %v307 = vld [vmem:[#allocation4 + $0x3b0] sm:$0xff]
    %v308 = vld [vmem:[#allocation4 + $0x3b8] sm:$0xff]
    %v309 = vld [vmem:[#allocation4 + $0x3c0] sm:$0xff]
    %v310 = vld [vmem:[#allocation4 + $0x3c8] sm:$0xff]
    %v311 = vld [vmem:[#allocation4 + $0x3d0] sm:$0xff]
    %v312 = vld [vmem:[#allocation4 + $0x3d8] sm:$0xff]
    %v313 = vld [vmem:[#allocation4 + $0x3e0] sm:$0xff]
    %v314 = vld [vmem:[#allocation4 + $0x3e8] sm:$0xff]
    %v315 = vld [vmem:[#allocation4 + $0x3f0] sm:$0xff]
    %v316 = vld [vmem:[#allocation4 + $0x3f8] sm:$0xff]
    %v317 = vld [vmem:[#allocation4 + $0x400] sm:$0xff]
    %v318 = vld [vmem:[#allocation4 + $0x408] sm:$0xff]
    %v319 = vld [vmem:[#allocation4 + $0x410] sm:$0xff]
    %v320 = vld [vmem:[#allocation4 + $0x418] sm:$0xff]
    %v321 = vld [vmem:[#allocation4 + $0x420] sm:$0xff]
    %v322 = vld [vmem:[#allocation4 + $0x428] sm:$0xff]
    %v323 = vld [vmem:[#allocation4 + $0x430] sm:$0xff]
    %v324 = vld [vmem:[#allocation4 + $0x438] sm:$0xff]
    %v325 = vld [vmem:[#allocation4 + $0x440] sm:$0xff]
    %v326 = vld [vmem:[#allocation4 + $0x448] sm:$0xff]
    %v327 = vld [vmem:[#allocation4 + $0x450] sm:$0xff]
    %v328 = vld [vmem:[#allocation4 + $0x458] sm:$0xff]
    %v329 = vld [vmem:[#allocation4 + $0x460] sm:$0xff]
    %v330 = vld [vmem:[#allocation4 + $0x468] sm:$0xff]
    %v331 = vld [vmem:[#allocation4 + $0x470] sm:$0xff]
    %v332 = vld [vmem:[#allocation4 + $0x478] sm:$0xff]
    %v333 = vld [vmem:[#allocation4 + $0x480] sm:$0xff]
    %v334 = vld [vmem:[#allocation4 + $0x488] sm:$0xff]
    %v335 = vld [vmem:[#allocation4 + $0x490] sm:$0xff]
    %v336 = vld [vmem:[#allocation4 + $0x498] sm:$0xff]
    %v337 = vld [vmem:[#allocation4 + $0x4a0] sm:$0xff]
    %v338 = vld [vmem:[#allocation4 + $0x4a8] sm:$0xff]
    %v339 = vld [vmem:[#allocation4 + $0x4b0] sm:$0xff]
    %v340 = vld [vmem:[#allocation4 + $0x4b8] sm:$0xff]
    %v341 = vld [vmem:[#allocation4 + $0x4c0] sm:$0xff]
    %v342 = vld [vmem:[#allocation4 + $0x4c8] sm:$0xff]
    %v343 = vld [vmem:[#allocation4 + $0x4d0] sm:$0xff]
    %v344 = vld [vmem:[#allocation4 + $0x4d8] sm:$0xff]
    %v345 = vld [vmem:[#allocation4 + $0x4e0] sm:$0xff]
    %v346 = vld [vmem:[#allocation4 + $0x4e8] sm:$0xff]
    %v347 = vld [vmem:[#allocation4 + $0x4f0] sm:$0xff]
    %v348 = vld [vmem:[#allocation4 + $0x4f8] sm:$0xff]
    %v349 = vld [vmem:[#allocation4 + $0x500] sm:$0xff]
    %v350 = vld [vmem:[#allocation4 + $0x508] sm:$0xff]
    %v351 = vld [vmem:[#allocation4 + $0x510] sm:$0xff]
    %v352 = vld [vmem:[#allocation4 + $0x518] sm:$0xff]
    %v353 = vld [vmem:[#allocation4 + $0x520] sm:$0xff]
    %v354 = vld [vmem:[#allocation4 + $0x528] sm:$0xff]
    %v355 = vld [vmem:[#allocation4 + $0x530] sm:$0xff]
    %v356 = vld [vmem:[#allocation4 + $0x538] sm:$0xff]
    %v357 = vld [vmem:[#allocation4 + $0x540] sm:$0xff]
    %v358 = vld [vmem:[#allocation4 + $0x548] sm:$0xff]
    %v359 = vld [vmem:[#allocation4 + $0x550] sm:$0xff]
    %v360 = vld [vmem:[#allocation4 + $0x558] sm:$0xff]
    %v361 = vld [vmem:[#allocation4 + $0x560] sm:$0xff]
    %v362 = vld [vmem:[#allocation4 + $0x568] sm:$0xff]
    %v363 = vld [vmem:[#allocation4 + $0x570] sm:$0xff]
    %v364 = vld [vmem:[#allocation4 + $0x578] sm:$0xff]
    %v365 = vld [vmem:[#allocation4 + $0x580] sm:$0xff]
    %v366 = vld [vmem:[#allocation4 + $0x588] sm:$0xff]
    %v367 = vld [vmem:[#allocation4 + $0x590] sm:$0xff]
    %v368 = vld [vmem:[#allocation4 + $0x598] sm:$0xff]
    %v369 = vld [vmem:[#allocation4 + $0x5a0] sm:$0xff]
    %v370 = vld [vmem:[#allocation4 + $0x5a8] sm:$0xff]
    %v371 = vld [vmem:[#allocation4 + $0x5b0] sm:$0xff]
    %v372 = vld [vmem:[#allocation4 + $0x5b8] sm:$0xff]
    %v373 = vld [vmem:[#allocation4 + $0x5c0] sm:$0xff]
    %v374 = vld [vmem:[#allocation4 + $0x5c8] sm:$0xff]
    %v375 = vld [vmem:[#allocation4 + $0x5d0] sm:$0xff]
    %v376 = vld [vmem:[#allocation4 + $0x5d8] sm:$0xff]
    %v377 = vld [vmem:[#allocation4 + $0x5e0] sm:$0xff]
    %v378 = vld [vmem:[#allocation4 + $0x5e8] sm:$0xff]
    %v379 = vld [vmem:[#allocation4 + $0x5f0] sm:$0xff]
    %v380 = vld [vmem:[#allocation4 + $0x5f8] sm:$0xff]
    %v573 = vunpack.c.l.b16 %v189
    %v574 = vunpack.c.h.b16 %v189
    %v575 = vunpack.c.l.b16 %v190
    %v576 = vunpack.c.h.b16 %v190
    %v577 = vunpack.c.l.b16 %v191
    %v578 = vunpack.c.h.b16 %v191
    %v579 = vunpack.c.l.b16 %v192
    %v580 = vunpack.c.h.b16 %v192
    %v581 = vunpack.c.l.b16 %v193
    %v582 = vunpack.c.h.b16 %v193
    %v583 = vunpack.c.l.b16 %v194
    %v584 = vunpack.c.h.b16 %v194
    %v585 = vunpack.c.l.b16 %v195
    %v586 = vunpack.c.h.b16 %v195
    %v587 = vunpack.c.l.b16 %v196
    %v588 = vunpack.c.h.b16 %v196
    %v589 = vunpack.c.l.b16 %v197
    %v590 = vunpack.c.h.b16 %v197
    %v591 = vunpack.c.l.b16 %v198
    %v592 = vunpack.c.h.b16 %v198
    %v593 = vunpack.c.l.b16 %v199
    %v594 = vunpack.c.h.b16 %v199
    %v595 = vunpack.c.l.b16 %v200
    %v596 = vunpack.c.h.b16 %v200
    %v597 = vunpack.c.l.b16 %v201
    %v598 = vunpack.c.h.b16 %v201
    %v599 = vunpack.c.l.b16 %v202
    %v600 = vunpack.c.h.b16 %v202
    %v601 = vunpack.c.l.b16 %v203
    %v602 = vunpack.c.h.b16 %v203
    %v603 = vunpack.c.l.b16 %v204
    %v604 = vunpack.c.h.b16 %v204
    %v605 = vunpack.c.l.b16 %v205
    %v606 = vunpack.c.h.b16 %v205
    %v607 = vunpack.c.l.b16 %v206
    %v608 = vunpack.c.h.b16 %v206
    %v609 = vunpack.c.l.b16 %v207
    %v610 = vunpack.c.h.b16 %v207
    %v611 = vunpack.c.l.b16 %v208
    %v612 = vunpack.c.h.b16 %v208
    %v613 = vunpack.c.l.b16 %v209
    %v614 = vunpack.c.h.b16 %v209
    %v615 = vunpack.c.l.b16 %v210
    %v616 = vunpack.c.h.b16 %v210
    %v617 = vunpack.c.l.b16 %v211
    %v618 = vunpack.c.h.b16 %v211
    %v619 = vunpack.c.l.b16 %v212
    %v620 = vunpack.c.h.b16 %v212
    %v621 = vunpack.c.l.b16 %v213
    %v622 = vunpack.c.h.b16 %v213
    %v623 = vunpack.c.l.b16 %v214
    %v624 = vunpack.c.h.b16 %v214
    %v625 = vunpack.c.l.b16 %v215
    %v626 = vunpack.c.h.b16 %v215
    %v627 = vunpack.c.l.b16 %v216
    %v628 = vunpack.c.h.b16 %v216
    %v629 = vunpack.c.l.b16 %v217
    %v630 = vunpack.c.h.b16 %v217
    %v631 = vunpack.c.l.b16 %v218
    %v632 = vunpack.c.h.b16 %v218
    %v633 = vunpack.c.l.b16 %v219
    %v634 = vunpack.c.h.b16 %v219
    %v635 = vunpack.c.l.b16 %v220
    %v636 = vunpack.c.h.b16 %v220
    %v637 = vunpack.c.l.b16 %v221
    %v638 = vunpack.c.h.b16 %v221
    %v639 = vunpack.c.l.b16 %v222
    %v640 = vunpack.c.h.b16 %v222
    %v641 = vunpack.c.l.b16 %v223
    %v642 = vunpack.c.h.b16 %v223
    %v643 = vunpack.c.l.b16 %v224
    %v644 = vunpack.c.h.b16 %v224
    %v645 = vunpack.c.l.b16 %v225
    %v646 = vunpack.c.h.b16 %v225
    %v647 = vunpack.c.l.b16 %v226
    %v648 = vunpack.c.h.b16 %v226
    %v649 = vunpack.c.l.b16 %v227
    %v650 = vunpack.c.h.b16 %v227
    %v651 = vunpack.c.l.b16 %v228
    %v652 = vunpack.c.h.b16 %v228
    %v653 = vunpack.c.l.b16 %v229
    %v654 = vunpack.c.h.b16 %v229
    %v655 = vunpack.c.l.b16 %v230
    %v656 = vunpack.c.h.b16 %v230
    %v657 = vunpack.c.l.b16 %v231
    %v658 = vunpack.c.h.b16 %v231
    %v659 = vunpack.c.l.b16 %v232
    %v660 = vunpack.c.h.b16 %v232
    %v661 = vunpack.c.l.b16 %v233
    %v662 = vunpack.c.h.b16 %v233
    %v663 = vunpack.c.l.b16 %v234
    %v664 = vunpack.c.h.b16 %v234
    %v665 = vunpack.c.l.b16 %v235
    %v666 = vunpack.c.h.b16 %v235
    %v667 = vunpack.c.l.b16 %v236
    %v668 = vunpack.c.h.b16 %v236
    %v669 = vunpack.c.l.b16 %v237
    %v670 = vunpack.c.h.b16 %v237
    %v671 = vunpack.c.l.b16 %v238
    %v672 = vunpack.c.h.b16 %v238
    %v673 = vunpack.c.l.b16 %v239
    %v674 = vunpack.c.h.b16 %v239
    %v675 = vunpack.c.l.b16 %v240
    %v676 = vunpack.c.h.b16 %v240
    %v677 = vunpack.c.l.b16 %v241
    %v678 = vunpack.c.h.b16 %v241
    %v679 = vunpack.c.l.b16 %v242
    %v680 = vunpack.c.h.b16 %v242
    %v681 = vunpack.c.l.b16 %v243
    %v682 = vunpack.c.h.b16 %v243
    %v683 = vunpack.c.l.b16 %v244
    %v684 = vunpack.c.h.b16 %v244
    %v685 = vunpack.c.l.b16 %v245
    %v686 = vunpack.c.h.b16 %v245
    %v687 = vunpack.c.l.b16 %v246
    %v688 = vunpack.c.h.b16 %v246
    %v689 = vunpack.c.l.b16 %v247
    %v690 = vunpack.c.h.b16 %v247
    %v691 = vunpack.c.l.b16 %v248
    %v692 = vunpack.c.h.b16 %v248
    %v693 = vunpack.c.l.b16 %v249
    %v694 = vunpack.c.h.b16 %v249
    %v695 = vunpack.c.l.b16 %v250
    %v696 = vunpack.c.h.b16 %v250
    %v697 = vunpack.c.l.b16 %v251
    %v698 = vunpack.c.h.b16 %v251
    %v699 = vunpack.c.l.b16 %v252
    %v700 = vunpack.c.h.b16 %v252
    %v701 = vunpack.c.l.b16 %v253
    %v702 = vunpack.c.h.b16 %v253
    %v703 = vunpack.c.l.b16 %v254
    %v704 = vunpack.c.h.b16 %v254
    %v705 = vunpack.c.l.b16 %v255
    %v706 = vunpack.c.h.b16 %v255
    %v707 = vunpack.c.l.b16 %v256
    %v708 = vunpack.c.h.b16 %v256
    %v709 = vunpack.c.l.b16 %v257
    %v710 = vunpack.c.h.b16 %v257
    %v711 = vunpack.c.l.b16 %v258
    %v712 = vunpack.c.h.b16 %v258
    %v713 = vunpack.c.l.b16 %v259
    %v714 = vunpack.c.h.b16 %v259
    %v715 = vunpack.c.l.b16 %v260
    %v716 = vunpack.c.h.b16 %v260
    %v717 = vunpack.c.l.b16 %v261
    %v718 = vunpack.c.h.b16 %v261
    %v719 = vunpack.c.l.b16 %v262
    %v720 = vunpack.c.h.b16 %v262
    %v721 = vunpack.c.l.b16 %v263
    %v722 = vunpack.c.h.b16 %v263
    %v723 = vunpack.c.l.b16 %v264
    %v724 = vunpack.c.h.b16 %v264
    %v725 = vunpack.c.l.b16 %v265
    %v726 = vunpack.c.h.b16 %v265
    %v727 = vunpack.c.l.b16 %v266
    %v728 = vunpack.c.h.b16 %v266
    %v729 = vunpack.c.l.b16 %v267
    %v730 = vunpack.c.h.b16 %v267
    %v731 = vunpack.c.l.b16 %v268
    %v732 = vunpack.c.h.b16 %v268
    %v733 = vunpack.c.l.b16 %v269
    %v734 = vunpack.c.h.b16 %v269
    %v735 = vunpack.c.l.b16 %v270
    %v736 = vunpack.c.h.b16 %v270
    %v737 = vunpack.c.l.b16 %v271
    %v738 = vunpack.c.h.b16 %v271
    %v739 = vunpack.c.l.b16 %v272
    %v740 = vunpack.c.h.b16 %v272
    %v741 = vunpack.c.l.b16 %v273
    %v742 = vunpack.c.h.b16 %v273
    %v743 = vunpack.c.l.b16 %v274
    %v744 = vunpack.c.h.b16 %v274
    %v745 = vunpack.c.l.b16 %v275
    %v746 = vunpack.c.h.b16 %v275
    %v747 = vunpack.c.l.b16 %v276
    %v748 = vunpack.c.h.b16 %v276
    %v749 = vunpack.c.l.b16 %v277
    %v750 = vunpack.c.h.b16 %v277
    %v751 = vunpack.c.l.b16 %v278
    %v752 = vunpack.c.h.b16 %v278
    %v753 = vunpack.c.l.b16 %v279
    %v754 = vunpack.c.h.b16 %v279
    %v755 = vunpack.c.l.b16 %v280
    %v756 = vunpack.c.h.b16 %v280
    %v757 = vunpack.c.l.b16 %v281
    %v758 = vunpack.c.h.b16 %v281
    %v759 = vunpack.c.l.b16 %v282
    %v760 = vunpack.c.h.b16 %v282
    %v761 = vunpack.c.l.b16 %v283
    %v762 = vunpack.c.h.b16 %v283
    %v763 = vunpack.c.l.b16 %v284
    %v764 = vunpack.c.h.b16 %v284
    %v765 = vunpack.c.l.b16 %v285
    %v766 = vunpack.c.h.b16 %v285
    %v767 = vunpack.c.l.b16 %v286
    %v768 = vunpack.c.h.b16 %v286
    %v769 = vunpack.c.l.b16 %v287
    %v770 = vunpack.c.h.b16 %v287
    %v771 = vunpack.c.l.b16 %v288
    %v772 = vunpack.c.h.b16 %v288
    %v773 = vunpack.c.l.b16 %v289
    %v774 = vunpack.c.h.b16 %v289
    %v775 = vunpack.c.l.b16 %v290
    %v776 = vunpack.c.h.b16 %v290
    %v777 = vunpack.c.l.b16 %v291
    %v778 = vunpack.c.h.b16 %v291
    %v779 = vunpack.c.l.b16 %v292
    %v780 = vunpack.c.h.b16 %v292
    %v781 = vunpack.c.l.b16 %v293
    %v782 = vunpack.c.h.b16 %v293
    %v783 = vunpack.c.l.b16 %v294
    %v784 = vunpack.c.h.b16 %v294
    %v785 = vunpack.c.l.b16 %v295
    %v786 = vunpack.c.h.b16 %v295
    %v787 = vunpack.c.l.b16 %v296
    %v788 = vunpack.c.h.b16 %v296
    %v789 = vunpack.c.l.b16 %v297
    %v790 = vunpack.c.h.b16 %v297
    %v791 = vunpack.c.l.b16 %v298
    %v792 = vunpack.c.h.b16 %v298
    %v793 = vunpack.c.l.b16 %v299
    %v794 = vunpack.c.h.b16 %v299
    %v795 = vunpack.c.l.b16 %v300
    %v796 = vunpack.c.h.b16 %v300
    %v797 = vunpack.c.l.b16 %v301
    %v798 = vunpack.c.h.b16 %v301
    %v799 = vunpack.c.l.b16 %v302
    %v800 = vunpack.c.h.b16 %v302
    %v801 = vunpack.c.l.b16 %v303
    %v802 = vunpack.c.h.b16 %v303
    %v803 = vunpack.c.l.b16 %v304
    %v804 = vunpack.c.h.b16 %v304
    %v805 = vunpack.c.l.b16 %v305
    %v806 = vunpack.c.h.b16 %v305
    %v807 = vunpack.c.l.b16 %v306
    %v808 = vunpack.c.h.b16 %v306
    %v809 = vunpack.c.l.b16 %v307
    %v810 = vunpack.c.h.b16 %v307
    %v811 = vunpack.c.l.b16 %v308
    %v812 = vunpack.c.h.b16 %v308
    %v813 = vunpack.c.l.b16 %v309
    %v814 = vunpack.c.h.b16 %v309
    %v815 = vunpack.c.l.b16 %v310
    %v816 = vunpack.c.h.b16 %v310
    %v817 = vunpack.c.l.b16 %v311
    %v818 = vunpack.c.h.b16 %v311
    %v819 = vunpack.c.l.b16 %v312
    %v820 = vunpack.c.h.b16 %v312
    %v821 = vunpack.c.l.b16 %v313
    %v822 = vunpack.c.h.b16 %v313
    %v823 = vunpack.c.l.b16 %v314
    %v824 = vunpack.c.h.b16 %v314
    %v825 = vunpack.c.l.b16 %v315
    %v826 = vunpack.c.h.b16 %v315
    %v827 = vunpack.c.l.b16 %v316
    %v828 = vunpack.c.h.b16 %v316
    %v829 = vunpack.c.l.b16 %v317
    %v830 = vunpack.c.h.b16 %v317
    %v831 = vunpack.c.l.b16 %v318
    %v832 = vunpack.c.h.b16 %v318
    %v833 = vunpack.c.l.b16 %v319
    %v834 = vunpack.c.h.b16 %v319
    %v835 = vunpack.c.l.b16 %v320
    %v836 = vunpack.c.h.b16 %v320
    %v837 = vunpack.c.l.b16 %v321
    %v838 = vunpack.c.h.b16 %v321
    %v839 = vunpack.c.l.b16 %v322
    %v840 = vunpack.c.h.b16 %v322
    %v841 = vunpack.c.l.b16 %v323
    %v842 = vunpack.c.h.b16 %v323
    %v843 = vunpack.c.l.b16 %v324
    %v844 = vunpack.c.h.b16 %v324
    %v845 = vunpack.c.l.b16 %v325
    %v846 = vunpack.c.h.b16 %v325
    %v847 = vunpack.c.l.b16 %v326
    %v848 = vunpack.c.h.b16 %v326
    %v849 = vunpack.c.l.b16 %v327
    %v850 = vunpack.c.h.b16 %v327
    %v851 = vunpack.c.l.b16 %v328
    %v852 = vunpack.c.h.b16 %v328
    %v853 = vunpack.c.l.b16 %v329
    %v854 = vunpack.c.h.b16 %v329
    %v855 = vunpack.c.l.b16 %v330
    %v856 = vunpack.c.h.b16 %v330
    %v857 = vunpack.c.l.b16 %v331
    %v858 = vunpack.c.h.b16 %v331
    %v859 = vunpack.c.l.b16 %v332
    %v860 = vunpack.c.h.b16 %v332
    %v861 = vunpack.c.l.b16 %v333
    %v862 = vunpack.c.h.b16 %v333
    %v863 = vunpack.c.l.b16 %v334
    %v864 = vunpack.c.h.b16 %v334
    %v865 = vunpack.c.l.b16 %v335
    %v866 = vunpack.c.h.b16 %v335
    %v867 = vunpack.c.l.b16 %v336
    %v868 = vunpack.c.h.b16 %v336
    %v869 = vunpack.c.l.b16 %v337
    %v870 = vunpack.c.h.b16 %v337
    %v871 = vunpack.c.l.b16 %v338
    %v872 = vunpack.c.h.b16 %v338
    %v873 = vunpack.c.l.b16 %v339
    %v874 = vunpack.c.h.b16 %v339
    %v875 = vunpack.c.l.b16 %v340
    %v876 = vunpack.c.h.b16 %v340
    %v877 = vunpack.c.l.b16 %v341
    %v878 = vunpack.c.h.b16 %v341
    %v879 = vunpack.c.l.b16 %v342
    %v880 = vunpack.c.h.b16 %v342
    %v881 = vunpack.c.l.b16 %v343
    %v882 = vunpack.c.h.b16 %v343
    %v883 = vunpack.c.l.b16 %v344
    %v884 = vunpack.c.h.b16 %v344
    %v885 = vunpack.c.l.b16 %v345
    %v886 = vunpack.c.h.b16 %v345
    %v887 = vunpack.c.l.b16 %v346
    %v888 = vunpack.c.h.b16 %v346
    %v889 = vunpack.c.l.b16 %v347
    %v890 = vunpack.c.h.b16 %v347
    %v891 = vunpack.c.l.b16 %v348
    %v892 = vunpack.c.h.b16 %v348
    %v893 = vunpack.c.l.b16 %v349
    %v894 = vunpack.c.h.b16 %v349
    %v895 = vunpack.c.l.b16 %v350
    %v896 = vunpack.c.h.b16 %v350
    %v897 = vunpack.c.l.b16 %v351
    %v898 = vunpack.c.h.b16 %v351
    %v899 = vunpack.c.l.b16 %v352
    %v900 = vunpack.c.h.b16 %v352
    %v901 = vunpack.c.l.b16 %v353
    %v902 = vunpack.c.h.b16 %v353
    %v903 = vunpack.c.l.b16 %v354
    %v904 = vunpack.c.h.b16 %v354
    %v905 = vunpack.c.l.b16 %v355
    %v906 = vunpack.c.h.b16 %v355
    %v907 = vunpack.c.l.b16 %v356
    %v908 = vunpack.c.h.b16 %v356
    %v909 = vunpack.c.l.b16 %v357
    %v910 = vunpack.c.h.b16 %v357
    %v911 = vunpack.c.l.b16 %v358
    %v912 = vunpack.c.h.b16 %v358
    %v913 = vunpack.c.l.b16 %v359
    %v914 = vunpack.c.h.b16 %v359
    %v915 = vunpack.c.l.b16 %v360
    %v916 = vunpack.c.h.b16 %v360
    %v917 = vunpack.c.l.b16 %v361
    %v918 = vunpack.c.h.b16 %v361
    %v919 = vunpack.c.l.b16 %v362
    %v920 = vunpack.c.h.b16 %v362
    %v921 = vunpack.c.l.b16 %v363
    %v922 = vunpack.c.h.b16 %v363
    %v923 = vunpack.c.l.b16 %v364
    %v924 = vunpack.c.h.b16 %v364
    %v925 = vunpack.c.l.b16 %v365
    %v926 = vunpack.c.h.b16 %v365
    %v927 = vunpack.c.l.b16 %v366
    %v928 = vunpack.c.h.b16 %v366
    %v929 = vunpack.c.l.b16 %v367
    %v930 = vunpack.c.h.b16 %v367
    %v931 = vunpack.c.l.b16 %v368
    %v932 = vunpack.c.h.b16 %v368
    %v933 = vunpack.c.l.b16 %v369
    %v934 = vunpack.c.h.b16 %v369
    %v935 = vunpack.c.l.b16 %v370
    %v936 = vunpack.c.h.b16 %v370
    %v937 = vunpack.c.l.b16 %v371
    %v938 = vunpack.c.h.b16 %v371
    %v939 = vunpack.c.l.b16 %v372
    %v940 = vunpack.c.h.b16 %v372
    %v941 = vunpack.c.l.b16 %v373
    %v942 = vunpack.c.h.b16 %v373
    %v943 = vunpack.c.l.b16 %v374
    %v944 = vunpack.c.h.b16 %v374
    %v945 = vunpack.c.l.b16 %v375
    %v946 = vunpack.c.h.b16 %v375
    %v947 = vunpack.c.l.b16 %v376
    %v948 = vunpack.c.h.b16 %v376
    %v949 = vunpack.c.l.b16 %v377
    %v950 = vunpack.c.h.b16 %v377
    %v951 = vunpack.c.l.b16 %v378
    %v952 = vunpack.c.h.b16 %v378
    %v953 = vunpack.c.l.b16 %v379
    %v954 = vunpack.c.h.b16 %v379
    %v955 = vunpack.c.l.b16 %v380
    %v956 = vunpack.c.h.b16 %v380
    %v957 = vpack.c.b16 %v577, %v573
    %v958 = vpack.c.b16 %v578, %v574
    %v959 = vpack.c.b16 %v579, %v575
    %v960 = vpack.c.b16 %v580, %v576
    %v961 = vpack.c.b16 %v585, %v581
    %v962 = vpack.c.b16 %v586, %v582
    %v963 = vpack.c.b16 %v587, %v583
    %v964 = vpack.c.b16 %v588, %v584
    %v965 = vpack.c.b16 %v593, %v589
    %v966 = vpack.c.b16 %v594, %v590
    %v967 = vpack.c.b16 %v595, %v591
    %v968 = vpack.c.b16 %v596, %v592
    %v969 = vpack.c.b16 %v601, %v597
    %v970 = vpack.c.b16 %v602, %v598
    %v971 = vpack.c.b16 %v603, %v599
    %v972 = vpack.c.b16 %v604, %v600
    %v973 = vpack.c.b16 %v609, %v605
    %v974 = vpack.c.b16 %v610, %v606
    %v975 = vpack.c.b16 %v611, %v607
    %v976 = vpack.c.b16 %v612, %v608
    %v977 = vpack.c.b16 %v617, %v613
    %v978 = vpack.c.b16 %v618, %v614
    %v979 = vpack.c.b16 %v619, %v615
    %v980 = vpack.c.b16 %v620, %v616
    %v981 = vpack.c.b16 %v625, %v621
    %v982 = vpack.c.b16 %v626, %v622
    %v983 = vpack.c.b16 %v627, %v623
    %v984 = vpack.c.b16 %v628, %v624
    %v985 = vpack.c.b16 %v633, %v629
    %v986 = vpack.c.b16 %v634, %v630
    %v987 = vpack.c.b16 %v635, %v631
    %v988 = vpack.c.b16 %v636, %v632
    %v989 = vpack.c.b16 %v641, %v637
    %v990 = vpack.c.b16 %v642, %v638
    %v991 = vpack.c.b16 %v643, %v639
    %v992 = vpack.c.b16 %v644, %v640
    %v993 = vpack.c.b16 %v649, %v645
    %v994 = vpack.c.b16 %v650, %v646
    %v995 = vpack.c.b16 %v651, %v647
    %v996 = vpack.c.b16 %v652, %v648
    %v997 = vpack.c.b16 %v657, %v653
    %v998 = vpack.c.b16 %v658, %v654
    %v999 = vpack.c.b16 %v659, %v655
    %v1000 = vpack.c.b16 %v660, %v656
    %v1001 = vpack.c.b16 %v665, %v661
    %v1002 = vpack.c.b16 %v666, %v662
    %v1003 = vpack.c.b16 %v667, %v663
    %v1004 = vpack.c.b16 %v668, %v664
    %v1005 = vpack.c.b16 %v673, %v669
    %v1006 = vpack.c.b16 %v674, %v670
    %v1007 = vpack.c.b16 %v675, %v671
    %v1008 = vpack.c.b16 %v676, %v672
    %v1009 = vpack.c.b16 %v681, %v677
    %v1010 = vpack.c.b16 %v682, %v678
    %v1011 = vpack.c.b16 %v683, %v679
    %v1012 = vpack.c.b16 %v684, %v680
    %v1013 = vpack.c.b16 %v689, %v685
    %v1014 = vpack.c.b16 %v690, %v686
    %v1015 = vpack.c.b16 %v691, %v687
    %v1016 = vpack.c.b16 %v692, %v688
    %v1017 = vpack.c.b16 %v697, %v693
    %v1018 = vpack.c.b16 %v698, %v694
    %v1019 = vpack.c.b16 %v699, %v695
    %v1020 = vpack.c.b16 %v700, %v696
    %v1021 = vpack.c.b16 %v705, %v701
    %v1022 = vpack.c.b16 %v706, %v702
    %v1023 = vpack.c.b16 %v707, %v703
    %v1024 = vpack.c.b16 %v708, %v704
    %v1025 = vpack.c.b16 %v713, %v709
    %v1026 = vpack.c.b16 %v714, %v710
    %v1027 = vpack.c.b16 %v715, %v711
    %v1028 = vpack.c.b16 %v716, %v712
    %v1029 = vpack.c.b16 %v721, %v717
    %v1030 = vpack.c.b16 %v722, %v718
    %v1031 = vpack.c.b16 %v723, %v719
    %v1032 = vpack.c.b16 %v724, %v720
    %v1033 = vpack.c.b16 %v729, %v725
    %v1034 = vpack.c.b16 %v730, %v726
    %v1035 = vpack.c.b16 %v731, %v727
    %v1036 = vpack.c.b16 %v732, %v728
    %v1037 = vpack.c.b16 %v737, %v733
    %v1038 = vpack.c.b16 %v738, %v734
    %v1039 = vpack.c.b16 %v739, %v735
    %v1040 = vpack.c.b16 %v740, %v736
    %v1041 = vpack.c.b16 %v745, %v741
    %v1042 = vpack.c.b16 %v746, %v742
    %v1043 = vpack.c.b16 %v747, %v743
    %v1044 = vpack.c.b16 %v748, %v744
    %v1045 = vpack.c.b16 %v753, %v749
    %v1046 = vpack.c.b16 %v754, %v750
    %v1047 = vpack.c.b16 %v755, %v751
    %v1048 = vpack.c.b16 %v756, %v752
    %v1049 = vpack.c.b16 %v761, %v757
    %v1050 = vpack.c.b16 %v762, %v758
    %v1051 = vpack.c.b16 %v763, %v759
    %v1052 = vpack.c.b16 %v764, %v760
    %v1053 = vpack.c.b16 %v769, %v765
    %v1054 = vpack.c.b16 %v770, %v766
    %v1055 = vpack.c.b16 %v771, %v767
    %v1056 = vpack.c.b16 %v772, %v768
    %v1057 = vpack.c.b16 %v777, %v773
    %v1058 = vpack.c.b16 %v778, %v774
    %v1059 = vpack.c.b16 %v779, %v775
    %v1060 = vpack.c.b16 %v780, %v776
    %v1061 = vpack.c.b16 %v785, %v781
    %v1062 = vpack.c.b16 %v786, %v782
    %v1063 = vpack.c.b16 %v787, %v783
    %v1064 = vpack.c.b16 %v788, %v784
    %v1065 = vpack.c.b16 %v793, %v789
    %v1066 = vpack.c.b16 %v794, %v790
    %v1067 = vpack.c.b16 %v795, %v791
    %v1068 = vpack.c.b16 %v796, %v792
    %v1069 = vpack.c.b16 %v801, %v797
    %v1070 = vpack.c.b16 %v802, %v798
    %v1071 = vpack.c.b16 %v803, %v799
    %v1072 = vpack.c.b16 %v804, %v800
    %v1073 = vpack.c.b16 %v809, %v805
    %v1074 = vpack.c.b16 %v810, %v806
    %v1075 = vpack.c.b16 %v811, %v807
    %v1076 = vpack.c.b16 %v812, %v808
    %v1077 = vpack.c.b16 %v817, %v813
    %v1078 = vpack.c.b16 %v818, %v814
    %v1079 = vpack.c.b16 %v819, %v815
    %v1080 = vpack.c.b16 %v820, %v816
    %v1081 = vpack.c.b16 %v825, %v821
    %v1082 = vpack.c.b16 %v826, %v822
    %v1083 = vpack.c.b16 %v827, %v823
    %v1084 = vpack.c.b16 %v828, %v824
    %v1085 = vpack.c.b16 %v833, %v829
    %v1086 = vpack.c.b16 %v834, %v830
    %v1087 = vpack.c.b16 %v835, %v831
    %v1088 = vpack.c.b16 %v836, %v832
    %v1089 = vpack.c.b16 %v841, %v837
    %v1090 = vpack.c.b16 %v842, %v838
    %v1091 = vpack.c.b16 %v843, %v839
    %v1092 = vpack.c.b16 %v844, %v840
    %v1093 = vpack.c.b16 %v849, %v845
    %v1094 = vpack.c.b16 %v850, %v846
    %v1095 = vpack.c.b16 %v851, %v847
    %v1096 = vpack.c.b16 %v852, %v848
    %v1097 = vpack.c.b16 %v857, %v853
    %v1098 = vpack.c.b16 %v858, %v854
    %v1099 = vpack.c.b16 %v859, %v855
    %v1100 = vpack.c.b16 %v860, %v856
    %v1101 = vpack.c.b16 %v865, %v861
    %v1102 = vpack.c.b16 %v866, %v862
    %v1103 = vpack.c.b16 %v867, %v863
    %v1104 = vpack.c.b16 %v868, %v864
    %v1105 = vpack.c.b16 %v873, %v869
    %v1106 = vpack.c.b16 %v874, %v870
    %v1107 = vpack.c.b16 %v875, %v871
    %v1108 = vpack.c.b16 %v876, %v872
    %v1109 = vpack.c.b16 %v881, %v877
    %v1110 = vpack.c.b16 %v882, %v878
    %v1111 = vpack.c.b16 %v883, %v879
    %v1112 = vpack.c.b16 %v884, %v880
    %v1113 = vpack.c.b16 %v889, %v885
    %v1114 = vpack.c.b16 %v890, %v886
    %v1115 = vpack.c.b16 %v891, %v887
    %v1116 = vpack.c.b16 %v892, %v888
    %v1117 = vpack.c.b16 %v897, %v893
    %v1118 = vpack.c.b16 %v898, %v894
    %v1119 = vpack.c.b16 %v899, %v895
    %v1120 = vpack.c.b16 %v900, %v896
    %v1121 = vpack.c.b16 %v905, %v901
    %v1122 = vpack.c.b16 %v906, %v902
    %v1123 = vpack.c.b16 %v907, %v903
    %v1124 = vpack.c.b16 %v908, %v904
    %v1125 = vpack.c.b16 %v913, %v909
    %v1126 = vpack.c.b16 %v914, %v910
    %v1127 = vpack.c.b16 %v915, %v911
    %v1128 = vpack.c.b16 %v916, %v912
    %v1129 = vpack.c.b16 %v921, %v917
    %v1130 = vpack.c.b16 %v922, %v918
    %v1131 = vpack.c.b16 %v923, %v919
    %v1132 = vpack.c.b16 %v924, %v920
    %v1133 = vpack.c.b16 %v929, %v925
    %v1134 = vpack.c.b16 %v930, %v926
    %v1135 = vpack.c.b16 %v931, %v927
    %v1136 = vpack.c.b16 %v932, %v928
    %v1137 = vpack.c.b16 %v937, %v933
    %v1138 = vpack.c.b16 %v938, %v934
    %v1139 = vpack.c.b16 %v939, %v935
    %v1140 = vpack.c.b16 %v940, %v936
    %v1141 = vpack.c.b16 %v945, %v941
    %v1142 = vpack.c.b16 %v946, %v942
    %v1143 = vpack.c.b16 %v947, %v943
    %v1144 = vpack.c.b16 %v948, %v944
    %v1145 = vpack.c.b16 %v953, %v949
    %v1146 = vpack.c.b16 %v954, %v950
    %v1147 = vpack.c.b16 %v955, %v951
    %v1148 = vpack.c.b16 %v956, %v952
    %1341 = vmatpush.bf16.msra.mxu0 %v985
    %1342 = vmatpush.bf16.msra.mxu0 %v981
    %1343 = vmatpush.bf16.msra.mxu0 %v977
    %1344 = vmatpush.bf16.msra.mxu0 %v973
    %1345 = vmatpush.bf16.msra.mxu0 %v969
    %1346 = vmatpush.bf16.msra.mxu0 %v965
    %1347 = vmatpush.bf16.msra.mxu0 %v961
    %1348 = vmatpush.bf16.msra.mxu0 %v957
    %1349 = vmatmul.bf16.gmra.mxu0 %v177
    %v1350 = vpop.f32.mrf.mxu0
    %v1351 = vadd.f32 0.0, %v1350
    %v1352 = vpop.f32.mrf.mxu0
    %v1353 = vadd.f32 0.0, %v1352
    %1354 = vmatmul.bf16.gmra.mxu0 %v183
    %v1355 = vpop.f32.mrf.mxu0
    %v1356 = vadd.f32 0.0, %v1355
    %v1357 = vpop.f32.mrf.mxu0
    %v1358 = vadd.f32 0.0, %v1357
    %1359 = vdwg.mxu0
    %1360 = vmatpush.bf16.msra.mxu0 %v1017
    %1361 = vmatpush.bf16.msra.mxu0 %v1013
    %1362 = vmatpush.bf16.msra.mxu0 %v1009
    %1363 = vmatpush.bf16.msra.mxu0 %v1005
    %1364 = vmatpush.bf16.msra.mxu0 %v1001
    %1365 = vmatpush.bf16.msra.mxu0 %v997
    %1366 = vmatpush.bf16.msra.mxu0 %v993
    %1367 = vmatpush.bf16.msra.mxu0 %v989
    %1368 = vmatmul.bf16.gmra.mxu0 %v178
    %v1369 = vpop.f32.mrf.mxu0
    %v1370 = vadd.f32 %v1351, %v1369
    %v1371 = vpop.f32.mrf.mxu0
    %v1372 = vadd.f32 %v1353, %v1371
    %1373 = vmatmul.bf16.gmra.mxu0 %v184
    %v1374 = vpop.f32.mrf.mxu0
    %v1375 = vadd.f32 %v1356, %v1374
    %v1376 = vpop.f32.mrf.mxu0
    %v1377 = vadd.f32 %v1358, %v1376
    %1378 = vdwg.mxu0
    %1379 = vmatpush.bf16.msra.mxu0 %v1049
    %1380 = vmatpush.bf16.msra.mxu0 %v1045
    %1381 = vmatpush.bf16.msra.mxu0 %v1041
    %1382 = vmatpush.bf16.msra.mxu0 %v1037
    %1383 = vmatpush.bf16.msra.mxu0 %v1033
    %1384 = vmatpush.bf16.msra.mxu0 %v1029
    %1385 = vmatpush.bf16.msra.mxu0 %v1025
    %1386 = vmatpush.bf16.msra.mxu0 %v1021
    %1387 = vmatmul.bf16.gmra.mxu0 %v179
    %v1388 = vpop.f32.mrf.mxu0
    %v1389 = vadd.f32 %v1370, %v1388
    %v1390 = vpop.f32.mrf.mxu0
    %v1391 = vadd.f32 %v1372, %v1390
    %1392 = vmatmul.bf16.gmra.mxu0 %v185
    %v1393 = vpop.f32.mrf.mxu0
    %v1394 = vadd.f32 %v1375, %v1393
    %v1395 = vpop.f32.mrf.mxu0
    %v1396 = vadd.f32 %v1377, %v1395
    %1397 = vdwg.mxu0
    %1398 = vmatpush.bf16.msra.mxu0 %v1081
    %1399 = vmatpush.bf16.msra.mxu0 %v1077
    %1400 = vmatpush.bf16.msra.mxu0 %v1073
    %1401 = vmatpush.bf16.msra.mxu0 %v1069
    %1402 = vmatpush.bf16.msra.mxu0 %v1065
    %1403 = vmatpush.bf16.msra.mxu0 %v1061
    %1404 = vmatpush.bf16.msra.mxu0 %v1057
    %1405 = vmatpush.bf16.msra.mxu0 %v1053
    %1406 = vmatmul.bf16.gmra.mxu0 %v180
    %v1407 = vpop.f32.mrf.mxu0
    %v1408 = vadd.f32 %v1389, %v1407
    %v1409 = vpop.f32.mrf.mxu0
    %v1410 = vadd.f32 %v1391, %v1409
    %1411 = vmatmul.bf16.gmra.mxu0 %v186
    %v1412 = vpop.f32.mrf.mxu0
    %v1413 = vadd.f32 %v1394, %v1412
    %v1414 = vpop.f32.mrf.mxu0
    %v1415 = vadd.f32 %v1396, %v1414
    %1416 = vdwg.mxu0
    %1417 = vmatpush.bf16.msra.mxu0 %v1113
    %1418 = vmatpush.bf16.msra.mxu0 %v1109
    %1419 = vmatpush.bf16.msra.mxu0 %v1105
    %1420 = vmatpush.bf16.msra.mxu0 %v1101
    %1421 = vmatpush.bf16.msra.mxu0 %v1097
    %1422 = vmatpush.bf16.msra.mxu0 %v1093
    %1423 = vmatpush.bf16.msra.mxu0 %v1089
    %1424 = vmatpush.bf16.msra.mxu0 %v1085
    %1425 = vmatmul.bf16.gmra.mxu0 %v181
    %v1426 = vpop.f32.mrf.mxu0
    %v1427 = vadd.f32 %v1408, %v1426
    %v1428 = vpop.f32.mrf.mxu0
    %v1429 = vadd.f32 %v1410, %v1428
    %1430 = vmatmul.bf16.gmra.mxu0 %v187
    %v1431 = vpop.f32.mrf.mxu0
    %v1432 = vadd.f32 %v1413, %v1431
    %v1433 = vpop.f32.mrf.mxu0
    %v1434 = vadd.f32 %v1415, %v1433
    %1435 = vdwg.mxu0
    %1436 = vmatpush.bf16.msra.mxu0 %v1145
    %1437 = vmatpush.bf16.msra.mxu0 %v1141
    %1438 = vmatpush.bf16.msra.mxu0 %v1137
    %1439 = vmatpush.bf16.msra.mxu0 %v1133
    %1440 = vmatpush.bf16.msra.mxu0 %v1129
    %1441 = vmatpush.bf16.msra.mxu0 %v1125
    %1442 = vmatpush.bf16.msra.mxu0 %v1121
    %1443 = vmatpush.bf16.msra.mxu0 %v1117
    %1444 = vmatmul.bf16.gmra.mxu0 %v182
    %v1445 = vpop.f32.mrf.mxu0
    %v1446 = vadd.f32 %v1427, %v1445
    %v1447 = vpop.f32.mrf.mxu0
    %v1448 = vadd.f32 %v1429, %v1447
    %1449 = vmatmul.bf16.gmra.mxu0 %v188
    %v1450 = vpop.f32.mrf.mxu0
    %v1451 = vadd.f32 %v1432, %v1450
    %v1452 = vpop.f32.mrf.mxu0
    %v1453 = vadd.f32 %v1434, %v1452
    %1454 = vdwg.mxu0
    %1455 = vmatpush.bf16.msra.mxu0 %v986
    %1456 = vmatpush.bf16.msra.mxu0 %v982
    %1457 = vmatpush.bf16.msra.mxu0 %v978
    %1458 = vmatpush.bf16.msra.mxu0 %v974
    %1459 = vmatpush.bf16.msra.mxu0 %v970
    %1460 = vmatpush.bf16.msra.mxu0 %v966
    %1461 = vmatpush.bf16.msra.mxu0 %v962
    %1462 = vmatpush.bf16.msra.mxu0 %v958
    %1463 = vmatmul.bf16.gmra.mxu0 %v177
    %v1464 = vpop.f32.mrf.mxu0
    %v1465 = vadd.f32 0.0, %v1464
    %v1466 = vpop.f32.mrf.mxu0
    %v1467 = vadd.f32 0.0, %v1466
    %1468 = vmatmul.bf16.gmra.mxu0 %v183
    %v1469 = vpop.f32.mrf.mxu0
    %v1470 = vadd.f32 0.0, %v1469
    %v1471 = vpop.f32.mrf.mxu0
    %v1472 = vadd.f32 0.0, %v1471
    %1473 = vdwg.mxu0
    %1474 = vmatpush.bf16.msra.mxu0 %v1018
    %1475 = vmatpush.bf16.msra.mxu0 %v1014
    %1476 = vmatpush.bf16.msra.mxu0 %v1010
    %1477 = vmatpush.bf16.msra.mxu0 %v1006
    %1478 = vmatpush.bf16.msra.mxu0 %v1002
    %1479 = vmatpush.bf16.msra.mxu0 %v998
    %1480 = vmatpush.bf16.msra.mxu0 %v994
    %1481 = vmatpush.bf16.msra.mxu0 %v990
    %1482 = vmatmul.bf16.gmra.mxu0 %v178
    %v1483 = vpop.f32.mrf.mxu0
    %v1484 = vadd.f32 %v1465, %v1483
    %v1485 = vpop.f32.mrf.mxu0
    %v1486 = vadd.f32 %v1467, %v1485
    %1487 = vmatmul.bf16.gmra.mxu0 %v184
    %v1488 = vpop.f32.mrf.mxu0
    %v1489 = vadd.f32 %v1470, %v1488
    %v1490 = vpop.f32.mrf.mxu0
    %v1491 = vadd.f32 %v1472, %v1490
    %1492 = vdwg.mxu0
    %1493 = vmatpush.bf16.msra.mxu0 %v1050
    %1494 = vmatpush.bf16.msra.mxu0 %v1046
    %1495 = vmatpush.bf16.msra.mxu0 %v1042
    %1496 = vmatpush.bf16.msra.mxu0 %v1038
    %1497 = vmatpush.bf16.msra.mxu0 %v1034
    %1498 = vmatpush.bf16.msra.mxu0 %v1030
    %1499 = vmatpush.bf16.msra.mxu0 %v1026
    %1500 = vmatpush.bf16.msra.mxu0 %v1022
    %1501 = vmatmul.bf16.gmra.mxu0 %v179
    %v1502 = vpop.f32.mrf.mxu0
    %v1503 = vadd.f32 %v1484, %v1502
    %v1504 = vpop.f32.mrf.mxu0
    %v1505 = vadd.f32 %v1486, %v1504
    %1506 = vmatmul.bf16.gmra.mxu0 %v185
    %v1507 = vpop.f32.mrf.mxu0
    %v1508 = vadd.f32 %v1489, %v1507
    %v1509 = vpop.f32.mrf.mxu0
    %v1510 = vadd.f32 %v1491, %v1509
    %1511 = vdwg.mxu0
    %1512 = vmatpush.bf16.msra.mxu0 %v1082
    %1513 = vmatpush.bf16.msra.mxu0 %v1078
    %1514 = vmatpush.bf16.msra.mxu0 %v1074
    %1515 = vmatpush.bf16.msra.mxu0 %v1070
    %1516 = vmatpush.bf16.msra.mxu0 %v1066
    %1517 = vmatpush.bf16.msra.mxu0 %v1062
    %1518 = vmatpush.bf16.msra.mxu0 %v1058
    %1519 = vmatpush.bf16.msra.mxu0 %v1054
    %1520 = vmatmul.bf16.gmra.mxu0 %v180
    %v1521 = vpop.f32.mrf.mxu0
    %v1522 = vadd.f32 %v1503, %v1521
    %v1523 = vpop.f32.mrf.mxu0
    %v1524 = vadd.f32 %v1505, %v1523
    %1525 = vmatmul.bf16.gmra.mxu0 %v186
    %v1526 = vpop.f32.mrf.mxu0
    %v1527 = vadd.f32 %v1508, %v1526
    %v1528 = vpop.f32.mrf.mxu0
    %v1529 = vadd.f32 %v1510, %v1528
    %1530 = vdwg.mxu0
    %1531 = vmatpush.bf16.msra.mxu0 %v1114
    %1532 = vmatpush.bf16.msra.mxu0 %v1110
    %1533 = vmatpush.bf16.msra.mxu0 %v1106
    %1534 = vmatpush.bf16.msra.mxu0 %v1102
    %1535 = vmatpush.bf16.msra.mxu0 %v1098
    %1536 = vmatpush.bf16.msra.mxu0 %v1094
    %1537 = vmatpush.bf16.msra.mxu0 %v1090
    %1538 = vmatpush.bf16.msra.mxu0 %v1086
    %1539 = vmatmul.bf16.gmra.mxu0 %v181
    %v1540 = vpop.f32.mrf.mxu0
    %v1541 = vadd.f32 %v1522, %v1540
    %v1542 = vpop.f32.mrf.mxu0
    %v1543 = vadd.f32 %v1524, %v1542
    %1544 = vmatmul.bf16.gmra.mxu0 %v187
    %v1545 = vpop.f32.mrf.mxu0
    %v1546 = vadd.f32 %v1527, %v1545
    %v1547 = vpop.f32.mrf.mxu0
    %v1548 = vadd.f32 %v1529, %v1547
    %1549 = vdwg.mxu0
    %1550 = vmatpush.bf16.msra.mxu0 %v1146
    %1551 = vmatpush.bf16.msra.mxu0 %v1142
    %1552 = vmatpush.bf16.msra.mxu0 %v1138
    %1553 = vmatpush.bf16.msra.mxu0 %v1134
    %1554 = vmatpush.bf16.msra.mxu0 %v1130
    %1555 = vmatpush.bf16.msra.mxu0 %v1126
    %1556 = vmatpush.bf16.msra.mxu0 %v1122
    %1557 = vmatpush.bf16.msra.mxu0 %v1118
    %1558 = vmatmul.bf16.gmra.mxu0 %v182
    %v1559 = vpop.f32.mrf.mxu0
    %v1560 = vadd.f32 %v1541, %v1559
    %v1561 = vpop.f32.mrf.mxu0
    %v1562 = vadd.f32 %v1543, %v1561
    %1563 = vmatmul.bf16.gmra.mxu0 %v188
    %v1564 = vpop.f32.mrf.mxu0
    %v1565 = vadd.f32 %v1546, %v1564
    %v1566 = vpop.f32.mrf.mxu0
    %v1567 = vadd.f32 %v1548, %v1566
    %1568 = vdwg.mxu0
    %1569 = vmatpush.bf16.msra.mxu0 %v987
    %1570 = vmatpush.bf16.msra.mxu0 %v983
    %1571 = vmatpush.bf16.msra.mxu0 %v979
    %1572 = vmatpush.bf16.msra.mxu0 %v975
    %1573 = vmatpush.bf16.msra.mxu0 %v971
    %1574 = vmatpush.bf16.msra.mxu0 %v967
    %1575 = vmatpush.bf16.msra.mxu0 %v963
    %1576 = vmatpush.bf16.msra.mxu0 %v959
    %1577 = vmatmul.bf16.gmra.mxu0 %v177
    %v1578 = vpop.f32.mrf.mxu0
    %v1579 = vadd.f32 0.0, %v1578
    %v1580 = vpop.f32.mrf.mxu0
    %v1581 = vadd.f32 0.0, %v1580
    %1582 = vmatmul.bf16.gmra.mxu0 %v183
    %v1583 = vpop.f32.mrf.mxu0
    %v1584 = vadd.f32 0.0, %v1583
    %v1585 = vpop.f32.mrf.mxu0
    %v1586 = vadd.f32 0.0, %v1585
    %1587 = vdwg.mxu0
    %1588 = vmatpush.bf16.msra.mxu0 %v1019
    %1589 = vmatpush.bf16.msra.mxu0 %v1015
    %1590 = vmatpush.bf16.msra.mxu0 %v1011
    %1591 = vmatpush.bf16.msra.mxu0 %v1007
    %1592 = vmatpush.bf16.msra.mxu0 %v1003
    %1593 = vmatpush.bf16.msra.mxu0 %v999
    %1594 = vmatpush.bf16.msra.mxu0 %v995
    %1595 = vmatpush.bf16.msra.mxu0 %v991
    %1596 = vmatmul.bf16.gmra.mxu0 %v178
    %v1597 = vpop.f32.mrf.mxu0
    %v1598 = vadd.f32 %v1579, %v1597
    %v1599 = vpop.f32.mrf.mxu0
    %v1600 = vadd.f32 %v1581, %v1599
    %1601 = vmatmul.bf16.gmra.mxu0 %v184
    %v1602 = vpop.f32.mrf.mxu0
    %v1603 = vadd.f32 %v1584, %v1602
    %v1604 = vpop.f32.mrf.mxu0
    %v1605 = vadd.f32 %v1586, %v1604
    %1606 = vdwg.mxu0
    %1607 = vmatpush.bf16.msra.mxu0 %v1051
    %1608 = vmatpush.bf16.msra.mxu0 %v1047
    %1609 = vmatpush.bf16.msra.mxu0 %v1043
    %1610 = vmatpush.bf16.msra.mxu0 %v1039
    %1611 = vmatpush.bf16.msra.mxu0 %v1035
    %1612 = vmatpush.bf16.msra.mxu0 %v1031
    %1613 = vmatpush.bf16.msra.mxu0 %v1027
    %1614 = vmatpush.bf16.msra.mxu0 %v1023
    %1615 = vmatmul.bf16.gmra.mxu0 %v179
    %v1616 = vpop.f32.mrf.mxu0
    %v1617 = vadd.f32 %v1598, %v1616
    %v1618 = vpop.f32.mrf.mxu0
    %v1619 = vadd.f32 %v1600, %v1618
    %1620 = vmatmul.bf16.gmra.mxu0 %v185
    %v1621 = vpop.f32.mrf.mxu0
    %v1622 = vadd.f32 %v1603, %v1621
    %v1623 = vpop.f32.mrf.mxu0
    %v1624 = vadd.f32 %v1605, %v1623
    %1625 = vdwg.mxu0
    %1626 = vmatpush.bf16.msra.mxu0 %v1083
    %1627 = vmatpush.bf16.msra.mxu0 %v1079
    %1628 = vmatpush.bf16.msra.mxu0 %v1075
    %1629 = vmatpush.bf16.msra.mxu0 %v1071
    %1630 = vmatpush.bf16.msra.mxu0 %v1067
    %1631 = vmatpush.bf16.msra.mxu0 %v1063
    %1632 = vmatpush.bf16.msra.mxu0 %v1059
    %1633 = vmatpush.bf16.msra.mxu0 %v1055
    %1634 = vmatmul.bf16.gmra.mxu0 %v180
    %v1635 = vpop.f32.mrf.mxu0
    %v1636 = vadd.f32 %v1617, %v1635
    %v1637 = vpop.f32.mrf.mxu0
    %v1638 = vadd.f32 %v1619, %v1637
    %1639 = vmatmul.bf16.gmra.mxu0 %v186
    %v1640 = vpop.f32.mrf.mxu0
    %v1641 = vadd.f32 %v1622, %v1640
    %v1642 = vpop.f32.mrf.mxu0
    %v1643 = vadd.f32 %v1624, %v1642
    %1644 = vdwg.mxu0
    %1645 = vmatpush.bf16.msra.mxu0 %v1115
    %1646 = vmatpush.bf16.msra.mxu0 %v1111
    %1647 = vmatpush.bf16.msra.mxu0 %v1107
    %1648 = vmatpush.bf16.msra.mxu0 %v1103
    %1649 = vmatpush.bf16.msra.mxu0 %v1099
    %1650 = vmatpush.bf16.msra.mxu0 %v1095
    %1651 = vmatpush.bf16.msra.mxu0 %v1091
    %1652 = vmatpush.bf16.msra.mxu0 %v1087
    %1653 = vmatmul.bf16.gmra.mxu0 %v181
    %v1654 = vpop.f32.mrf.mxu0
    %v1655 = vadd.f32 %v1636, %v1654
    %v1656 = vpop.f32.mrf.mxu0
    %v1657 = vadd.f32 %v1638, %v1656
    %1658 = vmatmul.bf16.gmra.mxu0 %v187
    %v1659 = vpop.f32.mrf.mxu0
    %v1660 = vadd.f32 %v1641, %v1659
    %v1661 = vpop.f32.mrf.mxu0
    %v1662 = vadd.f32 %v1643, %v1661
    %1663 = vdwg.mxu0
    %1664 = vmatpush.bf16.msra.mxu0 %v1147
    %1665 = vmatpush.bf16.msra.mxu0 %v1143
    %1666 = vmatpush.bf16.msra.mxu0 %v1139
    %1667 = vmatpush.bf16.msra.mxu0 %v1135
    %1668 = vmatpush.bf16.msra.mxu0 %v1131
    %1669 = vmatpush.bf16.msra.mxu0 %v1127
    %1670 = vmatpush.bf16.msra.mxu0 %v1123
    %1671 = vmatpush.bf16.msra.mxu0 %v1119
    %1672 = vmatmul.bf16.gmra.mxu0 %v182
    %v1673 = vpop.f32.mrf.mxu0
    %v1674 = vadd.f32 %v1655, %v1673
    %v1675 = vpop.f32.mrf.mxu0
    %v1676 = vadd.f32 %v1657, %v1675
    %1677 = vmatmul.bf16.gmra.mxu0 %v188
    %v1678 = vpop.f32.mrf.mxu0
    %v1679 = vadd.f32 %v1660, %v1678
    %v1680 = vpop.f32.mrf.mxu0
    %v1681 = vadd.f32 %v1662, %v1680
    %1682 = vdwg.mxu0
    %1683 = vmatpush.bf16.msra.mxu0 %v988
    %1684 = vmatpush.bf16.msra.mxu0 %v984
    %1685 = vmatpush.bf16.msra.mxu0 %v980
    %1686 = vmatpush.bf16.msra.mxu0 %v976
    %1687 = vmatpush.bf16.msra.mxu0 %v972
    %1688 = vmatpush.bf16.msra.mxu0 %v968
    %1689 = vmatpush.bf16.msra.mxu0 %v964
    %1690 = vmatpush.bf16.msra.mxu0 %v960
    %1691 = vmatmul.bf16.gmra.mxu0 %v177
    %v1692 = vpop.f32.mrf.mxu0
    %v1693 = vadd.f32 0.0, %v1692
    %v1694 = vpop.f32.mrf.mxu0
    %v1695 = vadd.f32 0.0, %v1694
    %1696 = vmatmul.bf16.gmra.mxu0 %v183
    %v1697 = vpop.f32.mrf.mxu0
    %v1698 = vadd.f32 0.0, %v1697
    %v1699 = vpop.f32.mrf.mxu0
    %v1700 = vadd.f32 0.0, %v1699
    %1701 = vdwg.mxu0
    %1702 = vmatpush.bf16.msra.mxu0 %v1020
    %1703 = vmatpush.bf16.msra.mxu0 %v1016
    %1704 = vmatpush.bf16.msra.mxu0 %v1012
    %1705 = vmatpush.bf16.msra.mxu0 %v1008
    %1706 = vmatpush.bf16.msra.mxu0 %v1004
    %1707 = vmatpush.bf16.msra.mxu0 %v1000
    %1708 = vmatpush.bf16.msra.mxu0 %v996
    %1709 = vmatpush.bf16.msra.mxu0 %v992
    %1710 = vmatmul.bf16.gmra.mxu0 %v178
    %v1711 = vpop.f32.mrf.mxu0
    %v1712 = vadd.f32 %v1693, %v1711
    %v1713 = vpop.f32.mrf.mxu0
    %v1714 = vadd.f32 %v1695, %v1713
    %1715 = vmatmul.bf16.gmra.mxu0 %v184
    %v1716 = vpop.f32.mrf.mxu0
    %v1717 = vadd.f32 %v1698, %v1716
    %v1718 = vpop.f32.mrf.mxu0
    %v1719 = vadd.f32 %v1700, %v1718
    %1720 = vdwg.mxu0
    %1721 = vmatpush.bf16.msra.mxu0 %v1052
    %1722 = vmatpush.bf16.msra.mxu0 %v1048
    %1723 = vmatpush.bf16.msra.mxu0 %v1044
    %1724 = vmatpush.bf16.msra.mxu0 %v1040
    %1725 = vmatpush.bf16.msra.mxu0 %v1036
    %1726 = vmatpush.bf16.msra.mxu0 %v1032
    %1727 = vmatpush.bf16.msra.mxu0 %v1028
    %1728 = vmatpush.bf16.msra.mxu0 %v1024
    %1729 = vmatmul.bf16.gmra.mxu0 %v179
    %v1730 = vpop.f32.mrf.mxu0
    %v1731 = vadd.f32 %v1712, %v1730
    %v1732 = vpop.f32.mrf.mxu0
    %v1733 = vadd.f32 %v1714, %v1732
    %1734 = vmatmul.bf16.gmra.mxu0 %v185
    %v1735 = vpop.f32.mrf.mxu0
    %v1736 = vadd.f32 %v1717, %v1735
    %v1737 = vpop.f32.mrf.mxu0
    %v1738 = vadd.f32 %v1719, %v1737
    %1739 = vdwg.mxu0
    %1740 = vmatpush.bf16.msra.mxu0 %v1084
    %1741 = vmatpush.bf16.msra.mxu0 %v1080
    %1742 = vmatpush.bf16.msra.mxu0 %v1076
    %1743 = vmatpush.bf16.msra.mxu0 %v1072
    %1744 = vmatpush.bf16.msra.mxu0 %v1068
    %1745 = vmatpush.bf16.msra.mxu0 %v1064
    %1746 = vmatpush.bf16.msra.mxu0 %v1060
    %1747 = vmatpush.bf16.msra.mxu0 %v1056
    %1748 = vmatmul.bf16.gmra.mxu0 %v180
    %v1749 = vpop.f32.mrf.mxu0
    %v1750 = vadd.f32 %v1731, %v1749
    %v1751 = vpop.f32.mrf.mxu0
    %v1752 = vadd.f32 %v1733, %v1751
    %1753 = vmatmul.bf16.gmra.mxu0 %v186
    %v1754 = vpop.f32.mrf.mxu0
    %v1755 = vadd.f32 %v1736, %v1754
    %v1756 = vpop.f32.mrf.mxu0
    %v1757 = vadd.f32 %v1738, %v1756
    %1758 = vdwg.mxu0
    %1759 = vmatpush.bf16.msra.mxu0 %v1116
    %1760 = vmatpush.bf16.msra.mxu0 %v1112
    %1761 = vmatpush.bf16.msra.mxu0 %v1108
    %1762 = vmatpush.bf16.msra.mxu0 %v1104
    %1763 = vmatpush.bf16.msra.mxu0 %v1100
    %1764 = vmatpush.bf16.msra.mxu0 %v1096
    %1765 = vmatpush.bf16.msra.mxu0 %v1092
    %1766 = vmatpush.bf16.msra.mxu0 %v1088
    %1767 = vmatmul.bf16.gmra.mxu0 %v181
    %v1768 = vpop.f32.mrf.mxu0
    %v1769 = vadd.f32 %v1750, %v1768
    %v1770 = vpop.f32.mrf.mxu0
    %v1771 = vadd.f32 %v1752, %v1770
    %1772 = vmatmul.bf16.gmra.mxu0 %v187
    %v1773 = vpop.f32.mrf.mxu0
    %v1774 = vadd.f32 %v1755, %v1773
    %v1775 = vpop.f32.mrf.mxu0
    %v1776 = vadd.f32 %v1757, %v1775
    %1777 = vdwg.mxu0
    %1778 = vmatpush.bf16.msra.mxu0 %v1148
    %1779 = vmatpush.bf16.msra.mxu0 %v1144
    %1780 = vmatpush.bf16.msra.mxu0 %v1140
    %1781 = vmatpush.bf16.msra.mxu0 %v1136
    %1782 = vmatpush.bf16.msra.mxu0 %v1132
    %1783 = vmatpush.bf16.msra.mxu0 %v1128
    %1784 = vmatpush.bf16.msra.mxu0 %v1124
    %1785 = vmatpush.bf16.msra.mxu0 %v1120
    %1786 = vmatmul.bf16.gmra.mxu0 %v182
    %v1787 = vpop.f32.mrf.mxu0
    %v1788 = vadd.f32 %v1769, %v1787
    %v1789 = vpop.f32.mrf.mxu0
    %v1790 = vadd.f32 %v1771, %v1789
    %1791 = vmatmul.bf16.gmra.mxu0 %v188
    %v1792 = vpop.f32.mrf.mxu0
    %v1793 = vadd.f32 %v1774, %v1792
    %v1794 = vpop.f32.mrf.mxu0
    %v1795 = vadd.f32 %v1776, %v1794
    %1796 = vdwg.mxu0
    %v1797 = vmul.f32 %v1446, %v1446
    %v1798 = vmul.f32 %v1560, %v1560
    %v1799 = vmul.f32 %v1674, %v1674
    %v1800 = vmul.f32 %v1788, %v1788
    %v1801 = vmul.f32 %v1448, %v1448
    %v1802 = vmul.f32 %v1562, %v1562
    %v1803 = vmul.f32 %v1676, %v1676
    %v1804 = vmul.f32 %v1790, %v1790
    %v1805 = vmul.f32 %v1451, %v1451
    %v1806 = vmul.f32 %v1565, %v1565
    %v1807 = vmul.f32 %v1679, %v1679
    %v1808 = vmul.f32 %v1793, %v1793
    %v1809 = vmul.f32 %v1453, %v1453
    %v1810 = vmul.f32 %v1567, %v1567
    %v1811 = vmul.f32 %v1681, %v1681
    %v1812 = vmul.f32 %v1795, %v1795
    %v1813 = vadd.f32 %v1797, %v1798
    %v1814 = vadd.f32 %v1813, %v1799
    %v1815 = vadd.f32 %v1814, %v1800
    %1816 = vadd.xlane.f32.xlu0 %v1815
    %v1817 = vpop.xlane.xlu0 %1816
    %v1818 = vadd.f32 %v1801, %v1802
    %v1819 = vadd.f32 %v1818, %v1803
    %v1820 = vadd.f32 %v1819, %v1804
    %1821 = vadd.xlane.f32.xlu0 %v1820
    %v1822 = vpop.xlane.xlu0 %1821
    %v1823 = vadd.f32 %v1805, %v1806
    %v1824 = vadd.f32 %v1823, %v1807
    %v1825 = vadd.f32 %v1824, %v1808
    %1826 = vadd.xlane.f32.xlu0 %v1825
    %v1827 = vpop.xlane.xlu0 %1826
    %v1828 = vadd.f32 %v1809, %v1810
    %v1829 = vadd.f32 %v1828, %v1811
    %v1830 = vadd.f32 %v1829, %v1812
    %1831 = vadd.xlane.f32.xlu0 %v1830
    %v1832 = vpop.xlane.xlu0 %1831
    %v1833 = vmax.f32 %v1817, 1e-24
    %v1834 = vmax.f32 %v1822, 1e-24
    %v1835 = vmax.f32 %v1827, 1e-24
    %v1836 = vmax.f32 %v1832, 1e-24
    %v1837 = vrsqrt.pop %v1833
    %v1838 = vmul.f32 %v1837, %v1833
    %v1839 = vmul.f32 %v1838, %v1837
    %v1840 = vmul.f32 0.5, %v1839
    %v1841 = vsub.f32 1.5, %v1840
    %v1842 = vmul.f32 %v1837, %v1841
    %vm1843 = vweird.f32 %v1833
    %vm1844 = vweird.f32 %v1837
    %vm1845 = vmor %vm1843, %vm1844
    %v1846 = vsel %vm1845, %v1837, %v1842
    %v1847 = vrsqrt.pop %v1834
    %v1848 = vmul.f32 %v1847, %v1834
    %v1849 = vmul.f32 %v1848, %v1847
    %v1850 = vmul.f32 0.5, %v1849
    %v1851 = vsub.f32 1.5, %v1850
    %v1852 = vmul.f32 %v1847, %v1851
    %vm1853 = vweird.f32 %v1834
    %vm1854 = vweird.f32 %v1847
    %vm1855 = vmor %vm1853, %vm1854
    %v1856 = vsel %vm1855, %v1847, %v1852
    %v1857 = vrsqrt.pop %v1835
    %v1858 = vmul.f32 %v1857, %v1835
    %v1859 = vmul.f32 %v1858, %v1857
    %v1860 = vmul.f32 0.5, %v1859
    %v1861 = vsub.f32 1.5, %v1860
    %v1862 = vmul.f32 %v1857, %v1861
    %vm1863 = vweird.f32 %v1835
    %vm1864 = vweird.f32 %v1857
    %vm1865 = vmor %vm1863, %vm1864
    %v1866 = vsel %vm1865, %v1857, %v1862
    %v1867 = vrsqrt.pop %v1836
    %v1868 = vmul.f32 %v1867, %v1836
    %v1869 = vmul.f32 %v1868, %v1867
    %v1870 = vmul.f32 0.5, %v1869
    %v1871 = vsub.f32 1.5, %v1870
    %v1872 = vmul.f32 %v1867, %v1871
    %vm1873 = vweird.f32 %v1836
    %vm1874 = vweird.f32 %v1867
    %vm1875 = vmor %vm1873, %vm1874
    %v1876 = vsel %vm1875, %v1867, %v1872
    %v1877 = vmul.f32 %v1446, %v1846
    %v1878 = vmul.f32 %v1560, %v1846
    %v1879 = vmul.f32 %v1674, %v1846
    %v1880 = vmul.f32 %v1788, %v1846
    %v1881 = vmul.f32 %v1448, %v1856
    %v1882 = vmul.f32 %v1562, %v1856
    %v1883 = vmul.f32 %v1676, %v1856
    %v1884 = vmul.f32 %v1790, %v1856
    %v1885 = vmul.f32 %v1451, %v1866
    %v1886 = vmul.f32 %v1565, %v1866
    %v1887 = vmul.f32 %v1679, %v1866
    %v1888 = vmul.f32 %v1793, %v1866
    %v1889 = vmul.f32 %v1453, %v1876
    %v1890 = vmul.f32 %v1567, %v1876
    %v1891 = vmul.f32 %v1681, %v1876
    %v1892 = vmul.f32 %v1795, %v1876
    %v1893 = vpack.c.bf16 %v1881, %v1877
    %v1894 = vpack.c.bf16 %v1882, %v1878
    %v1895 = vpack.c.bf16 %v1883, %v1879
    %v1896 = vpack.c.bf16 %v1884, %v1880
    %v1897 = vpack.c.bf16 %v1889, %v1885
    %v1898 = vpack.c.bf16 %v1890, %v1886
    %v1899 = vpack.c.bf16 %v1891, %v1887
    %v1900 = vpack.c.bf16 %v1892, %v1888
    %v1901 = vld [vmem:[#allocation6] sm:$0xf]
    %v1902 = vld [vmem:[#allocation6 + $0x4] sm:$0xf]
    %v1903 = vld [vmem:[#allocation6 + $0x8] sm:$0xf]
    %v1904 = vld [vmem:[#allocation6 + $0xc] sm:$0xf]
    %v1905 = vld [vmem:[#allocation6 + $0x10] sm:$0xf]
    %v1906 = vld [vmem:[#allocation6 + $0x14] sm:$0xf]
    %v1907 = vld [vmem:[#allocation6 + $0x18] sm:$0xf]
    %v1908 = vld [vmem:[#allocation6 + $0x1c] sm:$0xf]
    %v1909 = vld [vmem:[#allocation6 + $0x20] sm:$0xf]
    %v1910 = vld [vmem:[#allocation6 + $0x24] sm:$0xf]
    %v1911 = vld [vmem:[#allocation6 + $0x28] sm:$0xf]
    %v1912 = vld [vmem:[#allocation6 + $0x2c] sm:$0xf]
    %v1913 = vld [vmem:[#allocation6 + $0x30] sm:$0xf]
    %v1914 = vld [vmem:[#allocation6 + $0x34] sm:$0xf]
    %v1915 = vld [vmem:[#allocation6 + $0x38] sm:$0xf]
    %v1916 = vld [vmem:[#allocation6 + $0x3c] sm:$0xf]
    %v1917 = vld [vmem:[#allocation6 + $0x40] sm:$0xf]
    %v1918 = vld [vmem:[#allocation6 + $0x44] sm:$0xf]
    %v1919 = vld [vmem:[#allocation6 + $0x48] sm:$0xf]
    %v1920 = vld [vmem:[#allocation6 + $0x4c] sm:$0xf]
    %v1921 = vld [vmem:[#allocation6 + $0x50] sm:$0xf]
    %v1922 = vld [vmem:[#allocation6 + $0x54] sm:$0xf]
    %v1923 = vld [vmem:[#allocation6 + $0x58] sm:$0xf]
    %v1924 = vld [vmem:[#allocation6 + $0x5c] sm:$0xf]
    %v1925 = vld [vmem:[#allocation6 + $0x60] sm:$0xf]
    %v1926 = vld [vmem:[#allocation6 + $0x64] sm:$0xf]
    %v1927 = vld [vmem:[#allocation6 + $0x68] sm:$0xf]
    %v1928 = vld [vmem:[#allocation6 + $0x6c] sm:$0xf]
    %v1929 = vld [vmem:[#allocation6 + $0x70] sm:$0xf]
    %v1930 = vld [vmem:[#allocation6 + $0x74] sm:$0xf]
    %v1931 = vld [vmem:[#allocation6 + $0x78] sm:$0xf]
    %v1932 = vld [vmem:[#allocation6 + $0x7c] sm:$0xf]
    %v1933 = vld [vmem:[#allocation6 + $0x80] sm:$0xf]
    %v1934 = vld [vmem:[#allocation6 + $0x84] sm:$0xf]
    %v1935 = vld [vmem:[#allocation6 + $0x88] sm:$0xf]
    %v1936 = vld [vmem:[#allocation6 + $0x8c] sm:$0xf]
    %v1937 = vld [vmem:[#allocation6 + $0x90] sm:$0xf]
    %v1938 = vld [vmem:[#allocation6 + $0x94] sm:$0xf]
    %v1939 = vld [vmem:[#allocation6 + $0x98] sm:$0xf]
    %v1940 = vld [vmem:[#allocation6 + $0x9c] sm:$0xf]
    %v1941 = vld [vmem:[#allocation6 + $0xa0] sm:$0xf]
    %v1942 = vld [vmem:[#allocation6 + $0xa4] sm:$0xf]
    %v1943 = vld [vmem:[#allocation6 + $0xa8] sm:$0xf]
    %v1944 = vld [vmem:[#allocation6 + $0xac] sm:$0xf]
    %v1945 = vld [vmem:[#allocation6 + $0xb0] sm:$0xf]
    %v1946 = vld [vmem:[#allocation6 + $0xb4] sm:$0xf]
    %v1947 = vld [vmem:[#allocation6 + $0xb8] sm:$0xf]
    %v1948 = vld [vmem:[#allocation6 + $0xbc] sm:$0xf]
    %v1949 = vld [vmem:[#allocation6 + $0xc0] sm:$0xf]
    %v1950 = vld [vmem:[#allocation6 + $0xc4] sm:$0xf]
    %v1951 = vld [vmem:[#allocation6 + $0xc8] sm:$0xf]
    %v1952 = vld [vmem:[#allocation6 + $0xcc] sm:$0xf]
    %v1953 = vld [vmem:[#allocation6 + $0xd0] sm:$0xf]
    %v1954 = vld [vmem:[#allocation6 + $0xd4] sm:$0xf]
    %v1955 = vld [vmem:[#allocation6 + $0xd8] sm:$0xf]
    %v1956 = vld [vmem:[#allocation6 + $0xdc] sm:$0xf]
    %v1957 = vld [vmem:[#allocation6 + $0xe0] sm:$0xf]
    %v1958 = vld [vmem:[#allocation6 + $0xe4] sm:$0xf]
    %v1959 = vld [vmem:[#allocation6 + $0xe8] sm:$0xf]
    %v1960 = vld [vmem:[#allocation6 + $0xec] sm:$0xf]
    %v1961 = vld [vmem:[#allocation6 + $0xf0] sm:$0xf]
    %v1962 = vld [vmem:[#allocation6 + $0xf4] sm:$0xf]
    %v1963 = vld [vmem:[#allocation6 + $0xf8] sm:$0xf]
    %v1964 = vld [vmem:[#allocation6 + $0xfc] sm:$0xf]
    %v2029 = vunpack.c.l.b16 %v1901
    %v2030 = vunpack.c.l.b16 %v1902
    %v2031 = vunpack.c.l.b16 %v1903
    %v2032 = vunpack.c.l.b16 %v1904
    %v2033 = vunpack.c.l.b16 %v1905
    %v2034 = vunpack.c.l.b16 %v1906
    %v2035 = vunpack.c.l.b16 %v1907
    %v2036 = vunpack.c.l.b16 %v1908
    %v2037 = vunpack.c.l.b16 %v1909
    %v2038 = vunpack.c.l.b16 %v1910
    %v2039 = vunpack.c.l.b16 %v1911
    %v2040 = vunpack.c.l.b16 %v1912
    %v2041 = vunpack.c.l.b16 %v1913
    %v2042 = vunpack.c.l.b16 %v1914
    %v2043 = vunpack.c.l.b16 %v1915
    %v2044 = vunpack.c.l.b16 %v1916
    %v2045 = vunpack.c.l.b16 %v1917
    %v2046 = vunpack.c.l.b16 %v1918
    %v2047 = vunpack.c.l.b16 %v1919
    %v2048 = vunpack.c.l.b16 %v1920
    %v2049 = vunpack.c.l.b16 %v1921
    %v2050 = vunpack.c.l.b16 %v1922
    %v2051 = vunpack.c.l.b16 %v1923
    %v2052 = vunpack.c.l.b16 %v1924
    %v2053 = vunpack.c.l.b16 %v1925
    %v2054 = vunpack.c.l.b16 %v1926
    %v2055 = vunpack.c.l.b16 %v1927
    %v2056 = vunpack.c.l.b16 %v1928
    %v2057 = vunpack.c.l.b16 %v1929
    %v2058 = vunpack.c.l.b16 %v1930
    %v2059 = vunpack.c.l.b16 %v1931
    %v2060 = vunpack.c.l.b16 %v1932
    %v2061 = vunpack.c.l.b16 %v1933
    %v2062 = vunpack.c.l.b16 %v1934
    %v2063 = vunpack.c.l.b16 %v1935
    %v2064 = vunpack.c.l.b16 %v1936
    %v2065 = vunpack.c.l.b16 %v1937
    %v2066 = vunpack.c.l.b16 %v1938
    %v2067 = vunpack.c.l.b16 %v1939
    %v2068 = vunpack.c.l.b16 %v1940
    %v2069 = vunpack.c.l.b16 %v1941
    %v2070 = vunpack.c.l.b16 %v1942
    %v2071 = vunpack.c.l.b16 %v1943
    %v2072 = vunpack.c.l.b16 %v1944
    %v2073 = vunpack.c.l.b16 %v1945
    %v2074 = vunpack.c.l.b16 %v1946
    %v2075 = vunpack.c.l.b16 %v1947
    %v2076 = vunpack.c.l.b16 %v1948
    %v2077 = vunpack.c.l.b16 %v1949
    %v2078 = vunpack.c.l.b16 %v1950
    %v2079 = vunpack.c.l.b16 %v1951
    %v2080 = vunpack.c.l.b16 %v1952
    %v2081 = vunpack.c.l.b16 %v1953
    %v2082 = vunpack.c.l.b16 %v1954
    %v2083 = vunpack.c.l.b16 %v1955
    %v2084 = vunpack.c.l.b16 %v1956
    %v2085 = vunpack.c.l.b16 %v1957
    %v2086 = vunpack.c.l.b16 %v1958
    %v2087 = vunpack.c.l.b16 %v1959
    %v2088 = vunpack.c.l.b16 %v1960
    %v2089 = vunpack.c.l.b16 %v1961
    %v2090 = vunpack.c.l.b16 %v1962
    %v2091 = vunpack.c.l.b16 %v1963
    %v2092 = vunpack.c.l.b16 %v1964
    %v2093 = vpack.c.b16 %v2030, %v2029
    %v2094 = vpack.c.b16 %v2032, %v2031
    %v2095 = vpack.c.b16 %v2034, %v2033
    %v2096 = vpack.c.b16 %v2036, %v2035
    %v2097 = vpack.c.b16 %v2038, %v2037
    %v2098 = vpack.c.b16 %v2040, %v2039
    %v2099 = vpack.c.b16 %v2042, %v2041
    %v2100 = vpack.c.b16 %v2044, %v2043
    %v2101 = vpack.c.b16 %v2046, %v2045
    %v2102 = vpack.c.b16 %v2048, %v2047
    %v2103 = vpack.c.b16 %v2050, %v2049
    %v2104 = vpack.c.b16 %v2052, %v2051
    %v2105 = vpack.c.b16 %v2054, %v2053
    %v2106 = vpack.c.b16 %v2056, %v2055
    %v2107 = vpack.c.b16 %v2058, %v2057
    %v2108 = vpack.c.b16 %v2060, %v2059
    %v2109 = vpack.c.b16 %v2062, %v2061
    %v2110 = vpack.c.b16 %v2064, %v2063
    %v2111 = vpack.c.b16 %v2066, %v2065
    %v2112 = vpack.c.b16 %v2068, %v2067
    %v2113 = vpack.c.b16 %v2070, %v2069
    %v2114 = vpack.c.b16 %v2072, %v2071
    %v2115 = vpack.c.b16 %v2074, %v2073
    %v2116 = vpack.c.b16 %v2076, %v2075
    %v2117 = vpack.c.b16 %v2078, %v2077
    %v2118 = vpack.c.b16 %v2080, %v2079
    %v2119 = vpack.c.b16 %v2082, %v2081
    %v2120 = vpack.c.b16 %v2084, %v2083
    %v2121 = vpack.c.b16 %v2086, %v2085
    %v2122 = vpack.c.b16 %v2088, %v2087
    %v2123 = vpack.c.b16 %v2090, %v2089
    %v2124 = vpack.c.b16 %v2092, %v2091
    %2157 = vmatpush.bf16.msra.mxu0 %v2100
    %2158 = vmatpush.bf16.msra.mxu0 %v2099
    %2159 = vmatpush.bf16.msra.mxu0 %v2098
    %2160 = vmatpush.bf16.msra.mxu0 %v2097
    %2161 = vmatpush.bf16.msra.mxu0 %v2096
    %2162 = vmatpush.bf16.msra.mxu0 %v2095
    %2163 = vmatpush.bf16.msra.mxu0 %v2094
    %2164 = vmatpush.bf16.msra.mxu0 %v2093
    %2165 = vmatmul.bf16.gmra.mxu0 %v1893
    %v2166 = vpop.f32.mrf.mxu0
    %v2167 = vadd.f32 0.0, %v2166
    %v2168 = vpop.f32.mrf.mxu0
    %v2169 = vadd.f32 0.0, %v2168
    %2170 = vmatmul.bf16.gmra.mxu0 %v1897
    %v2171 = vpop.f32.mrf.mxu0
    %v2172 = vadd.f32 0.0, %v2171
    %v2173 = vpop.f32.mrf.mxu0
    %v2174 = vadd.f32 0.0, %v2173
    %2175 = vdwg.mxu0
    %2176 = vmatpush.bf16.msra.mxu0 %v2108
    %2177 = vmatpush.bf16.msra.mxu0 %v2107
    %2178 = vmatpush.bf16.msra.mxu0 %v2106
    %2179 = vmatpush.bf16.msra.mxu0 %v2105
    %2180 = vmatpush.bf16.msra.mxu0 %v2104
    %2181 = vmatpush.bf16.msra.mxu0 %v2103
    %2182 = vmatpush.bf16.msra.mxu0 %v2102
    %2183 = vmatpush.bf16.msra.mxu0 %v2101
    %2184 = vmatmul.bf16.gmra.mxu0 %v1894
    %v2185 = vpop.f32.mrf.mxu0
    %v2186 = vadd.f32 %v2167, %v2185
    %v2187 = vpop.f32.mrf.mxu0
    %v2188 = vadd.f32 %v2169, %v2187
    %2189 = vmatmul.bf16.gmra.mxu0 %v1898
    %v2190 = vpop.f32.mrf.mxu0
    %v2191 = vadd.f32 %v2172, %v2190
    %v2192 = vpop.f32.mrf.mxu0
    %v2193 = vadd.f32 %v2174, %v2192
    %2194 = vdwg.mxu0
    %2195 = vmatpush.bf16.msra.mxu0 %v2116
    %2196 = vmatpush.bf16.msra.mxu0 %v2115
    %2197 = vmatpush.bf16.msra.mxu0 %v2114
    %2198 = vmatpush.bf16.msra.mxu0 %v2113
    %2199 = vmatpush.bf16.msra.mxu0 %v2112
    %2200 = vmatpush.bf16.msra.mxu0 %v2111
    %2201 = vmatpush.bf16.msra.mxu0 %v2110
    %2202 = vmatpush.bf16.msra.mxu0 %v2109
    %2203 = vmatmul.bf16.gmra.mxu0 %v1895
    %v2204 = vpop.f32.mrf.mxu0
    %v2205 = vadd.f32 %v2186, %v2204
    %v2206 = vpop.f32.mrf.mxu0
    %v2207 = vadd.f32 %v2188, %v2206
    %2208 = vmatmul.bf16.gmra.mxu0 %v1899
    %v2209 = vpop.f32.mrf.mxu0
    %v2210 = vadd.f32 %v2191, %v2209
    %v2211 = vpop.f32.mrf.mxu0
    %v2212 = vadd.f32 %v2193, %v2211
    %2213 = vdwg.mxu0
    %2214 = vmatpush.bf16.msra.mxu0 %v2124
    %2215 = vmatpush.bf16.msra.mxu0 %v2123
    %2216 = vmatpush.bf16.msra.mxu0 %v2122
    %2217 = vmatpush.bf16.msra.mxu0 %v2121
    %2218 = vmatpush.bf16.msra.mxu0 %v2120
    %2219 = vmatpush.bf16.msra.mxu0 %v2119
    %2220 = vmatpush.bf16.msra.mxu0 %v2118
    %2221 = vmatpush.bf16.msra.mxu0 %v2117
    %2222 = vmatmul.bf16.gmra.mxu0 %v1896
    %v2223 = vpop.f32.mrf.mxu0
    %v2224 = vadd.f32 %v2205, %v2223
    %v2225 = vpop.f32.mrf.mxu0
    %v2226 = vadd.f32 %v2207, %v2225
    %2227 = vmatmul.bf16.gmra.mxu0 %v1900
    %v2228 = vpop.f32.mrf.mxu0
    %v2229 = vadd.f32 %v2210, %v2228
    %v2230 = vpop.f32.mrf.mxu0
    %v2231 = vadd.f32 %v2212, %v2230
    %2232 = vdwg.mxu0
    %v2233 = vmul.f32 %v2224, 100.0
    %v2234 = vmul.f32 %v2226, 100.0
    %v2235 = vmul.f32 %v2229, 100.0
    %v2236 = vmul.f32 %v2231, 100.0
    %2237 = vst [vmem:[%s4] sm:$0xff] %v1877
    %2238 = vst [vmem:[%s4 + $0x8] sm:$0xff] %v1878
    %2239 = vst [vmem:[%s4 + $0x10] sm:$0xff] %v1879
    %2240 = vst [vmem:[%s4 + $0x18] sm:$0xff] %v1880
    %2241 = vst [vmem:[%s4 + $0x20] sm:$0xff] %v1881
    %2242 = vst [vmem:[%s4 + $0x28] sm:$0xff] %v1882
    %2243 = vst [vmem:[%s4 + $0x30] sm:$0xff] %v1883
    %2244 = vst [vmem:[%s4 + $0x38] sm:$0xff] %v1884
    %2245 = vst [vmem:[%s4 + $0x40] sm:$0xff] %v1885
    %2246 = vst [vmem:[%s4 + $0x48] sm:$0xff] %v1886
    %2247 = vst [vmem:[%s4 + $0x50] sm:$0xff] %v1887
    %2248 = vst [vmem:[%s4 + $0x58] sm:$0xff] %v1888
    %2249 = vst [vmem:[%s4 + $0x60] sm:$0xff] %v1889
    %2250 = vst [vmem:[%s4 + $0x68] sm:$0xff] %v1890
    %2251 = vst [vmem:[%s4 + $0x70] sm:$0xff] %v1891
    %2252 = vst [vmem:[%s4 + $0x78] sm:$0xff] %v1892
    %vm2253 = vcmask 7168
    %2254 = vst.msk [vmem:[%s5] sm:$0xff] %vm2253, %v1846
    %2255 = vst.msk [vmem:[%s5 + $0x8] sm:$0xff] %vm2253, %v1856
    %2256 = vst.msk [vmem:[%s5 + $0x10] sm:$0xff] %vm2253, %v1866
    %2257 = vst.msk [vmem:[%s5 + $0x18] sm:$0xff] %vm2253, %v1876
    %2258 = vst [vmem:[%s6] sm:$0xff] %v2233
    %2259 = vst [vmem:[%s6 + $0x8] sm:$0xff] %v2234
    %2260 = vst [vmem:[%s6 + $0x10] sm:$0xff] %v2235
    %2261 = vst [vmem:[%s6 + $0x18] sm:$0xff] %v2236
    // Predicated region
    $region30: #{jvp__.6} parent=1 // pred_check
      _
    $region31: #{jvp__.6} parent=1 // pred_check_branch
      %2263 = sbr.rel (0) target = $region33
    $region32: #{jvp__.6} parent=1 // pred_region
      _
    $region33: #{jvp__.6} parent=1 // pred_fallthru
      _
    // Predicated region
    $region34: #{jvp__.6} parent=1 // pred_check
      _
    $region35: #{jvp__.6} parent=1 // pred_check_branch
      %2265 = sbr.rel (0) target = $region37
    $region36: #{jvp__.6} parent=1 // pred_region
      _
    $region37: #{jvp__.6} parent=1 // pred_fallthru
      _
    // Predicated region
    $region38: #{jvp__.6} parent=1 // pred_check
      _
    $region39: #{jvp__.6} parent=1 // pred_check_branch
      %2267 = sbr.rel (0) target = $region41
    $region40: #{jvp__.6} parent=1 // pred_region
      _
    $region41: #{jvp__.6} parent=1 // pred_fallthru
      _
    // Predicated region
    $region42: #{jvp__.6} parent=1 // pred_check
      _
    $region43: #{jvp__.6} parent=1 // pred_check_branch
      %2269 = sbr.rel (0) target = $region45
    $region44: #{jvp__.6} parent=1 // pred_region
      _
    $region45: #{jvp__.6} parent=1 // pred_fallthru
      _
    // Predicated region
    $region46: #{jvp__.6} parent=1 // pred_check
      _
    $region47: #{jvp__.6} parent=1 // pred_check_branch
      %2271 = sbr.rel (0) target = $region49
    $region48: #{jvp__.6} parent=1 // pred_region
      _
    $region49: #{jvp__.6} parent=1 // pred_fallthru
      _
    // Predicated region
    $region50: #{jvp__.6} parent=1 // pred_check
      _
    $region51: #{jvp__.6} parent=1 // pred_check_branch
      %2273 = sbr.rel (0) target = $region53
    $region52: #{jvp__.6} parent=1 // pred_region
      _
    $region53: #{jvp__.6} parent=1 // pred_fallthru
      _
    %2274 = vsyncpa [#allocation3], 1
    %2275 = vsyncpa [#allocation5], 1

// kernel: tnt_adapt_and_predict.1
$region0: #{tnt_adapt_and_predict.1}
  #allocation0 [shape = 'u32[]', space=smem, size = 0x4, offset = 0x4, fixed_abs, tag = 'smem constant byte address 0x4 - core index']
  #allocation1 [shape = 'u32[72,128]{1,0:T(1,128)}', space=vmem, size = 0x9000, scoped, tag = 'internal scratch']
  %s0 = inlined_call_operand.hbm [shape: f32[32,768], index: 0, kind: input, shape index: {}]
  %s1 = inlined_call_operand.vmem [shape: f32[1,768], index: 1, kind: input, shape index: {}]
  %s2 = inlined_call_operand.hbm [shape: bf16[768,512], index: 2, kind: input, shape index: {}]
  %s3 = inlined_call_operand.hbm [shape: bf16[512,128], index: 3, kind: input, shape index: {}]
  %s4 = inlined_call_operand.hbm [shape: f32[32,512], index: 4, kind: output, shape index: {0}]
  %s5 = inlined_call_operand.hbm [shape: f32[32,1], index: 5, kind: output, shape index: {1}]
  %s6 = inlined_call_operand.vmem [shape: f32[32,128], index: 6, kind: output, shape index: {2}]
  %7 = xla_tuple %s4, %s5, %s6
  %s8 = sld [smem:[#allocation0]]
  $region54: #{tnt_adapt_and_predict.1} parent=0
    _
  %s10 = ssub.s32 1, %s8
  %s11 = scalar_select 0, %s10, %s8
  $region1: #{tnt_adapt_and_predict.1} parent=0
    #allocation2 [shape = 'u8[98304]{0}', space=vmem, size = 0x18000, scoped, tag = 'input window, operand 0, single buffered']
    #allocation3 [shape = 's32[1]{0}', space=sflag, size = 0x4, scoped, tag = 'scoped memory for tnt_adapt_and_predict.1']
    #allocation4 [shape = 's32[1]{0}', space=sflag, size = 0x4, scoped, tag = 'scoped memory for tnt_adapt_and_predict.1']
    #allocation5 [shape = 'u8[786432]{0}', space=vmem, size = 0xc0000, scoped, tag = 'input window, operand 2, single buffered']
    #allocation6 [shape = 's32[1]{0}', space=sflag, size = 0x4, scoped, tag = 'scoped memory for tnt_adapt_and_predict.1']
    #allocation7 [shape = 'u8[131072]{0}', space=vmem, size = 0x20000, scoped, tag = 'input window, operand 3, single buffered']
    #allocation8 [shape = 'u8[65536]{0}', space=vmem, size = 0x10000, scoped, tag = 'output window, operand 0, single buffered']
    #allocation9 [shape = 'u8[16384]{0}', space=vmem, size = 0x4000, scoped, tag = 'output window, operand 1, single buffered']
    #allocation10 [shape = 's32[1]{0}', space=sflag, size = 0x4, scoped, tag = 'scoped memory for tnt_adapt_and_predict.1']
    %12 = vsyncpa [#allocation3], 0
    %13 = vsyncpa [#allocation6], 0
    %14 = vsyncpa [#allocation4], 0
    %15 = vsyncpa [#allocation10], 0
    // Predicated region
    $region2: #{tnt_adapt_and_predict.1} parent=1 // pred_check
      _
    $region3: #{tnt_adapt_and_predict.1} parent=1 // pred_check_branch
      %17 = sbr.rel (0) target = $region5
    $region4: #{tnt_adapt_and_predict.1} parent=1 // pred_region
      %19 = vsyncadd [#allocation3], 0
      %s20 = sshll.u32 %s0, 4
      %s21 = int_to_ptr.hbm [resolvable:$true] %s20
      %s22 = sshll.u32 [#allocation2], 4
      %s23 = int_to_ptr.vmem [resolvable:$true] %s22
      %28 = dma.hbm_to_vmem [thread:$0]  %s21, 3072, %s23, [#allocation3], 768, 768, 48
    $region5: #{tnt_adapt_and_predict.1} parent=1 // pred_fallthru
      _
    // Predicated region
    $region6: #{tnt_adapt_and_predict.1} parent=1 // pred_check
      _
    $region7: #{tnt_adapt_and_predict.1} parent=1 // pred_check_branch
      %30 = sbr.rel (0) target = $region9
    $region8: #{tnt_adapt_and_predict.1} parent=1 // pred_region
      _
    $region9: #{tnt_adapt_and_predict.1} parent=1 // pred_fallthru
      _
    // Predicated region
    $region10: #{tnt_adapt_and_predict.1} parent=1 // pred_check
      _
    $region11: #{tnt_adapt_and_predict.1} parent=1 // pred_check_branch
      %32 = sbr.rel (0) target = $region13
    $region12: #{tnt_adapt_and_predict.1} parent=1 // pred_region
      %34 = vsyncadd [#allocation6], 0
      %s35 = sshll.u32 %s2, 4
      %s36 = int_to_ptr.hbm [resolvable:$true] %s35
      %s37 = sshll.u32 [#allocation5], 4
      %s38 = int_to_ptr.vmem [resolvable:$true] %s37
      %43 = dma.hbm_to_vmem [thread:$0]  %s36, 24576, %s38, [#allocation6], 256, 256, 16
    $region13: #{tnt_adapt_and_predict.1} parent=1 // pred_fallthru
      _
    // Predicated region
    $region14: #{tnt_adapt_and_predict.1} parent=1 // pred_check
      _
    $region15: #{tnt_adapt_and_predict.1} parent=1 // pred_check_branch
      %45 = sbr.rel (0) target = $region17
    $region16: #{tnt_adapt_and_predict.1} parent=1 // pred_region
      %47 = vsyncadd [#allocation6], 0
      %s48 = sshll.u32 %s3, 4
      %s49 = int_to_ptr.hbm [resolvable:$true] %s48
      %s50 = sshll.u32 [#allocation7], 4
      %s51 = int_to_ptr.vmem [resolvable:$true] %s50
      %56 = dma.hbm_to_vmem [thread:$0]  %s49, 4096, %s51, [#allocation6], 64, 64, 4
    $region17: #{tnt_adapt_and_predict.1} parent=1 // pred_fallthru
      _
    // Predicated region
    $region18: #{tnt_adapt_and_predict.1} parent=1 // pred_check
      _
    $region19: #{tnt_adapt_and_predict.1} parent=1 // pred_check_branch
      %58 = sbr.rel (0) target = $region21
    $region20: #{tnt_adapt_and_predict.1} parent=1 // pred_region
      %60 = dma.done [#allocation3], 3072
    $region21: #{tnt_adapt_and_predict.1} parent=1 // pred_fallthru
      _
    // Predicated region
    $region22: #{tnt_adapt_and_predict.1} parent=1 // pred_check
      _
    $region23: #{tnt_adapt_and_predict.1} parent=1 // pred_check_branch
      %62 = sbr.rel (0) target = $region25
    $region24: #{tnt_adapt_and_predict.1} parent=1 // pred_region
      %64 = dma.done [#allocation6], 24576
    $region25: #{tnt_adapt_and_predict.1} parent=1 // pred_fallthru
      _
    // Predicated region
    $region26: #{tnt_adapt_and_predict.1} parent=1 // pred_check
      _
    $region27: #{tnt_adapt_and_predict.1} parent=1 // pred_check_branch
      %66 = sbr.rel (0) target = $region29
    $region28: #{tnt_adapt_and_predict.1} parent=1 // pred_region
      %68 = dma.done [#allocation6], 4096
    $region29: #{tnt_adapt_and_predict.1} parent=1 // pred_fallthru
      _
    %v69 = vld [vmem:[#allocation2] sm:$0xff]
    %v70 = vld [vmem:[#allocation2 + $0x8] sm:$0xff]
    %v71 = vld [vmem:[#allocation2 + $0x10] sm:$0xff]
    %v72 = vld [vmem:[#allocation2 + $0x18] sm:$0xff]
    %v73 = vld [vmem:[#allocation2 + $0x20] sm:$0xff]
    %v74 = vld [vmem:[#allocation2 + $0x28] sm:$0xff]
    %v75 = vld [vmem:[#allocation2 + $0x30] sm:$0xff]
    %v76 = vld [vmem:[#allocation2 + $0x38] sm:$0xff]
    %v77 = vld [vmem:[#allocation2 + $0x40] sm:$0xff]
    %v78 = vld [vmem:[#allocation2 + $0x48] sm:$0xff]
    %v79 = vld [vmem:[#allocation2 + $0x50] sm:$0xff]
    %v80 = vld [vmem:[#allocation2 + $0x58] sm:$0xff]
    %v81 = vld [vmem:[#allocation2 + $0x60] sm:$0xff]
    %v82 = vld [vmem:[#allocation2 + $0x68] sm:$0xff]
    %v83 = vld [vmem:[#allocation2 + $0x70] sm:$0xff]
    %v84 = vld [vmem:[#allocation2 + $0x78] sm:$0xff]
    %v85 = vld [vmem:[#allocation2 + $0x80] sm:$0xff]
    %v86 = vld [vmem:[#allocation2 + $0x88] sm:$0xff]
    %v87 = vld [vmem:[#allocation2 + $0x90] sm:$0xff]
    %v88 = vld [vmem:[#allocation2 + $0x98] sm:$0xff]
    %v89 = vld [vmem:[#allocation2 + $0xa0] sm:$0xff]
    %v90 = vld [vmem:[#allocation2 + $0xa8] sm:$0xff]
    %v91 = vld [vmem:[#allocation2 + $0xb0] sm:$0xff]
    %v92 = vld [vmem:[#allocation2 + $0xb8] sm:$0xff]
    %v93 = vld [vmem:[%s1] sm:$0x3f]
    %v94 = vmax.f32 %v93, -0.003921569
    %v95 = vmin.f32 %v94, 0.003921569
    %v97 = vperm.slane %v95, 0
    %v98 = vperm.slane %v95, 1
    %v99 = vperm.slane %v95, 2
    %v100 = vperm.slane %v95, 3
    %v101 = vperm.slane %v95, 4
    %v102 = vperm.slane %v95, 5
    %v109 = vadd.f32 %v69, %v97
    %v110 = vadd.f32 %v70, %v98
    %v111 = vadd.f32 %v71, %v99
    %v112 = vadd.f32 %v72, %v100
    %v113 = vadd.f32 %v73, %v101
    %v114 = vadd.f32 %v74, %v102
    %v115 = vadd.f32 %v75, %v97
    %v116 = vadd.f32 %v76, %v98
    %v117 = vadd.f32 %v77, %v99
    %v118 = vadd.f32 %v78, %v100
    %v119 = vadd.f32 %v79, %v101
    %v120 = vadd.f32 %v80, %v102
    %v121 = vadd.f32 %v81, %v97
    %v122 = vadd.f32 %v82, %v98
    %v123 = vadd.f32 %v83, %v99
    %v124 = vadd.f32 %v84, %v100
    %v125 = vadd.f32 %v85, %v101
    %v126 = vadd.f32 %v86, %v102
    %v127 = vadd.f32 %v87, %v97
    %v128 = vadd.f32 %v88, %v98
    %v129 = vadd.f32 %v89, %v99
    %v130 = vadd.f32 %v90, %v100
    %v131 = vadd.f32 %v91, %v101
    %v132 = vadd.f32 %v92, %v102
    %v133 = vpack.c.bf16 %v115, %v109
    %v134 = vpack.c.bf16 %v116, %v110
    %v135 = vpack.c.bf16 %v117, %v111
    %v136 = vpack.c.bf16 %v118, %v112
    %v137 = vpack.c.bf16 %v119, %v113
    %v138 = vpack.c.bf16 %v120, %v114
    %v139 = vpack.c.bf16 %v127, %v121
    %v140 = vpack.c.bf16 %v128, %v122
    %v141 = vpack.c.bf16 %v129, %v123
    %v142 = vpack.c.bf16 %v130, %v124
    %v143 = vpack.c.bf16 %v131, %v125
    %v144 = vpack.c.bf16 %v132, %v126
    %v145 = vld [vmem:[#allocation5] sm:$0xff]
    %v146 = vld [vmem:[#allocation5 + $0x8] sm:$0xff]
    %v147 = vld [vmem:[#allocation5 + $0x10] sm:$0xff]
    %v148 = vld [vmem:[#allocation5 + $0x18] sm:$0xff]
    %v149 = vld [vmem:[#allocation5 + $0x20] sm:$0xff]
    %v150 = vld [vmem:[#allocation5 + $0x28] sm:$0xff]
    %v151 = vld [vmem:[#allocation5 + $0x30] sm:$0xff]
    %v152 = vld [vmem:[#allocation5 + $0x38] sm:$0xff]
    %v153 = vld [vmem:[#allocation5 + $0x40] sm:$0xff]
    %v154 = vld [vmem:[#allocation5 + $0x48] sm:$0xff]
    %v155 = vld [vmem:[#allocation5 + $0x50] sm:$0xff]
    %v156 = vld [vmem:[#allocation5 + $0x58] sm:$0xff]
    %v157 = vld [vmem:[#allocation5 + $0x60] sm:$0xff]
    %v158 = vld [vmem:[#allocation5 + $0x68] sm:$0xff]
    %v159 = vld [vmem:[#allocation5 + $0x70] sm:$0xff]
    %v160 = vld [vmem:[#allocation5 + $0x78] sm:$0xff]
    %v161 = vld [vmem:[#allocation5 + $0x80] sm:$0xff]
    %v162 = vld [vmem:[#allocation5 + $0x88] sm:$0xff]
    %v163 = vld [vmem:[#allocation5 + $0x90] sm:$0xff]
    %v164 = vld [vmem:[#allocation5 + $0x98] sm:$0xff]
    %v165 = vld [vmem:[#allocation5 + $0xa0] sm:$0xff]
    %v166 = vld [vmem:[#allocation5 + $0xa8] sm:$0xff]
    %v167 = vld [vmem:[#allocation5 + $0xb0] sm:$0xff]
    %v168 = vld [vmem:[#allocation5 + $0xb8] sm:$0xff]
    %v169 = vld [vmem:[#allocation5 + $0xc0] sm:$0xff]
    %v170 = vld [vmem:[#allocation5 + $0xc8] sm:$0xff]
    %v171 = vld [vmem:[#allocation5 + $0xd0] sm:$0xff]
    %v172 = vld [vmem:[#allocation5 + $0xd8] sm:$0xff]
    %v173 = vld [vmem:[#allocation5 + $0xe0] sm:$0xff]
    %v174 = vld [vmem:[#allocation5 + $0xe8] sm:$0xff]
    %v175 = vld [vmem:[#allocation5 + $0xf0] sm:$0xff]
    %v176 = vld [vmem:[#allocation5 + $0xf8] sm:$0xff]
    %v177 = vld [vmem:[#allocation5 + $0x100] sm:$0xff]
    %v178 = vld [vmem:[#allocation5 + $0x108] sm:$0xff]
    %v179 = vld [vmem:[#allocation5 + $0x110] sm:$0xff]
    %v180 = vld [vmem:[#allocation5 + $0x118] sm:$0xff]
    %v181 = vld [vmem:[#allocation5 + $0x120] sm:$0xff]
    %v182 = vld [vmem:[#allocation5 + $0x128] sm:$0xff]
    %v183 = vld [vmem:[#allocation5 + $0x130] sm:$0xff]
    %v184 = vld [vmem:[#allocation5 + $0x138] sm:$0xff]
    %v185 = vld [vmem:[#allocation5 + $0x140] sm:$0xff]
    %v186 = vld [vmem:[#allocation5 + $0x148] sm:$0xff]
    %v187 = vld [vmem:[#allocation5 + $0x150] sm:$0xff]
    %v188 = vld [vmem:[#allocation5 + $0x158] sm:$0xff]
    %v189 = vld [vmem:[#allocation5 + $0x160] sm:$0xff]
    %v190 = vld [vmem:[#allocation5 + $0x168] sm:$0xff]
    %v191 = vld [vmem:[#allocation5 + $0x170] sm:$0xff]
    %v192 = vld [vmem:[#allocation5 + $0x178] sm:$0xff]
    %v193 = vld [vmem:[#allocation5 + $0x180] sm:$0xff]
    %v194 = vld [vmem:[#allocation5 + $0x188] sm:$0xff]
    %v195 = vld [vmem:[#allocation5 + $0x190] sm:$0xff]
    %v196 = vld [vmem:[#allocation5 + $0x198] sm:$0xff]
    %v197 = vld [vmem:[#allocation5 + $0x1a0] sm:$0xff]
    %v198 = vld [vmem:[#allocation5 + $0x1a8] sm:$0xff]
    %v199 = vld [vmem:[#allocation5 + $0x1b0] sm:$0xff]
    %v200 = vld [vmem:[#allocation5 + $0x1b8] sm:$0xff]
    %v201 = vld [vmem:[#allocation5 + $0x1c0] sm:$0xff]
    %v202 = vld [vmem:[#allocation5 + $0x1c8] sm:$0xff]
    %v203 = vld [vmem:[#allocation5 + $0x1d0] sm:$0xff]
    %v204 = vld [vmem:[#allocation5 + $0x1d8] sm:$0xff]
    %v205 = vld [vmem:[#allocation5 + $0x1e0] sm:$0xff]
    %v206 = vld [vmem:[#allocation5 + $0x1e8] sm:$0xff]
    %v207 = vld [vmem:[#allocation5 + $0x1f0] sm:$0xff]
    %v208 = vld [vmem:[#allocation5 + $0x1f8] sm:$0xff]
    %v209 = vld [vmem:[#allocation5 + $0x200] sm:$0xff]
    %v210 = vld [vmem:[#allocation5 + $0x208] sm:$0xff]
    %v211 = vld [vmem:[#allocation5 + $0x210] sm:$0xff]
    %v212 = vld [vmem:[#allocation5 + $0x218] sm:$0xff]
    %v213 = vld [vmem:[#allocation5 + $0x220] sm:$0xff]
    %v214 = vld [vmem:[#allocation5 + $0x228] sm:$0xff]
    %v215 = vld [vmem:[#allocation5 + $0x230] sm:$0xff]
    %v216 = vld [vmem:[#allocation5 + $0x238] sm:$0xff]
    %v217 = vld [vmem:[#allocation5 + $0x240] sm:$0xff]
    %v218 = vld [vmem:[#allocation5 + $0x248] sm:$0xff]
    %v219 = vld [vmem:[#allocation5 + $0x250] sm:$0xff]
    %v220 = vld [vmem:[#allocation5 + $0x258] sm:$0xff]
    %v221 = vld [vmem:[#allocation5 + $0x260] sm:$0xff]
    %v222 = vld [vmem:[#allocation5 + $0x268] sm:$0xff]
    %v223 = vld [vmem:[#allocation5 + $0x270] sm:$0xff]
    %v224 = vld [vmem:[#allocation5 + $0x278] sm:$0xff]
    %v225 = vld [vmem:[#allocation5 + $0x280] sm:$0xff]
    %v226 = vld [vmem:[#allocation5 + $0x288] sm:$0xff]
    %v227 = vld [vmem:[#allocation5 + $0x290] sm:$0xff]
    %v228 = vld [vmem:[#allocation5 + $0x298] sm:$0xff]
    %v229 = vld [vmem:[#allocation5 + $0x2a0] sm:$0xff]
    %v230 = vld [vmem:[#allocation5 + $0x2a8] sm:$0xff]
    %v231 = vld [vmem:[#allocation5 + $0x2b0] sm:$0xff]
    %v232 = vld [vmem:[#allocation5 + $0x2b8] sm:$0xff]
    %v233 = vld [vmem:[#allocation5 + $0x2c0] sm:$0xff]
    %v234 = vld [vmem:[#allocation5 + $0x2c8] sm:$0xff]
    %v235 = vld [vmem:[#allocation5 + $0x2d0] sm:$0xff]
    %v236 = vld [vmem:[#allocation5 + $0x2d8] sm:$0xff]
    %v237 = vld [vmem:[#allocation5 + $0x2e0] sm:$0xff]
    %v238 = vld [vmem:[#allocation5 + $0x2e8] sm:$0xff]
    %v239 = vld [vmem:[#allocation5 + $0x2f0] sm:$0xff]
    %v240 = vld [vmem:[#allocation5 + $0x2f8] sm:$0xff]
    %v241 = vld [vmem:[#allocation5 + $0x300] sm:$0xff]
    %v242 = vld [vmem:[#allocation5 + $0x308] sm:$0xff]
    %v243 = vld [vmem:[#allocation5 + $0x310] sm:$0xff]
    %v244 = vld [vmem:[#allocation5 + $0x318] sm:$0xff]
    %v245 = vld [vmem:[#allocation5 + $0x320] sm:$0xff]
    %v246 = vld [vmem:[#allocation5 + $0x328] sm:$0xff]
    %v247 = vld [vmem:[#allocation5 + $0x330] sm:$0xff]
    %v248 = vld [vmem:[#allocation5 + $0x338] sm:$0xff]
    %v249 = vld [vmem:[#allocation5 + $0x340] sm:$0xff]
    %v250 = vld [vmem:[#allocation5 + $0x348] sm:$0xff]
    %v251 = vld [vmem:[#allocation5 + $0x350] sm:$0xff]
    %v252 = vld [vmem:[#allocation5 + $0x358] sm:$0xff]
    %v253 = vld [vmem:[#allocation5 + $0x360] sm:$0xff]
    %v254 = vld [vmem:[#allocation5 + $0x368] sm:$0xff]
    %v255 = vld [vmem:[#allocation5 + $0x370] sm:$0xff]
    %v256 = vld [vmem:[#allocation5 + $0x378] sm:$0xff]
    %v257 = vld [vmem:[#allocation5 + $0x380] sm:$0xff]
    %v258 = vld [vmem:[#allocation5 + $0x388] sm:$0xff]
    %v259 = vld [vmem:[#allocation5 + $0x390] sm:$0xff]
    %v260 = vld [vmem:[#allocation5 + $0x398] sm:$0xff]
    %v261 = vld [vmem:[#allocation5 + $0x3a0] sm:$0xff]
    %v262 = vld [vmem:[#allocation5 + $0x3a8] sm:$0xff]
    %v263 = vld [vmem:[#allocation5 + $0x3b0] sm:$0xff]
    %v264 = vld [vmem:[#allocation5 + $0x3b8] sm:$0xff]
    %v265 = vld [vmem:[#allocation5 + $0x3c0] sm:$0xff]
    %v266 = vld [vmem:[#allocation5 + $0x3c8] sm:$0xff]
    %v267 = vld [vmem:[#allocation5 + $0x3d0] sm:$0xff]
    %v268 = vld [vmem:[#allocation5 + $0x3d8] sm:$0xff]
    %v269 = vld [vmem:[#allocation5 + $0x3e0] sm:$0xff]
    %v270 = vld [vmem:[#allocation5 + $0x3e8] sm:$0xff]
    %v271 = vld [vmem:[#allocation5 + $0x3f0] sm:$0xff]
    %v272 = vld [vmem:[#allocation5 + $0x3f8] sm:$0xff]
    %v273 = vld [vmem:[#allocation5 + $0x400] sm:$0xff]
    %v274 = vld [vmem:[#allocation5 + $0x408] sm:$0xff]
    %v275 = vld [vmem:[#allocation5 + $0x410] sm:$0xff]
    %v276 = vld [vmem:[#allocation5 + $0x418] sm:$0xff]
    %v277 = vld [vmem:[#allocation5 + $0x420] sm:$0xff]
    %v278 = vld [vmem:[#allocation5 + $0x428] sm:$0xff]
    %v279 = vld [vmem:[#allocation5 + $0x430] sm:$0xff]
    %v280 = vld [vmem:[#allocation5 + $0x438] sm:$0xff]
    %v281 = vld [vmem:[#allocation5 + $0x440] sm:$0xff]
    %v282 = vld [vmem:[#allocation5 + $0x448] sm:$0xff]
    %v283 = vld [vmem:[#allocation5 + $0x450] sm:$0xff]
    %v284 = vld [vmem:[#allocation5 + $0x458] sm:$0xff]
    %v285 = vld [vmem:[#allocation5 + $0x460] sm:$0xff]
    %v286 = vld [vmem:[#allocation5 + $0x468] sm:$0xff]
    %v287 = vld [vmem:[#allocation5 + $0x470] sm:$0xff]
    %v288 = vld [vmem:[#allocation5 + $0x478] sm:$0xff]
    %v289 = vld [vmem:[#allocation5 + $0x480] sm:$0xff]
    %v290 = vld [vmem:[#allocation5 + $0x488] sm:$0xff]
    %v291 = vld [vmem:[#allocation5 + $0x490] sm:$0xff]
    %v292 = vld [vmem:[#allocation5 + $0x498] sm:$0xff]
    %v293 = vld [vmem:[#allocation5 + $0x4a0] sm:$0xff]
    %v294 = vld [vmem:[#allocation5 + $0x4a8] sm:$0xff]
    %v295 = vld [vmem:[#allocation5 + $0x4b0] sm:$0xff]
    %v296 = vld [vmem:[#allocation5 + $0x4b8] sm:$0xff]
    %v297 = vld [vmem:[#allocation5 + $0x4c0] sm:$0xff]
    %v298 = vld [vmem:[#allocation5 + $0x4c8] sm:$0xff]
    %v299 = vld [vmem:[#allocation5 + $0x4d0] sm:$0xff]
    %v300 = vld [vmem:[#allocation5 + $0x4d8] sm:$0xff]
    %v301 = vld [vmem:[#allocation5 + $0x4e0] sm:$0xff]
    %v302 = vld [vmem:[#allocation5 + $0x4e8] sm:$0xff]
    %v303 = vld [vmem:[#allocation5 + $0x4f0] sm:$0xff]
    %v304 = vld [vmem:[#allocation5 + $0x4f8] sm:$0xff]
    %v305 = vld [vmem:[#allocation5 + $0x500] sm:$0xff]
    %v306 = vld [vmem:[#allocation5 + $0x508] sm:$0xff]
    %v307 = vld [vmem:[#allocation5 + $0x510] sm:$0xff]
    %v308 = vld [vmem:[#allocation5 + $0x518] sm:$0xff]
    %v309 = vld [vmem:[#allocation5 + $0x520] sm:$0xff]
    %v310 = vld [vmem:[#allocation5 + $0x528] sm:$0xff]
    %v311 = vld [vmem:[#allocation5 + $0x530] sm:$0xff]
    %v312 = vld [vmem:[#allocation5 + $0x538] sm:$0xff]
    %v313 = vld [vmem:[#allocation5 + $0x540] sm:$0xff]
    %v314 = vld [vmem:[#allocation5 + $0x548] sm:$0xff]
    %v315 = vld [vmem:[#allocation5 + $0x550] sm:$0xff]
    %v316 = vld [vmem:[#allocation5 + $0x558] sm:$0xff]
    %v317 = vld [vmem:[#allocation5 + $0x560] sm:$0xff]
    %v318 = vld [vmem:[#allocation5 + $0x568] sm:$0xff]
    %v319 = vld [vmem:[#allocation5 + $0x570] sm:$0xff]
    %v320 = vld [vmem:[#allocation5 + $0x578] sm:$0xff]
    %v321 = vld [vmem:[#allocation5 + $0x580] sm:$0xff]
    %v322 = vld [vmem:[#allocation5 + $0x588] sm:$0xff]
    %v323 = vld [vmem:[#allocation5 + $0x590] sm:$0xff]
    %v324 = vld [vmem:[#allocation5 + $0x598] sm:$0xff]
    %v325 = vld [vmem:[#allocation5 + $0x5a0] sm:$0xff]
    %v326 = vld [vmem:[#allocation5 + $0x5a8] sm:$0xff]
    %v327 = vld [vmem:[#allocation5 + $0x5b0] sm:$0xff]
    %v328 = vld [vmem:[#allocation5 + $0x5b8] sm:$0xff]
    %v329 = vld [vmem:[#allocation5 + $0x5c0] sm:$0xff]
    %v330 = vld [vmem:[#allocation5 + $0x5c8] sm:$0xff]
    %v331 = vld [vmem:[#allocation5 + $0x5d0] sm:$0xff]
    %v332 = vld [vmem:[#allocation5 + $0x5d8] sm:$0xff]
    %v333 = vld [vmem:[#allocation5 + $0x5e0] sm:$0xff]
    %v334 = vld [vmem:[#allocation5 + $0x5e8] sm:$0xff]
    %v335 = vld [vmem:[#allocation5 + $0x5f0] sm:$0xff]
    %v336 = vld [vmem:[#allocation5 + $0x5f8] sm:$0xff]
    %v529 = vunpack.c.l.b16 %v145
    %v530 = vunpack.c.h.b16 %v145
    %v531 = vunpack.c.l.b16 %v146
    %v532 = vunpack.c.h.b16 %v146
    %v533 = vunpack.c.l.b16 %v147
    %v534 = vunpack.c.h.b16 %v147
    %v535 = vunpack.c.l.b16 %v148
    %v536 = vunpack.c.h.b16 %v148
    %v537 = vunpack.c.l.b16 %v149
    %v538 = vunpack.c.h.b16 %v149
    %v539 = vunpack.c.l.b16 %v150
    %v540 = vunpack.c.h.b16 %v150
    %v541 = vunpack.c.l.b16 %v151
    %v542 = vunpack.c.h.b16 %v151
    %v543 = vunpack.c.l.b16 %v152
    %v544 = vunpack.c.h.b16 %v152
    %v545 = vunpack.c.l.b16 %v153
    %v546 = vunpack.c.h.b16 %v153
    %v547 = vunpack.c.l.b16 %v154
    %v548 = vunpack.c.h.b16 %v154
    %v549 = vunpack.c.l.b16 %v155
    %v550 = vunpack.c.h.b16 %v155
    %v551 = vunpack.c.l.b16 %v156
    %v552 = vunpack.c.h.b16 %v156
    %v553 = vunpack.c.l.b16 %v157
    %v554 = vunpack.c.h.b16 %v157
    %v555 = vunpack.c.l.b16 %v158
    %v556 = vunpack.c.h.b16 %v158
    %v557 = vunpack.c.l.b16 %v159
    %v558 = vunpack.c.h.b16 %v159
    %v559 = vunpack.c.l.b16 %v160
    %v560 = vunpack.c.h.b16 %v160
    %v561 = vunpack.c.l.b16 %v161
    %v562 = vunpack.c.h.b16 %v161
    %v563 = vunpack.c.l.b16 %v162
    %v564 = vunpack.c.h.b16 %v162
    %v565 = vunpack.c.l.b16 %v163
    %v566 = vunpack.c.h.b16 %v163
    %v567 = vunpack.c.l.b16 %v164
    %v568 = vunpack.c.h.b16 %v164
    %v569 = vunpack.c.l.b16 %v165
    %v570 = vunpack.c.h.b16 %v165
    %v571 = vunpack.c.l.b16 %v166
    %v572 = vunpack.c.h.b16 %v166
    %v573 = vunpack.c.l.b16 %v167
    %v574 = vunpack.c.h.b16 %v167
    %v575 = vunpack.c.l.b16 %v168
    %v576 = vunpack.c.h.b16 %v168
    %v577 = vunpack.c.l.b16 %v169
    %v578 = vunpack.c.h.b16 %v169
    %v579 = vunpack.c.l.b16 %v170
    %v580 = vunpack.c.h.b16 %v170
    %v581 = vunpack.c.l.b16 %v171
    %v582 = vunpack.c.h.b16 %v171
    %v583 = vunpack.c.l.b16 %v172
    %v584 = vunpack.c.h.b16 %v172
    %v585 = vunpack.c.l.b16 %v173
    %v586 = vunpack.c.h.b16 %v173
    %v587 = vunpack.c.l.b16 %v174
    %v588 = vunpack.c.h.b16 %v174
    %v589 = vunpack.c.l.b16 %v175
    %v590 = vunpack.c.h.b16 %v175
    %v591 = vunpack.c.l.b16 %v176
    %v592 = vunpack.c.h.b16 %v176
    %v593 = vunpack.c.l.b16 %v177
    %v594 = vunpack.c.h.b16 %v177
    %v595 = vunpack.c.l.b16 %v178
    %v596 = vunpack.c.h.b16 %v178
    %v597 = vunpack.c.l.b16 %v179
    %v598 = vunpack.c.h.b16 %v179
    %v599 = vunpack.c.l.b16 %v180
    %v600 = vunpack.c.h.b16 %v180
    %v601 = vunpack.c.l.b16 %v181
    %v602 = vunpack.c.h.b16 %v181
    %v603 = vunpack.c.l.b16 %v182
    %v604 = vunpack.c.h.b16 %v182
    %v605 = vunpack.c.l.b16 %v183
    %v606 = vunpack.c.h.b16 %v183
    %v607 = vunpack.c.l.b16 %v184
    %v608 = vunpack.c.h.b16 %v184
    %v609 = vunpack.c.l.b16 %v185
    %v610 = vunpack.c.h.b16 %v185
    %v611 = vunpack.c.l.b16 %v186
    %v612 = vunpack.c.h.b16 %v186
    %v613 = vunpack.c.l.b16 %v187
    %v614 = vunpack.c.h.b16 %v187
    %v615 = vunpack.c.l.b16 %v188
    %v616 = vunpack.c.h.b16 %v188
    %v617 = vunpack.c.l.b16 %v189
    %v618 = vunpack.c.h.b16 %v189
    %v619 = vunpack.c.l.b16 %v190
    %v620 = vunpack.c.h.b16 %v190
    %v621 = vunpack.c.l.b16 %v191
    %v622 = vunpack.c.h.b16 %v191
    %v623 = vunpack.c.l.b16 %v192
    %v624 = vunpack.c.h.b16 %v192
    %v625 = vunpack.c.l.b16 %v193
    %v626 = vunpack.c.h.b16 %v193
    %v627 = vunpack.c.l.b16 %v194
    %v628 = vunpack.c.h.b16 %v194
    %v629 = vunpack.c.l.b16 %v195
    %v630 = vunpack.c.h.b16 %v195
    %v631 = vunpack.c.l.b16 %v196
    %v632 = vunpack.c.h.b16 %v196
    %v633 = vunpack.c.l.b16 %v197
    %v634 = vunpack.c.h.b16 %v197
    %v635 = vunpack.c.l.b16 %v198
    %v636 = vunpack.c.h.b16 %v198
    %v637 = vunpack.c.l.b16 %v199
    %v638 = vunpack.c.h.b16 %v199
    %v639 = vunpack.c.l.b16 %v200
    %v640 = vunpack.c.h.b16 %v200
    %v641 = vunpack.c.l.b16 %v201
    %v642 = vunpack.c.h.b16 %v201
    %v643 = vunpack.c.l.b16 %v202
    %v644 = vunpack.c.h.b16 %v202
    %v645 = vunpack.c.l.b16 %v203
    %v646 = vunpack.c.h.b16 %v203
    %v647 = vunpack.c.l.b16 %v204
    %v648 = vunpack.c.h.b16 %v204
    %v649 = vunpack.c.l.b16 %v205
    %v650 = vunpack.c.h.b16 %v205
    %v651 = vunpack.c.l.b16 %v206
    %v652 = vunpack.c.h.b16 %v206
    %v653 = vunpack.c.l.b16 %v207
    %v654 = vunpack.c.h.b16 %v207
    %v655 = vunpack.c.l.b16 %v208
    %v656 = vunpack.c.h.b16 %v208
    %v657 = vunpack.c.l.b16 %v209
    %v658 = vunpack.c.h.b16 %v209
    %v659 = vunpack.c.l.b16 %v210
    %v660 = vunpack.c.h.b16 %v210
    %v661 = vunpack.c.l.b16 %v211
    %v662 = vunpack.c.h.b16 %v211
    %v663 = vunpack.c.l.b16 %v212
    %v664 = vunpack.c.h.b16 %v212
    %v665 = vunpack.c.l.b16 %v213
    %v666 = vunpack.c.h.b16 %v213
    %v667 = vunpack.c.l.b16 %v214
    %v668 = vunpack.c.h.b16 %v214
    %v669 = vunpack.c.l.b16 %v215
    %v670 = vunpack.c.h.b16 %v215
    %v671 = vunpack.c.l.b16 %v216
    %v672 = vunpack.c.h.b16 %v216
    %v673 = vunpack.c.l.b16 %v217
    %v674 = vunpack.c.h.b16 %v217
    %v675 = vunpack.c.l.b16 %v218
    %v676 = vunpack.c.h.b16 %v218
    %v677 = vunpack.c.l.b16 %v219
    %v678 = vunpack.c.h.b16 %v219
    %v679 = vunpack.c.l.b16 %v220
    %v680 = vunpack.c.h.b16 %v220
    %v681 = vunpack.c.l.b16 %v221
    %v682 = vunpack.c.h.b16 %v221
    %v683 = vunpack.c.l.b16 %v222
    %v684 = vunpack.c.h.b16 %v222
    %v685 = vunpack.c.l.b16 %v223
    %v686 = vunpack.c.h.b16 %v223
    %v687 = vunpack.c.l.b16 %v224
    %v688 = vunpack.c.h.b16 %v224
    %v689 = vunpack.c.l.b16 %v225
    %v690 = vunpack.c.h.b16 %v225
    %v691 = vunpack.c.l.b16 %v226
    %v692 = vunpack.c.h.b16 %v226
    %v693 = vunpack.c.l.b16 %v227
    %v694 = vunpack.c.h.b16 %v227
    %v695 = vunpack.c.l.b16 %v228
    %v696 = vunpack.c.h.b16 %v228
    %v697 = vunpack.c.l.b16 %v229
    %v698 = vunpack.c.h.b16 %v229
    %v699 = vunpack.c.l.b16 %v230
    %v700 = vunpack.c.h.b16 %v230
    %v701 = vunpack.c.l.b16 %v231
    %v702 = vunpack.c.h.b16 %v231
    %v703 = vunpack.c.l.b16 %v232
    %v704 = vunpack.c.h.b16 %v232
    %v705 = vunpack.c.l.b16 %v233
    %v706 = vunpack.c.h.b16 %v233
    %v707 = vunpack.c.l.b16 %v234
    %v708 = vunpack.c.h.b16 %v234
    %v709 = vunpack.c.l.b16 %v235
    %v710 = vunpack.c.h.b16 %v235
    %v711 = vunpack.c.l.b16 %v236
    %v712 = vunpack.c.h.b16 %v236
    %v713 = vunpack.c.l.b16 %v237
    %v714 = vunpack.c.h.b16 %v237
    %v715 = vunpack.c.l.b16 %v238
    %v716 = vunpack.c.h.b16 %v238
    %v717 = vunpack.c.l.b16 %v239
    %v718 = vunpack.c.h.b16 %v239
    %v719 = vunpack.c.l.b16 %v240
    %v720 = vunpack.c.h.b16 %v240
    %v721 = vunpack.c.l.b16 %v241
    %v722 = vunpack.c.h.b16 %v241
    %v723 = vunpack.c.l.b16 %v242
    %v724 = vunpack.c.h.b16 %v242
    %v725 = vunpack.c.l.b16 %v243
    %v726 = vunpack.c.h.b16 %v243
    %v727 = vunpack.c.l.b16 %v244
    %v728 = vunpack.c.h.b16 %v244
    %v729 = vunpack.c.l.b16 %v245
    %v730 = vunpack.c.h.b16 %v245
    %v731 = vunpack.c.l.b16 %v246
    %v732 = vunpack.c.h.b16 %v246
    %v733 = vunpack.c.l.b16 %v247
    %v734 = vunpack.c.h.b16 %v247
    %v735 = vunpack.c.l.b16 %v248
    %v736 = vunpack.c.h.b16 %v248
    %v737 = vunpack.c.l.b16 %v249
    %v738 = vunpack.c.h.b16 %v249
    %v739 = vunpack.c.l.b16 %v250
    %v740 = vunpack.c.h.b16 %v250
    %v741 = vunpack.c.l.b16 %v251
    %v742 = vunpack.c.h.b16 %v251
    %v743 = vunpack.c.l.b16 %v252
    %v744 = vunpack.c.h.b16 %v252
    %v745 = vunpack.c.l.b16 %v253
    %v746 = vunpack.c.h.b16 %v253
    %v747 = vunpack.c.l.b16 %v254
    %v748 = vunpack.c.h.b16 %v254
    %v749 = vunpack.c.l.b16 %v255
    %v750 = vunpack.c.h.b16 %v255
    %v751 = vunpack.c.l.b16 %v256
    %v752 = vunpack.c.h.b16 %v256
    %v753 = vunpack.c.l.b16 %v257
    %v754 = vunpack.c.h.b16 %v257
    %v755 = vunpack.c.l.b16 %v258
    %v756 = vunpack.c.h.b16 %v258
    %v757 = vunpack.c.l.b16 %v259
    %v758 = vunpack.c.h.b16 %v259
    %v759 = vunpack.c.l.b16 %v260
    %v760 = vunpack.c.h.b16 %v260
    %v761 = vunpack.c.l.b16 %v261
    %v762 = vunpack.c.h.b16 %v261
    %v763 = vunpack.c.l.b16 %v262
    %v764 = vunpack.c.h.b16 %v262
    %v765 = vunpack.c.l.b16 %v263
    %v766 = vunpack.c.h.b16 %v263
    %v767 = vunpack.c.l.b16 %v264
    %v768 = vunpack.c.h.b16 %v264
    %v769 = vunpack.c.l.b16 %v265
    %v770 = vunpack.c.h.b16 %v265
    %v771 = vunpack.c.l.b16 %v266
    %v772 = vunpack.c.h.b16 %v266
    %v773 = vunpack.c.l.b16 %v267
    %v774 = vunpack.c.h.b16 %v267
    %v775 = vunpack.c.l.b16 %v268
    %v776 = vunpack.c.h.b16 %v268
    %v777 = vunpack.c.l.b16 %v269
    %v778 = vunpack.c.h.b16 %v269
    %v779 = vunpack.c.l.b16 %v270
    %v780 = vunpack.c.h.b16 %v270
    %v781 = vunpack.c.l.b16 %v271
    %v782 = vunpack.c.h.b16 %v271
    %v783 = vunpack.c.l.b16 %v272
    %v784 = vunpack.c.h.b16 %v272
    %v785 = vunpack.c.l.b16 %v273
    %v786 = vunpack.c.h.b16 %v273
    %v787 = vunpack.c.l.b16 %v274
    %v788 = vunpack.c.h.b16 %v274
    %v789 = vunpack.c.l.b16 %v275
    %v790 = vunpack.c.h.b16 %v275
    %v791 = vunpack.c.l.b16 %v276
    %v792 = vunpack.c.h.b16 %v276
    %v793 = vunpack.c.l.b16 %v277
    %v794 = vunpack.c.h.b16 %v277
    %v795 = vunpack.c.l.b16 %v278
    %v796 = vunpack.c.h.b16 %v278
    %v797 = vunpack.c.l.b16 %v279
    %v798 = vunpack.c.h.b16 %v279
    %v799 = vunpack.c.l.b16 %v280
    %v800 = vunpack.c.h.b16 %v280
    %v801 = vunpack.c.l.b16 %v281
    %v802 = vunpack.c.h.b16 %v281
    %v803 = vunpack.c.l.b16 %v282
    %v804 = vunpack.c.h.b16 %v282
    %v805 = vunpack.c.l.b16 %v283
    %v806 = vunpack.c.h.b16 %v283
    %v807 = vunpack.c.l.b16 %v284
    %v808 = vunpack.c.h.b16 %v284
    %v809 = vunpack.c.l.b16 %v285
    %v810 = vunpack.c.h.b16 %v285
    %v811 = vunpack.c.l.b16 %v286
    %v812 = vunpack.c.h.b16 %v286
    %v813 = vunpack.c.l.b16 %v287
    %v814 = vunpack.c.h.b16 %v287
    %v815 = vunpack.c.l.b16 %v288
    %v816 = vunpack.c.h.b16 %v288
    %v817 = vunpack.c.l.b16 %v289
    %v818 = vunpack.c.h.b16 %v289
    %v819 = vunpack.c.l.b16 %v290
    %v820 = vunpack.c.h.b16 %v290
    %v821 = vunpack.c.l.b16 %v291
    %v822 = vunpack.c.h.b16 %v291
    %v823 = vunpack.c.l.b16 %v292
    %v824 = vunpack.c.h.b16 %v292
    %v825 = vunpack.c.l.b16 %v293
    %v826 = vunpack.c.h.b16 %v293
    %v827 = vunpack.c.l.b16 %v294
    %v828 = vunpack.c.h.b16 %v294
    %v829 = vunpack.c.l.b16 %v295
    %v830 = vunpack.c.h.b16 %v295
    %v831 = vunpack.c.l.b16 %v296
    %v832 = vunpack.c.h.b16 %v296
    %v833 = vunpack.c.l.b16 %v297
    %v834 = vunpack.c.h.b16 %v297
    %v835 = vunpack.c.l.b16 %v298
    %v836 = vunpack.c.h.b16 %v298
    %v837 = vunpack.c.l.b16 %v299
    %v838 = vunpack.c.h.b16 %v299
    %v839 = vunpack.c.l.b16 %v300
    %v840 = vunpack.c.h.b16 %v300
    %v841 = vunpack.c.l.b16 %v301
    %v842 = vunpack.c.h.b16 %v301
    %v843 = vunpack.c.l.b16 %v302
    %v844 = vunpack.c.h.b16 %v302
    %v845 = vunpack.c.l.b16 %v303
    %v846 = vunpack.c.h.b16 %v303
    %v847 = vunpack.c.l.b16 %v304
    %v848 = vunpack.c.h.b16 %v304
    %v849 = vunpack.c.l.b16 %v305
    %v850 = vunpack.c.h.b16 %v305
    %v851 = vunpack.c.l.b16 %v306
    %v852 = vunpack.c.h.b16 %v306
    %v853 = vunpack.c.l.b16 %v307
    %v854 = vunpack.c.h.b16 %v307
    %v855 = vunpack.c.l.b16 %v308
    %v856 = vunpack.c.h.b16 %v308
    %v857 = vunpack.c.l.b16 %v309
    %v858 = vunpack.c.h.b16 %v309
    %v859 = vunpack.c.l.b16 %v310
    %v860 = vunpack.c.h.b16 %v310
    %v861 = vunpack.c.l.b16 %v311
    %v862 = vunpack.c.h.b16 %v311
    %v863 = vunpack.c.l.b16 %v312
    %v864 = vunpack.c.h.b16 %v312
    %v865 = vunpack.c.l.b16 %v313
    %v866 = vunpack.c.h.b16 %v313
    %v867 = vunpack.c.l.b16 %v314
    %v868 = vunpack.c.h.b16 %v314
    %v869 = vunpack.c.l.b16 %v315
    %v870 = vunpack.c.h.b16 %v315
    %v871 = vunpack.c.l.b16 %v316
    %v872 = vunpack.c.h.b16 %v316
    %v873 = vunpack.c.l.b16 %v317
    %v874 = vunpack.c.h.b16 %v317
    %v875 = vunpack.c.l.b16 %v318
    %v876 = vunpack.c.h.b16 %v318
    %v877 = vunpack.c.l.b16 %v319
    %v878 = vunpack.c.h.b16 %v319
    %v879 = vunpack.c.l.b16 %v320
    %v880 = vunpack.c.h.b16 %v320
    %v881 = vunpack.c.l.b16 %v321
    %v882 = vunpack.c.h.b16 %v321
    %v883 = vunpack.c.l.b16 %v322
    %v884 = vunpack.c.h.b16 %v322
    %v885 = vunpack.c.l.b16 %v323
    %v886 = vunpack.c.h.b16 %v323
    %v887 = vunpack.c.l.b16 %v324
    %v888 = vunpack.c.h.b16 %v324
    %v889 = vunpack.c.l.b16 %v325
    %v890 = vunpack.c.h.b16 %v325
    %v891 = vunpack.c.l.b16 %v326
    %v892 = vunpack.c.h.b16 %v326
    %v893 = vunpack.c.l.b16 %v327
    %v894 = vunpack.c.h.b16 %v327
    %v895 = vunpack.c.l.b16 %v328
    %v896 = vunpack.c.h.b16 %v328
    %v897 = vunpack.c.l.b16 %v329
    %v898 = vunpack.c.h.b16 %v329
    %v899 = vunpack.c.l.b16 %v330
    %v900 = vunpack.c.h.b16 %v330
    %v901 = vunpack.c.l.b16 %v331
    %v902 = vunpack.c.h.b16 %v331
    %v903 = vunpack.c.l.b16 %v332
    %v904 = vunpack.c.h.b16 %v332
    %v905 = vunpack.c.l.b16 %v333
    %v906 = vunpack.c.h.b16 %v333
    %v907 = vunpack.c.l.b16 %v334
    %v908 = vunpack.c.h.b16 %v334
    %v909 = vunpack.c.l.b16 %v335
    %v910 = vunpack.c.h.b16 %v335
    %v911 = vunpack.c.l.b16 %v336
    %v912 = vunpack.c.h.b16 %v336
    %v913 = vpack.c.b16 %v533, %v529
    %v914 = vpack.c.b16 %v534, %v530
    %v915 = vpack.c.b16 %v535, %v531
    %v916 = vpack.c.b16 %v536, %v532
    %v917 = vpack.c.b16 %v541, %v537
    %v918 = vpack.c.b16 %v542, %v538
    %v919 = vpack.c.b16 %v543, %v539
    %v920 = vpack.c.b16 %v544, %v540
    %v921 = vpack.c.b16 %v549, %v545
    %v922 = vpack.c.b16 %v550, %v546
    %v923 = vpack.c.b16 %v551, %v547
    %v924 = vpack.c.b16 %v552, %v548
    %v925 = vpack.c.b16 %v557, %v553
    %v926 = vpack.c.b16 %v558, %v554
    %v927 = vpack.c.b16 %v559, %v555
    %v928 = vpack.c.b16 %v560, %v556
    %v929 = vpack.c.b16 %v565, %v561
    %v930 = vpack.c.b16 %v566, %v562
    %v931 = vpack.c.b16 %v567, %v563
    %v932 = vpack.c.b16 %v568, %v564
    %v933 = vpack.c.b16 %v573, %v569
    %v934 = vpack.c.b16 %v574, %v570
    %v935 = vpack.c.b16 %v575, %v571
    %v936 = vpack.c.b16 %v576, %v572
    %v937 = vpack.c.b16 %v581, %v577
    %v938 = vpack.c.b16 %v582, %v578
    %v939 = vpack.c.b16 %v583, %v579
    %v940 = vpack.c.b16 %v584, %v580
    %v941 = vpack.c.b16 %v589, %v585
    %v942 = vpack.c.b16 %v590, %v586
    %v943 = vpack.c.b16 %v591, %v587
    %v944 = vpack.c.b16 %v592, %v588
    %v945 = vpack.c.b16 %v597, %v593
    %v946 = vpack.c.b16 %v598, %v594
    %v947 = vpack.c.b16 %v599, %v595
    %v948 = vpack.c.b16 %v600, %v596
    %v949 = vpack.c.b16 %v605, %v601
    %v950 = vpack.c.b16 %v606, %v602
    %v951 = vpack.c.b16 %v607, %v603
    %v952 = vpack.c.b16 %v608, %v604
    %v953 = vpack.c.b16 %v613, %v609
    %v954 = vpack.c.b16 %v614, %v610
    %v955 = vpack.c.b16 %v615, %v611
    %v956 = vpack.c.b16 %v616, %v612
    %v957 = vpack.c.b16 %v621, %v617
    %v958 = vpack.c.b16 %v622, %v618
    %v959 = vpack.c.b16 %v623, %v619
    %v960 = vpack.c.b16 %v624, %v620
    %v961 = vpack.c.b16 %v629, %v625
    %v962 = vpack.c.b16 %v630, %v626
    %v963 = vpack.c.b16 %v631, %v627
    %v964 = vpack.c.b16 %v632, %v628
    %v965 = vpack.c.b16 %v637, %v633
    %v966 = vpack.c.b16 %v638, %v634
    %v967 = vpack.c.b16 %v639, %v635
    %v968 = vpack.c.b16 %v640, %v636
    %v969 = vpack.c.b16 %v645, %v641
    %v970 = vpack.c.b16 %v646, %v642
    %v971 = vpack.c.b16 %v647, %v643
    %v972 = vpack.c.b16 %v648, %v644
    %v973 = vpack.c.b16 %v653, %v649
    %v974 = vpack.c.b16 %v654, %v650
    %v975 = vpack.c.b16 %v655, %v651
    %v976 = vpack.c.b16 %v656, %v652
    %v977 = vpack.c.b16 %v661, %v657
    %v978 = vpack.c.b16 %v662, %v658
    %v979 = vpack.c.b16 %v663, %v659
    %v980 = vpack.c.b16 %v664, %v660
    %v981 = vpack.c.b16 %v669, %v665
    %v982 = vpack.c.b16 %v670, %v666
    %v983 = vpack.c.b16 %v671, %v667
    %v984 = vpack.c.b16 %v672, %v668
    %v985 = vpack.c.b16 %v677, %v673
    %v986 = vpack.c.b16 %v678, %v674
    %v987 = vpack.c.b16 %v679, %v675
    %v988 = vpack.c.b16 %v680, %v676
    %v989 = vpack.c.b16 %v685, %v681
    %v990 = vpack.c.b16 %v686, %v682
    %v991 = vpack.c.b16 %v687, %v683
    %v992 = vpack.c.b16 %v688, %v684
    %v993 = vpack.c.b16 %v693, %v689
    %v994 = vpack.c.b16 %v694, %v690
    %v995 = vpack.c.b16 %v695, %v691
    %v996 = vpack.c.b16 %v696, %v692
    %v997 = vpack.c.b16 %v701, %v697
    %v998 = vpack.c.b16 %v702, %v698
    %v999 = vpack.c.b16 %v703, %v699
    %v1000 = vpack.c.b16 %v704, %v700
    %v1001 = vpack.c.b16 %v709, %v705
    %v1002 = vpack.c.b16 %v710, %v706
    %v1003 = vpack.c.b16 %v711, %v707
    %v1004 = vpack.c.b16 %v712, %v708
    %v1005 = vpack.c.b16 %v717, %v713
    %v1006 = vpack.c.b16 %v718, %v714
    %v1007 = vpack.c.b16 %v719, %v715
    %v1008 = vpack.c.b16 %v720, %v716
    %v1009 = vpack.c.b16 %v725, %v721
    %v1010 = vpack.c.b16 %v726, %v722
    %v1011 = vpack.c.b16 %v727, %v723
    %v1012 = vpack.c.b16 %v728, %v724
    %v1013 = vpack.c.b16 %v733, %v729
    %v1014 = vpack.c.b16 %v734, %v730
    %v1015 = vpack.c.b16 %v735, %v731
    %v1016 = vpack.c.b16 %v736, %v732
    %v1017 = vpack.c.b16 %v741, %v737
    %v1018 = vpack.c.b16 %v742, %v738
    %v1019 = vpack.c.b16 %v743, %v739
    %v1020 = vpack.c.b16 %v744, %v740
    %v1021 = vpack.c.b16 %v749, %v745
    %v1022 = vpack.c.b16 %v750, %v746
    %v1023 = vpack.c.b16 %v751, %v747
    %v1024 = vpack.c.b16 %v752, %v748
    %v1025 = vpack.c.b16 %v757, %v753
    %v1026 = vpack.c.b16 %v758, %v754
    %v1027 = vpack.c.b16 %v759, %v755
    %v1028 = vpack.c.b16 %v760, %v756
    %v1029 = vpack.c.b16 %v765, %v761
    %v1030 = vpack.c.b16 %v766, %v762
    %v1031 = vpack.c.b16 %v767, %v763
    %v1032 = vpack.c.b16 %v768, %v764
    %v1033 = vpack.c.b16 %v773, %v769
    %v1034 = vpack.c.b16 %v774, %v770
    %v1035 = vpack.c.b16 %v775, %v771
    %v1036 = vpack.c.b16 %v776, %v772
    %v1037 = vpack.c.b16 %v781, %v777
    %v1038 = vpack.c.b16 %v782, %v778
    %v1039 = vpack.c.b16 %v783, %v779
    %v1040 = vpack.c.b16 %v784, %v780
    %v1041 = vpack.c.b16 %v789, %v785
    %v1042 = vpack.c.b16 %v790, %v786
    %v1043 = vpack.c.b16 %v791, %v787
    %v1044 = vpack.c.b16 %v792, %v788
    %v1045 = vpack.c.b16 %v797, %v793
    %v1046 = vpack.c.b16 %v798, %v794
    %v1047 = vpack.c.b16 %v799, %v795
    %v1048 = vpack.c.b16 %v800, %v796
    %v1049 = vpack.c.b16 %v805, %v801
    %v1050 = vpack.c.b16 %v806, %v802
    %v1051 = vpack.c.b16 %v807, %v803
    %v1052 = vpack.c.b16 %v808, %v804
    %v1053 = vpack.c.b16 %v813, %v809
    %v1054 = vpack.c.b16 %v814, %v810
    %v1055 = vpack.c.b16 %v815, %v811
    %v1056 = vpack.c.b16 %v816, %v812
    %v1057 = vpack.c.b16 %v821, %v817
    %v1058 = vpack.c.b16 %v822, %v818
    %v1059 = vpack.c.b16 %v823, %v819
    %v1060 = vpack.c.b16 %v824, %v820
    %v1061 = vpack.c.b16 %v829, %v825
    %v1062 = vpack.c.b16 %v830, %v826
    %v1063 = vpack.c.b16 %v831, %v827
    %v1064 = vpack.c.b16 %v832, %v828
    %v1065 = vpack.c.b16 %v837, %v833
    %v1066 = vpack.c.b16 %v838, %v834
    %v1067 = vpack.c.b16 %v839, %v835
    %v1068 = vpack.c.b16 %v840, %v836
    %v1069 = vpack.c.b16 %v845, %v841
    %v1070 = vpack.c.b16 %v846, %v842
    %v1071 = vpack.c.b16 %v847, %v843
    %v1072 = vpack.c.b16 %v848, %v844
    %v1073 = vpack.c.b16 %v853, %v849
    %v1074 = vpack.c.b16 %v854, %v850
    %v1075 = vpack.c.b16 %v855, %v851
    %v1076 = vpack.c.b16 %v856, %v852
    %v1077 = vpack.c.b16 %v861, %v857
    %v1078 = vpack.c.b16 %v862, %v858
    %v1079 = vpack.c.b16 %v863, %v859
    %v1080 = vpack.c.b16 %v864, %v860
    %v1081 = vpack.c.b16 %v869, %v865
    %v1082 = vpack.c.b16 %v870, %v866
    %v1083 = vpack.c.b16 %v871, %v867
    %v1084 = vpack.c.b16 %v872, %v868
    %v1085 = vpack.c.b16 %v877, %v873
    %v1086 = vpack.c.b16 %v878, %v874
    %v1087 = vpack.c.b16 %v879, %v875
    %v1088 = vpack.c.b16 %v880, %v876
    %v1089 = vpack.c.b16 %v885, %v881
    %v1090 = vpack.c.b16 %v886, %v882
    %v1091 = vpack.c.b16 %v887, %v883
    %v1092 = vpack.c.b16 %v888, %v884
    %v1093 = vpack.c.b16 %v893, %v889
    %v1094 = vpack.c.b16 %v894, %v890
    %v1095 = vpack.c.b16 %v895, %v891
    %v1096 = vpack.c.b16 %v896, %v892
    %v1097 = vpack.c.b16 %v901, %v897
    %v1098 = vpack.c.b16 %v902, %v898
    %v1099 = vpack.c.b16 %v903, %v899
    %v1100 = vpack.c.b16 %v904, %v900
    %v1101 = vpack.c.b16 %v909, %v905
    %v1102 = vpack.c.b16 %v910, %v906
    %v1103 = vpack.c.b16 %v911, %v907
    %v1104 = vpack.c.b16 %v912, %v908
    %1297 = vmatpush.bf16.msra.mxu0 %v941
    %1298 = vmatpush.bf16.msra.mxu0 %v937
    %1299 = vmatpush.bf16.msra.mxu0 %v933
    %1300 = vmatpush.bf16.msra.mxu0 %v929
    %1301 = vmatpush.bf16.msra.mxu0 %v925
    %1302 = vmatpush.bf16.msra.mxu0 %v921
    %1303 = vmatpush.bf16.msra.mxu0 %v917
    %1304 = vmatpush.bf16.msra.mxu0 %v913
    %1305 = vmatmul.bf16.gmra.mxu0 %v133
    %v1306 = vpop.f32.mrf.mxu0
    %v1307 = vadd.f32 0.0, %v1306
    %v1308 = vpop.f32.mrf.mxu0
    %v1309 = vadd.f32 0.0, %v1308
    %1310 = vmatmul.bf16.gmra.mxu0 %v139
    %v1311 = vpop.f32.mrf.mxu0
    %v1312 = vadd.f32 0.0, %v1311
    %v1313 = vpop.f32.mrf.mxu0
    %v1314 = vadd.f32 0.0, %v1313
    %1315 = vdwg.mxu0
    %1316 = vmatpush.bf16.msra.mxu0 %v973
    %1317 = vmatpush.bf16.msra.mxu0 %v969
    %1318 = vmatpush.bf16.msra.mxu0 %v965
    %1319 = vmatpush.bf16.msra.mxu0 %v961
    %1320 = vmatpush.bf16.msra.mxu0 %v957
    %1321 = vmatpush.bf16.msra.mxu0 %v953
    %1322 = vmatpush.bf16.msra.mxu0 %v949
    %1323 = vmatpush.bf16.msra.mxu0 %v945
    %1324 = vmatmul.bf16.gmra.mxu0 %v134
    %v1325 = vpop.f32.mrf.mxu0
    %v1326 = vadd.f32 %v1307, %v1325
    %v1327 = vpop.f32.mrf.mxu0
    %v1328 = vadd.f32 %v1309, %v1327
    %1329 = vmatmul.bf16.gmra.mxu0 %v140
    %v1330 = vpop.f32.mrf.mxu0
    %v1331 = vadd.f32 %v1312, %v1330
    %v1332 = vpop.f32.mrf.mxu0
    %v1333 = vadd.f32 %v1314, %v1332
    %1334 = vdwg.mxu0
    %1335 = vmatpush.bf16.msra.mxu0 %v1005
    %1336 = vmatpush.bf16.msra.mxu0 %v1001
    %1337 = vmatpush.bf16.msra.mxu0 %v997
    %1338 = vmatpush.bf16.msra.mxu0 %v993
    %1339 = vmatpush.bf16.msra.mxu0 %v989
    %1340 = vmatpush.bf16.msra.mxu0 %v985
    %1341 = vmatpush.bf16.msra.mxu0 %v981
    %1342 = vmatpush.bf16.msra.mxu0 %v977
    %1343 = vmatmul.bf16.gmra.mxu0 %v135
    %v1344 = vpop.f32.mrf.mxu0
    %v1345 = vadd.f32 %v1326, %v1344
    %v1346 = vpop.f32.mrf.mxu0
    %v1347 = vadd.f32 %v1328, %v1346
    %1348 = vmatmul.bf16.gmra.mxu0 %v141
    %v1349 = vpop.f32.mrf.mxu0
    %v1350 = vadd.f32 %v1331, %v1349
    %v1351 = vpop.f32.mrf.mxu0
    %v1352 = vadd.f32 %v1333, %v1351
    %1353 = vdwg.mxu0
    %1354 = vmatpush.bf16.msra.mxu0 %v1037
    %1355 = vmatpush.bf16.msra.mxu0 %v1033
    %1356 = vmatpush.bf16.msra.mxu0 %v1029
    %1357 = vmatpush.bf16.msra.mxu0 %v1025
    %1358 = vmatpush.bf16.msra.mxu0 %v1021
    %1359 = vmatpush.bf16.msra.mxu0 %v1017
    %1360 = vmatpush.bf16.msra.mxu0 %v1013
    %1361 = vmatpush.bf16.msra.mxu0 %v1009
    %1362 = vmatmul.bf16.gmra.mxu0 %v136
    %v1363 = vpop.f32.mrf.mxu0
    %v1364 = vadd.f32 %v1345, %v1363
    %v1365 = vpop.f32.mrf.mxu0
    %v1366 = vadd.f32 %v1347, %v1365
    %1367 = vmatmul.bf16.gmra.mxu0 %v142
    %v1368 = vpop.f32.mrf.mxu0
    %v1369 = vadd.f32 %v1350, %v1368
    %v1370 = vpop.f32.mrf.mxu0
    %v1371 = vadd.f32 %v1352, %v1370
    %1372 = vdwg.mxu0
    %1373 = vmatpush.bf16.msra.mxu0 %v1069
    %1374 = vmatpush.bf16.msra.mxu0 %v1065
    %1375 = vmatpush.bf16.msra.mxu0 %v1061
    %1376 = vmatpush.bf16.msra.mxu0 %v1057
    %1377 = vmatpush.bf16.msra.mxu0 %v1053
    %1378 = vmatpush.bf16.msra.mxu0 %v1049
    %1379 = vmatpush.bf16.msra.mxu0 %v1045
    %1380 = vmatpush.bf16.msra.mxu0 %v1041
    %1381 = vmatmul.bf16.gmra.mxu0 %v137
    %v1382 = vpop.f32.mrf.mxu0
    %v1383 = vadd.f32 %v1364, %v1382
    %v1384 = vpop.f32.mrf.mxu0
    %v1385 = vadd.f32 %v1366, %v1384
    %1386 = vmatmul.bf16.gmra.mxu0 %v143
    %v1387 = vpop.f32.mrf.mxu0
    %v1388 = vadd.f32 %v1369, %v1387
    %v1389 = vpop.f32.mrf.mxu0
    %v1390 = vadd.f32 %v1371, %v1389
    %1391 = vdwg.mxu0
    %1392 = vmatpush.bf16.msra.mxu0 %v1101
    %1393 = vmatpush.bf16.msra.mxu0 %v1097
    %1394 = vmatpush.bf16.msra.mxu0 %v1093
    %1395 = vmatpush.bf16.msra.mxu0 %v1089
    %1396 = vmatpush.bf16.msra.mxu0 %v1085
    %1397 = vmatpush.bf16.msra.mxu0 %v1081
    %1398 = vmatpush.bf16.msra.mxu0 %v1077
    %1399 = vmatpush.bf16.msra.mxu0 %v1073
    %1400 = vmatmul.bf16.gmra.mxu0 %v138
    %v1401 = vpop.f32.mrf.mxu0
    %v1402 = vadd.f32 %v1383, %v1401
    %v1403 = vpop.f32.mrf.mxu0
    %v1404 = vadd.f32 %v1385, %v1403
    %1405 = vmatmul.bf16.gmra.mxu0 %v144
    %v1406 = vpop.f32.mrf.mxu0
    %v1407 = vadd.f32 %v1388, %v1406
    %v1408 = vpop.f32.mrf.mxu0
    %v1409 = vadd.f32 %v1390, %v1408
    %1410 = vdwg.mxu0
    %1411 = vmatpush.bf16.msra.mxu0 %v942
    %1412 = vmatpush.bf16.msra.mxu0 %v938
    %1413 = vmatpush.bf16.msra.mxu0 %v934
    %1414 = vmatpush.bf16.msra.mxu0 %v930
    %1415 = vmatpush.bf16.msra.mxu0 %v926
    %1416 = vmatpush.bf16.msra.mxu0 %v922
    %1417 = vmatpush.bf16.msra.mxu0 %v918
    %1418 = vmatpush.bf16.msra.mxu0 %v914
    %1419 = vmatmul.bf16.gmra.mxu0 %v133
    %v1420 = vpop.f32.mrf.mxu0
    %v1421 = vadd.f32 0.0, %v1420
    %v1422 = vpop.f32.mrf.mxu0
    %v1423 = vadd.f32 0.0, %v1422
    %1424 = vmatmul.bf16.gmra.mxu0 %v139
    %v1425 = vpop.f32.mrf.mxu0
    %v1426 = vadd.f32 0.0, %v1425
    %v1427 = vpop.f32.mrf.mxu0
    %v1428 = vadd.f32 0.0, %v1427
    %1429 = vdwg.mxu0
    %1430 = vmatpush.bf16.msra.mxu0 %v974
    %1431 = vmatpush.bf16.msra.mxu0 %v970
    %1432 = vmatpush.bf16.msra.mxu0 %v966
    %1433 = vmatpush.bf16.msra.mxu0 %v962
    %1434 = vmatpush.bf16.msra.mxu0 %v958
    %1435 = vmatpush.bf16.msra.mxu0 %v954
    %1436 = vmatpush.bf16.msra.mxu0 %v950
    %1437 = vmatpush.bf16.msra.mxu0 %v946
    %1438 = vmatmul.bf16.gmra.mxu0 %v134
    %v1439 = vpop.f32.mrf.mxu0
    %v1440 = vadd.f32 %v1421, %v1439
    %v1441 = vpop.f32.mrf.mxu0
    %v1442 = vadd.f32 %v1423, %v1441
    %1443 = vmatmul.bf16.gmra.mxu0 %v140
    %v1444 = vpop.f32.mrf.mxu0
    %v1445 = vadd.f32 %v1426, %v1444
    %v1446 = vpop.f32.mrf.mxu0
    %v1447 = vadd.f32 %v1428, %v1446
    %1448 = vdwg.mxu0
    %1449 = vmatpush.bf16.msra.mxu0 %v1006
    %1450 = vmatpush.bf16.msra.mxu0 %v1002
    %1451 = vmatpush.bf16.msra.mxu0 %v998
    %1452 = vmatpush.bf16.msra.mxu0 %v994
    %1453 = vmatpush.bf16.msra.mxu0 %v990
    %1454 = vmatpush.bf16.msra.mxu0 %v986
    %1455 = vmatpush.bf16.msra.mxu0 %v982
    %1456 = vmatpush.bf16.msra.mxu0 %v978
    %1457 = vmatmul.bf16.gmra.mxu0 %v135
    %v1458 = vpop.f32.mrf.mxu0
    %v1459 = vadd.f32 %v1440, %v1458
    %v1460 = vpop.f32.mrf.mxu0
    %v1461 = vadd.f32 %v1442, %v1460
    %1462 = vmatmul.bf16.gmra.mxu0 %v141
    %v1463 = vpop.f32.mrf.mxu0
    %v1464 = vadd.f32 %v1445, %v1463
    %v1465 = vpop.f32.mrf.mxu0
    %v1466 = vadd.f32 %v1447, %v1465
    %1467 = vdwg.mxu0
    %1468 = vmatpush.bf16.msra.mxu0 %v1038
    %1469 = vmatpush.bf16.msra.mxu0 %v1034
    %1470 = vmatpush.bf16.msra.mxu0 %v1030
    %1471 = vmatpush.bf16.msra.mxu0 %v1026
    %1472 = vmatpush.bf16.msra.mxu0 %v1022
    %1473 = vmatpush.bf16.msra.mxu0 %v1018
    %1474 = vmatpush.bf16.msra.mxu0 %v1014
    %1475 = vmatpush.bf16.msra.mxu0 %v1010
    %1476 = vmatmul.bf16.gmra.mxu0 %v136
    %v1477 = vpop.f32.mrf.mxu0
    %v1478 = vadd.f32 %v1459, %v1477
    %v1479 = vpop.f32.mrf.mxu0
    %v1480 = vadd.f32 %v1461, %v1479
    %1481 = vmatmul.bf16.gmra.mxu0 %v142
    %v1482 = vpop.f32.mrf.mxu0
    %v1483 = vadd.f32 %v1464, %v1482
    %v1484 = vpop.f32.mrf.mxu0
    %v1485 = vadd.f32 %v1466, %v1484
    %1486 = vdwg.mxu0
    %1487 = vmatpush.bf16.msra.mxu0 %v1070
    %1488 = vmatpush.bf16.msra.mxu0 %v1066
    %1489 = vmatpush.bf16.msra.mxu0 %v1062
    %1490 = vmatpush.bf16.msra.mxu0 %v1058
    %1491 = vmatpush.bf16.msra.mxu0 %v1054
    %1492 = vmatpush.bf16.msra.mxu0 %v1050
    %1493 = vmatpush.bf16.msra.mxu0 %v1046
    %1494 = vmatpush.bf16.msra.mxu0 %v1042
    %1495 = vmatmul.bf16.gmra.mxu0 %v137
    %v1496 = vpop.f32.mrf.mxu0
    %v1497 = vadd.f32 %v1478, %v1496
    %v1498 = vpop.f32.mrf.mxu0
    %v1499 = vadd.f32 %v1480, %v1498
    %1500 = vmatmul.bf16.gmra.mxu0 %v143
    %v1501 = vpop.f32.mrf.mxu0
    %v1502 = vadd.f32 %v1483, %v1501
    %v1503 = vpop.f32.mrf.mxu0
    %v1504 = vadd.f32 %v1485, %v1503
    %1505 = vdwg.mxu0
    %1506 = vmatpush.bf16.msra.mxu0 %v1102
    %1507 = vmatpush.bf16.msra.mxu0 %v1098
    %1508 = vmatpush.bf16.msra.mxu0 %v1094
    %1509 = vmatpush.bf16.msra.mxu0 %v1090
    %1510 = vmatpush.bf16.msra.mxu0 %v1086
    %1511 = vmatpush.bf16.msra.mxu0 %v1082
    %1512 = vmatpush.bf16.msra.mxu0 %v1078
    %1513 = vmatpush.bf16.msra.mxu0 %v1074
    %1514 = vmatmul.bf16.gmra.mxu0 %v138
    %v1515 = vpop.f32.mrf.mxu0
    %v1516 = vadd.f32 %v1497, %v1515
    %v1517 = vpop.f32.mrf.mxu0
    %v1518 = vadd.f32 %v1499, %v1517
    %1519 = vmatmul.bf16.gmra.mxu0 %v144
    %v1520 = vpop.f32.mrf.mxu0
    %v1521 = vadd.f32 %v1502, %v1520
    %v1522 = vpop.f32.mrf.mxu0
    %v1523 = vadd.f32 %v1504, %v1522
    %1524 = vdwg.mxu0
    %1525 = vmatpush.bf16.msra.mxu0 %v943
    %1526 = vmatpush.bf16.msra.mxu0 %v939
    %1527 = vmatpush.bf16.msra.mxu0 %v935
    %1528 = vmatpush.bf16.msra.mxu0 %v931
    %1529 = vmatpush.bf16.msra.mxu0 %v927
    %1530 = vmatpush.bf16.msra.mxu0 %v923
    %1531 = vmatpush.bf16.msra.mxu0 %v919
    %1532 = vmatpush.bf16.msra.mxu0 %v915
    %1533 = vmatmul.bf16.gmra.mxu0 %v133
    %v1534 = vpop.f32.mrf.mxu0
    %v1535 = vadd.f32 0.0, %v1534
    %v1536 = vpop.f32.mrf.mxu0
    %v1537 = vadd.f32 0.0, %v1536
    %1538 = vmatmul.bf16.gmra.mxu0 %v139
    %v1539 = vpop.f32.mrf.mxu0
    %v1540 = vadd.f32 0.0, %v1539
    %v1541 = vpop.f32.mrf.mxu0
    %v1542 = vadd.f32 0.0, %v1541
    %1543 = vdwg.mxu0
    %1544 = vmatpush.bf16.msra.mxu0 %v975
    %1545 = vmatpush.bf16.msra.mxu0 %v971
    %1546 = vmatpush.bf16.msra.mxu0 %v967
    %1547 = vmatpush.bf16.msra.mxu0 %v963
    %1548 = vmatpush.bf16.msra.mxu0 %v959
    %1549 = vmatpush.bf16.msra.mxu0 %v955
    %1550 = vmatpush.bf16.msra.mxu0 %v951
    %1551 = vmatpush.bf16.msra.mxu0 %v947
    %1552 = vmatmul.bf16.gmra.mxu0 %v134
    %v1553 = vpop.f32.mrf.mxu0
    %v1554 = vadd.f32 %v1535, %v1553
    %v1555 = vpop.f32.mrf.mxu0
    %v1556 = vadd.f32 %v1537, %v1555
    %1557 = vmatmul.bf16.gmra.mxu0 %v140
    %v1558 = vpop.f32.mrf.mxu0
    %v1559 = vadd.f32 %v1540, %v1558
    %v1560 = vpop.f32.mrf.mxu0
    %v1561 = vadd.f32 %v1542, %v1560
    %1562 = vdwg.mxu0
    %1563 = vmatpush.bf16.msra.mxu0 %v1007
    %1564 = vmatpush.bf16.msra.mxu0 %v1003
    %1565 = vmatpush.bf16.msra.mxu0 %v999
    %1566 = vmatpush.bf16.msra.mxu0 %v995
    %1567 = vmatpush.bf16.msra.mxu0 %v991
    %1568 = vmatpush.bf16.msra.mxu0 %v987
    %1569 = vmatpush.bf16.msra.mxu0 %v983
    %1570 = vmatpush.bf16.msra.mxu0 %v979
    %1571 = vmatmul.bf16.gmra.mxu0 %v135
    %v1572 = vpop.f32.mrf.mxu0
    %v1573 = vadd.f32 %v1554, %v1572
    %v1574 = vpop.f32.mrf.mxu0
    %v1575 = vadd.f32 %v1556, %v1574
    %1576 = vmatmul.bf16.gmra.mxu0 %v141
    %v1577 = vpop.f32.mrf.mxu0
    %v1578 = vadd.f32 %v1559, %v1577
    %v1579 = vpop.f32.mrf.mxu0
    %v1580 = vadd.f32 %v1561, %v1579
    %1581 = vdwg.mxu0
    %1582 = vmatpush.bf16.msra.mxu0 %v1039
    %1583 = vmatpush.bf16.msra.mxu0 %v1035
    %1584 = vmatpush.bf16.msra.mxu0 %v1031
    %1585 = vmatpush.bf16.msra.mxu0 %v1027
    %1586 = vmatpush.bf16.msra.mxu0 %v1023
    %1587 = vmatpush.bf16.msra.mxu0 %v1019
    %1588 = vmatpush.bf16.msra.mxu0 %v1015
    %1589 = vmatpush.bf16.msra.mxu0 %v1011
    %1590 = vmatmul.bf16.gmra.mxu0 %v136
    %v1591 = vpop.f32.mrf.mxu0
    %v1592 = vadd.f32 %v1573, %v1591
    %v1593 = vpop.f32.mrf.mxu0
    %v1594 = vadd.f32 %v1575, %v1593
    %1595 = vmatmul.bf16.gmra.mxu0 %v142
    %v1596 = vpop.f32.mrf.mxu0
    %v1597 = vadd.f32 %v1578, %v1596
    %v1598 = vpop.f32.mrf.mxu0
    %v1599 = vadd.f32 %v1580, %v1598
    %1600 = vdwg.mxu0
    %1601 = vmatpush.bf16.msra.mxu0 %v1071
    %1602 = vmatpush.bf16.msra.mxu0 %v1067
    %1603 = vmatpush.bf16.msra.mxu0 %v1063
    %1604 = vmatpush.bf16.msra.mxu0 %v1059
    %1605 = vmatpush.bf16.msra.mxu0 %v1055
    %1606 = vmatpush.bf16.msra.mxu0 %v1051
    %1607 = vmatpush.bf16.msra.mxu0 %v1047
    %1608 = vmatpush.bf16.msra.mxu0 %v1043
    %1609 = vmatmul.bf16.gmra.mxu0 %v137
    %v1610 = vpop.f32.mrf.mxu0
    %v1611 = vadd.f32 %v1592, %v1610
    %v1612 = vpop.f32.mrf.mxu0
    %v1613 = vadd.f32 %v1594, %v1612
    %1614 = vmatmul.bf16.gmra.mxu0 %v143
    %v1615 = vpop.f32.mrf.mxu0
    %v1616 = vadd.f32 %v1597, %v1615
    %v1617 = vpop.f32.mrf.mxu0
    %v1618 = vadd.f32 %v1599, %v1617
    %1619 = vdwg.mxu0
    %1620 = vmatpush.bf16.msra.mxu0 %v1103
    %1621 = vmatpush.bf16.msra.mxu0 %v1099
    %1622 = vmatpush.bf16.msra.mxu0 %v1095
    %1623 = vmatpush.bf16.msra.mxu0 %v1091
    %1624 = vmatpush.bf16.msra.mxu0 %v1087
    %1625 = vmatpush.bf16.msra.mxu0 %v1083
    %1626 = vmatpush.bf16.msra.mxu0 %v1079
    %1627 = vmatpush.bf16.msra.mxu0 %v1075
    %1628 = vmatmul.bf16.gmra.mxu0 %v138
    %v1629 = vpop.f32.mrf.mxu0
    %v1630 = vadd.f32 %v1611, %v1629
    %v1631 = vpop.f32.mrf.mxu0
    %v1632 = vadd.f32 %v1613, %v1631
    %1633 = vmatmul.bf16.gmra.mxu0 %v144
    %v1634 = vpop.f32.mrf.mxu0
    %v1635 = vadd.f32 %v1616, %v1634
    %v1636 = vpop.f32.mrf.mxu0
    %v1637 = vadd.f32 %v1618, %v1636
    %1638 = vdwg.mxu0
    %1639 = vmatpush.bf16.msra.mxu0 %v944
    %1640 = vmatpush.bf16.msra.mxu0 %v940
    %1641 = vmatpush.bf16.msra.mxu0 %v936
    %1642 = vmatpush.bf16.msra.mxu0 %v932
    %1643 = vmatpush.bf16.msra.mxu0 %v928
    %1644 = vmatpush.bf16.msra.mxu0 %v924
    %1645 = vmatpush.bf16.msra.mxu0 %v920
    %1646 = vmatpush.bf16.msra.mxu0 %v916
    %1647 = vmatmul.bf16.gmra.mxu0 %v133
    %v1648 = vpop.f32.mrf.mxu0
    %v1649 = vadd.f32 0.0, %v1648
    %v1650 = vpop.f32.mrf.mxu0
    %v1651 = vadd.f32 0.0, %v1650
    %1652 = vmatmul.bf16.gmra.mxu0 %v139
    %v1653 = vpop.f32.mrf.mxu0
    %v1654 = vadd.f32 0.0, %v1653
    %v1655 = vpop.f32.mrf.mxu0
    %v1656 = vadd.f32 0.0, %v1655
    %1657 = vdwg.mxu0
    %1658 = vmatpush.bf16.msra.mxu0 %v976
    %1659 = vmatpush.bf16.msra.mxu0 %v972
    %1660 = vmatpush.bf16.msra.mxu0 %v968
    %1661 = vmatpush.bf16.msra.mxu0 %v964
    %1662 = vmatpush.bf16.msra.mxu0 %v960
    %1663 = vmatpush.bf16.msra.mxu0 %v956
    %1664 = vmatpush.bf16.msra.mxu0 %v952
    %1665 = vmatpush.bf16.msra.mxu0 %v948
    %1666 = vmatmul.bf16.gmra.mxu0 %v134
    %v1667 = vpop.f32.mrf.mxu0
    %v1668 = vadd.f32 %v1649, %v1667
    %v1669 = vpop.f32.mrf.mxu0
    %v1670 = vadd.f32 %v1651, %v1669
    %1671 = vmatmul.bf16.gmra.mxu0 %v140
    %v1672 = vpop.f32.mrf.mxu0
    %v1673 = vadd.f32 %v1654, %v1672
    %v1674 = vpop.f32.mrf.mxu0
    %v1675 = vadd.f32 %v1656, %v1674
    %1676 = vdwg.mxu0
    %1677 = vmatpush.bf16.msra.mxu0 %v1008
    %1678 = vmatpush.bf16.msra.mxu0 %v1004
    %1679 = vmatpush.bf16.msra.mxu0 %v1000
    %1680 = vmatpush.bf16.msra.mxu0 %v996
    %1681 = vmatpush.bf16.msra.mxu0 %v992
    %1682 = vmatpush.bf16.msra.mxu0 %v988
    %1683 = vmatpush.bf16.msra.mxu0 %v984
    %1684 = vmatpush.bf16.msra.mxu0 %v980
    %1685 = vmatmul.bf16.gmra.mxu0 %v135
    %v1686 = vpop.f32.mrf.mxu0
    %v1687 = vadd.f32 %v1668, %v1686
    %v1688 = vpop.f32.mrf.mxu0
    %v1689 = vadd.f32 %v1670, %v1688
    %1690 = vmatmul.bf16.gmra.mxu0 %v141
    %v1691 = vpop.f32.mrf.mxu0
    %v1692 = vadd.f32 %v1673, %v1691
    %v1693 = vpop.f32.mrf.mxu0
    %v1694 = vadd.f32 %v1675, %v1693
    %1695 = vdwg.mxu0
    %1696 = vmatpush.bf16.msra.mxu0 %v1040
    %1697 = vmatpush.bf16.msra.mxu0 %v1036
    %1698 = vmatpush.bf16.msra.mxu0 %v1032
    %1699 = vmatpush.bf16.msra.mxu0 %v1028
    %1700 = vmatpush.bf16.msra.mxu0 %v1024
    %1701 = vmatpush.bf16.msra.mxu0 %v1020
    %1702 = vmatpush.bf16.msra.mxu0 %v1016
    %1703 = vmatpush.bf16.msra.mxu0 %v1012
    %1704 = vmatmul.bf16.gmra.mxu0 %v136
    %v1705 = vpop.f32.mrf.mxu0
    %v1706 = vadd.f32 %v1687, %v1705
    %v1707 = vpop.f32.mrf.mxu0
    %v1708 = vadd.f32 %v1689, %v1707
    %1709 = vmatmul.bf16.gmra.mxu0 %v142
    %v1710 = vpop.f32.mrf.mxu0
    %v1711 = vadd.f32 %v1692, %v1710
    %v1712 = vpop.f32.mrf.mxu0
    %v1713 = vadd.f32 %v1694, %v1712
    %1714 = vdwg.mxu0
    %1715 = vmatpush.bf16.msra.mxu0 %v1072
    %1716 = vmatpush.bf16.msra.mxu0 %v1068
    %1717 = vmatpush.bf16.msra.mxu0 %v1064
    %1718 = vmatpush.bf16.msra.mxu0 %v1060
    %1719 = vmatpush.bf16.msra.mxu0 %v1056
    %1720 = vmatpush.bf16.msra.mxu0 %v1052
    %1721 = vmatpush.bf16.msra.mxu0 %v1048
    %1722 = vmatpush.bf16.msra.mxu0 %v1044
    %1723 = vmatmul.bf16.gmra.mxu0 %v137
    %v1724 = vpop.f32.mrf.mxu0
    %v1725 = vadd.f32 %v1706, %v1724
    %v1726 = vpop.f32.mrf.mxu0
    %v1727 = vadd.f32 %v1708, %v1726
    %1728 = vmatmul.bf16.gmra.mxu0 %v143
    %v1729 = vpop.f32.mrf.mxu0
    %v1730 = vadd.f32 %v1711, %v1729
    %v1731 = vpop.f32.mrf.mxu0
    %v1732 = vadd.f32 %v1713, %v1731
    %1733 = vdwg.mxu0
    %1734 = vmatpush.bf16.msra.mxu0 %v1104
    %1735 = vmatpush.bf16.msra.mxu0 %v1100
    %1736 = vmatpush.bf16.msra.mxu0 %v1096
    %1737 = vmatpush.bf16.msra.mxu0 %v1092
    %1738 = vmatpush.bf16.msra.mxu0 %v1088
    %1739 = vmatpush.bf16.msra.mxu0 %v1084
    %1740 = vmatpush.bf16.msra.mxu0 %v1080
    %1741 = vmatpush.bf16.msra.mxu0 %v1076
    %1742 = vmatmul.bf16.gmra.mxu0 %v138
    %v1743 = vpop.f32.mrf.mxu0
    %v1744 = vadd.f32 %v1725, %v1743
    %v1745 = vpop.f32.mrf.mxu0
    %v1746 = vadd.f32 %v1727, %v1745
    %1747 = vmatmul.bf16.gmra.mxu0 %v144
    %v1748 = vpop.f32.mrf.mxu0
    %v1749 = vadd.f32 %v1730, %v1748
    %v1750 = vpop.f32.mrf.mxu0
    %v1751 = vadd.f32 %v1732, %v1750
    %1752 = vdwg.mxu0
    %v1753 = vmul.f32 %v1402, %v1402
    %v1754 = vmul.f32 %v1516, %v1516
    %v1755 = vmul.f32 %v1630, %v1630
    %v1756 = vmul.f32 %v1744, %v1744
    %v1757 = vmul.f32 %v1404, %v1404
    %v1758 = vmul.f32 %v1518, %v1518
    %v1759 = vmul.f32 %v1632, %v1632
    %v1760 = vmul.f32 %v1746, %v1746
    %v1761 = vmul.f32 %v1407, %v1407
    %v1762 = vmul.f32 %v1521, %v1521
    %v1763 = vmul.f32 %v1635, %v1635
    %v1764 = vmul.f32 %v1749, %v1749
    %v1765 = vmul.f32 %v1409, %v1409
    %v1766 = vmul.f32 %v1523, %v1523
    %v1767 = vmul.f32 %v1637, %v1637
    %v1768 = vmul.f32 %v1751, %v1751
    %v1769 = vadd.f32 %v1753, %v1754
    %v1770 = vadd.f32 %v1769, %v1755
    %v1771 = vadd.f32 %v1770, %v1756
    %1772 = vadd.xlane.f32.xlu0 %v1771
    %v1773 = vpop.xlane.xlu0 %1772
    %v1774 = vadd.f32 %v1757, %v1758
    %v1775 = vadd.f32 %v1774, %v1759
    %v1776 = vadd.f32 %v1775, %v1760
    %1777 = vadd.xlane.f32.xlu0 %v1776
    %v1778 = vpop.xlane.xlu0 %1777
    %v1779 = vadd.f32 %v1761, %v1762
    %v1780 = vadd.f32 %v1779, %v1763
    %v1781 = vadd.f32 %v1780, %v1764
    %1782 = vadd.xlane.f32.xlu0 %v1781
    %v1783 = vpop.xlane.xlu0 %1782
    %v1784 = vadd.f32 %v1765, %v1766
    %v1785 = vadd.f32 %v1784, %v1767
    %v1786 = vadd.f32 %v1785, %v1768
    %1787 = vadd.xlane.f32.xlu0 %v1786
    %v1788 = vpop.xlane.xlu0 %1787
    %v1789 = vmax.f32 %v1773, 1e-24
    %v1790 = vmax.f32 %v1778, 1e-24
    %v1791 = vmax.f32 %v1783, 1e-24
    %v1792 = vmax.f32 %v1788, 1e-24
    %v1793 = vrsqrt.pop %v1789
    %v1794 = vmul.f32 %v1793, %v1789
    %v1795 = vmul.f32 %v1794, %v1793
    %v1796 = vmul.f32 0.5, %v1795
    %v1797 = vsub.f32 1.5, %v1796
    %v1798 = vmul.f32 %v1793, %v1797
    %vm1799 = vweird.f32 %v1789
    %vm1800 = vweird.f32 %v1793
    %vm1801 = vmor %vm1799, %vm1800
    %v1802 = vsel %vm1801, %v1793, %v1798
    %v1803 = vrsqrt.pop %v1790
    %v1804 = vmul.f32 %v1803, %v1790
    %v1805 = vmul.f32 %v1804, %v1803
    %v1806 = vmul.f32 0.5, %v1805
    %v1807 = vsub.f32 1.5, %v1806
    %v1808 = vmul.f32 %v1803, %v1807
    %vm1809 = vweird.f32 %v1790
    %vm1810 = vweird.f32 %v1803
    %vm1811 = vmor %vm1809, %vm1810
    %v1812 = vsel %vm1811, %v1803, %v1808
    %v1813 = vrsqrt.pop %v1791
    %v1814 = vmul.f32 %v1813, %v1791
    %v1815 = vmul.f32 %v1814, %v1813
    %v1816 = vmul.f32 0.5, %v1815
    %v1817 = vsub.f32 1.5, %v1816
    %v1818 = vmul.f32 %v1813, %v1817
    %vm1819 = vweird.f32 %v1791
    %vm1820 = vweird.f32 %v1813
    %vm1821 = vmor %vm1819, %vm1820
    %v1822 = vsel %vm1821, %v1813, %v1818
    %v1823 = vrsqrt.pop %v1792
    %v1824 = vmul.f32 %v1823, %v1792
    %v1825 = vmul.f32 %v1824, %v1823
    %v1826 = vmul.f32 0.5, %v1825
    %v1827 = vsub.f32 1.5, %v1826
    %v1828 = vmul.f32 %v1823, %v1827
    %vm1829 = vweird.f32 %v1792
    %vm1830 = vweird.f32 %v1823
    %vm1831 = vmor %vm1829, %vm1830
    %v1832 = vsel %vm1831, %v1823, %v1828
    %v1833 = vmul.f32 %v1402, %v1802
    %v1834 = vmul.f32 %v1516, %v1802
    %v1835 = vmul.f32 %v1630, %v1802
    %v1836 = vmul.f32 %v1744, %v1802
    %v1837 = vmul.f32 %v1404, %v1812
    %v1838 = vmul.f32 %v1518, %v1812
    %v1839 = vmul.f32 %v1632, %v1812
    %v1840 = vmul.f32 %v1746, %v1812
    %v1841 = vmul.f32 %v1407, %v1822
    %v1842 = vmul.f32 %v1521, %v1822
    %v1843 = vmul.f32 %v1635, %v1822
    %v1844 = vmul.f32 %v1749, %v1822
    %v1845 = vmul.f32 %v1409, %v1832
    %v1846 = vmul.f32 %v1523, %v1832
    %v1847 = vmul.f32 %v1637, %v1832
    %v1848 = vmul.f32 %v1751, %v1832
    %v1849 = vpack.c.bf16 %v1837, %v1833
    %v1850 = vpack.c.bf16 %v1838, %v1834
    %v1851 = vpack.c.bf16 %v1839, %v1835
    %v1852 = vpack.c.bf16 %v1840, %v1836
    %v1853 = vpack.c.bf16 %v1845, %v1841
    %v1854 = vpack.c.bf16 %v1846, %v1842
    %v1855 = vpack.c.bf16 %v1847, %v1843
    %v1856 = vpack.c.bf16 %v1848, %v1844
    %v1857 = vld [vmem:[#allocation7] sm:$0xf]
    %v1858 = vld [vmem:[#allocation7 + $0x4] sm:$0xf]
    %v1859 = vld [vmem:[#allocation7 + $0x8] sm:$0xf]
    %v1860 = vld [vmem:[#allocation7 + $0xc] sm:$0xf]
    %v1861 = vld [vmem:[#allocation7 + $0x10] sm:$0xf]
    %v1862 = vld [vmem:[#allocation7 + $0x14] sm:$0xf]
    %v1863 = vld [vmem:[#allocation7 + $0x18] sm:$0xf]
    %v1864 = vld [vmem:[#allocation7 + $0x1c] sm:$0xf]
    %v1865 = vld [vmem:[#allocation7 + $0x20] sm:$0xf]
    %v1866 = vld [vmem:[#allocation7 + $0x24] sm:$0xf]
    %v1867 = vld [vmem:[#allocation7 + $0x28] sm:$0xf]
    %v1868 = vld [vmem:[#allocation7 + $0x2c] sm:$0xf]
    %v1869 = vld [vmem:[#allocation7 + $0x30] sm:$0xf]
    %v1870 = vld [vmem:[#allocation7 + $0x34] sm:$0xf]
    %v1871 = vld [vmem:[#allocation7 + $0x38] sm:$0xf]
    %v1872 = vld [vmem:[#allocation7 + $0x3c] sm:$0xf]
    %v1873 = vld [vmem:[#allocation7 + $0x40] sm:$0xf]
    %v1874 = vld [vmem:[#allocation7 + $0x44] sm:$0xf]
    %v1875 = vld [vmem:[#allocation7 + $0x48] sm:$0xf]
    %v1876 = vld [vmem:[#allocation7 + $0x4c] sm:$0xf]
    %v1877 = vld [vmem:[#allocation7 + $0x50] sm:$0xf]
    %v1878 = vld [vmem:[#allocation7 + $0x54] sm:$0xf]
    %v1879 = vld [vmem:[#allocation7 + $0x58] sm:$0xf]
    %v1880 = vld [vmem:[#allocation7 + $0x5c] sm:$0xf]
    %v1881 = vld [vmem:[#allocation7 + $0x60] sm:$0xf]
    %v1882 = vld [vmem:[#allocation7 + $0x64] sm:$0xf]
    %v1883 = vld [vmem:[#allocation7 + $0x68] sm:$0xf]
    %v1884 = vld [vmem:[#allocation7 + $0x6c] sm:$0xf]
    %v1885 = vld [vmem:[#allocation7 + $0x70] sm:$0xf]
    %v1886 = vld [vmem:[#allocation7 + $0x74] sm:$0xf]
    %v1887 = vld [vmem:[#allocation7 + $0x78] sm:$0xf]
    %v1888 = vld [vmem:[#allocation7 + $0x7c] sm:$0xf]
    %v1889 = vld [vmem:[#allocation7 + $0x80] sm:$0xf]
    %v1890 = vld [vmem:[#allocation7 + $0x84] sm:$0xf]
    %v1891 = vld [vmem:[#allocation7 + $0x88] sm:$0xf]
    %v1892 = vld [vmem:[#allocation7 + $0x8c] sm:$0xf]
    %v1893 = vld [vmem:[#allocation7 + $0x90] sm:$0xf]
    %v1894 = vld [vmem:[#allocation7 + $0x94] sm:$0xf]
    %v1895 = vld [vmem:[#allocation7 + $0x98] sm:$0xf]
    %v1896 = vld [vmem:[#allocation7 + $0x9c] sm:$0xf]
    %v1897 = vld [vmem:[#allocation7 + $0xa0] sm:$0xf]
    %v1898 = vld [vmem:[#allocation7 + $0xa4] sm:$0xf]
    %v1899 = vld [vmem:[#allocation7 + $0xa8] sm:$0xf]
    %v1900 = vld [vmem:[#allocation7 + $0xac] sm:$0xf]
    %v1901 = vld [vmem:[#allocation7 + $0xb0] sm:$0xf]
    %v1902 = vld [vmem:[#allocation7 + $0xb4] sm:$0xf]
    %v1903 = vld [vmem:[#allocation7 + $0xb8] sm:$0xf]
    %v1904 = vld [vmem:[#allocation7 + $0xbc] sm:$0xf]
    %v1905 = vld [vmem:[#allocation7 + $0xc0] sm:$0xf]
    %v1906 = vld [vmem:[#allocation7 + $0xc4] sm:$0xf]
    %v1907 = vld [vmem:[#allocation7 + $0xc8] sm:$0xf]
    %v1908 = vld [vmem:[#allocation7 + $0xcc] sm:$0xf]
    %v1909 = vld [vmem:[#allocation7 + $0xd0] sm:$0xf]
    %v1910 = vld [vmem:[#allocation7 + $0xd4] sm:$0xf]
    %v1911 = vld [vmem:[#allocation7 + $0xd8] sm:$0xf]
    %v1912 = vld [vmem:[#allocation7 + $0xdc] sm:$0xf]
    %v1913 = vld [vmem:[#allocation7 + $0xe0] sm:$0xf]
    %v1914 = vld [vmem:[#allocation7 + $0xe4] sm:$0xf]
    %v1915 = vld [vmem:[#allocation7 + $0xe8] sm:$0xf]
    %v1916 = vld [vmem:[#allocation7 + $0xec] sm:$0xf]
    %v1917 = vld [vmem:[#allocation7 + $0xf0] sm:$0xf]
    %v1918 = vld [vmem:[#allocation7 + $0xf4] sm:$0xf]
    %v1919 = vld [vmem:[#allocation7 + $0xf8] sm:$0xf]
    %v1920 = vld [vmem:[#allocation7 + $0xfc] sm:$0xf]
    %v1985 = vunpack.c.l.b16 %v1857
    %v1986 = vunpack.c.l.b16 %v1858
    %v1987 = vunpack.c.l.b16 %v1859
    %v1988 = vunpack.c.l.b16 %v1860
    %v1989 = vunpack.c.l.b16 %v1861
    %v1990 = vunpack.c.l.b16 %v1862
    %v1991 = vunpack.c.l.b16 %v1863
    %v1992 = vunpack.c.l.b16 %v1864
    %v1993 = vunpack.c.l.b16 %v1865
    %v1994 = vunpack.c.l.b16 %v1866
    %v1995 = vunpack.c.l.b16 %v1867
    %v1996 = vunpack.c.l.b16 %v1868
    %v1997 = vunpack.c.l.b16 %v1869
    %v1998 = vunpack.c.l.b16 %v1870
    %v1999 = vunpack.c.l.b16 %v1871
    %v2000 = vunpack.c.l.b16 %v1872
    %v2001 = vunpack.c.l.b16 %v1873
    %v2002 = vunpack.c.l.b16 %v1874
    %v2003 = vunpack.c.l.b16 %v1875
    %v2004 = vunpack.c.l.b16 %v1876
    %v2005 = vunpack.c.l.b16 %v1877
    %v2006 = vunpack.c.l.b16 %v1878
    %v2007 = vunpack.c.l.b16 %v1879
    %v2008 = vunpack.c.l.b16 %v1880
    %v2009 = vunpack.c.l.b16 %v1881
    %v2010 = vunpack.c.l.b16 %v1882
    %v2011 = vunpack.c.l.b16 %v1883
    %v2012 = vunpack.c.l.b16 %v1884
    %v2013 = vunpack.c.l.b16 %v1885
    %v2014 = vunpack.c.l.b16 %v1886
    %v2015 = vunpack.c.l.b16 %v1887
    %v2016 = vunpack.c.l.b16 %v1888
    %v2017 = vunpack.c.l.b16 %v1889
    %v2018 = vunpack.c.l.b16 %v1890
    %v2019 = vunpack.c.l.b16 %v1891
    %v2020 = vunpack.c.l.b16 %v1892
    %v2021 = vunpack.c.l.b16 %v1893
    %v2022 = vunpack.c.l.b16 %v1894
    %v2023 = vunpack.c.l.b16 %v1895
    %v2024 = vunpack.c.l.b16 %v1896
    %v2025 = vunpack.c.l.b16 %v1897
    %v2026 = vunpack.c.l.b16 %v1898
    %v2027 = vunpack.c.l.b16 %v1899
    %v2028 = vunpack.c.l.b16 %v1900
    %v2029 = vunpack.c.l.b16 %v1901
    %v2030 = vunpack.c.l.b16 %v1902
    %v2031 = vunpack.c.l.b16 %v1903
    %v2032 = vunpack.c.l.b16 %v1904
    %v2033 = vunpack.c.l.b16 %v1905
    %v2034 = vunpack.c.l.b16 %v1906
    %v2035 = vunpack.c.l.b16 %v1907
    %v2036 = vunpack.c.l.b16 %v1908
    %v2037 = vunpack.c.l.b16 %v1909
    %v2038 = vunpack.c.l.b16 %v1910
    %v2039 = vunpack.c.l.b16 %v1911
    %v2040 = vunpack.c.l.b16 %v1912
    %v2041 = vunpack.c.l.b16 %v1913
    %v2042 = vunpack.c.l.b16 %v1914
    %v2043 = vunpack.c.l.b16 %v1915
    %v2044 = vunpack.c.l.b16 %v1916
    %v2045 = vunpack.c.l.b16 %v1917
    %v2046 = vunpack.c.l.b16 %v1918
    %v2047 = vunpack.c.l.b16 %v1919
    %v2048 = vunpack.c.l.b16 %v1920
    %v2049 = vpack.c.b16 %v1986, %v1985
    %v2050 = vpack.c.b16 %v1988, %v1987
    %v2051 = vpack.c.b16 %v1990, %v1989
    %v2052 = vpack.c.b16 %v1992, %v1991
    %v2053 = vpack.c.b16 %v1994, %v1993
    %v2054 = vpack.c.b16 %v1996, %v1995
    %v2055 = vpack.c.b16 %v1998, %v1997
    %v2056 = vpack.c.b16 %v2000, %v1999
    %v2057 = vpack.c.b16 %v2002, %v2001
    %v2058 = vpack.c.b16 %v2004, %v2003
    %v2059 = vpack.c.b16 %v2006, %v2005
    %v2060 = vpack.c.b16 %v2008, %v2007
    %v2061 = vpack.c.b16 %v2010, %v2009
    %v2062 = vpack.c.b16 %v2012, %v2011
    %v2063 = vpack.c.b16 %v2014, %v2013
    %v2064 = vpack.c.b16 %v2016, %v2015
    %v2065 = vpack.c.b16 %v2018, %v2017
    %v2066 = vpack.c.b16 %v2020, %v2019
    %v2067 = vpack.c.b16 %v2022, %v2021
    %v2068 = vpack.c.b16 %v2024, %v2023
    %v2069 = vpack.c.b16 %v2026, %v2025
    %v2070 = vpack.c.b16 %v2028, %v2027
    %v2071 = vpack.c.b16 %v2030, %v2029
    %v2072 = vpack.c.b16 %v2032, %v2031
    %v2073 = vpack.c.b16 %v2034, %v2033
    %v2074 = vpack.c.b16 %v2036, %v2035
    %v2075 = vpack.c.b16 %v2038, %v2037
    %v2076 = vpack.c.b16 %v2040, %v2039
    %v2077 = vpack.c.b16 %v2042, %v2041
    %v2078 = vpack.c.b16 %v2044, %v2043
    %v2079 = vpack.c.b16 %v2046, %v2045
    %v2080 = vpack.c.b16 %v2048, %v2047
    %2113 = vmatpush.bf16.msra.mxu0 %v2056
    %2114 = vmatpush.bf16.msra.mxu0 %v2055
    %2115 = vmatpush.bf16.msra.mxu0 %v2054
    %2116 = vmatpush.bf16.msra.mxu0 %v2053
    %2117 = vmatpush.bf16.msra.mxu0 %v2052
    %2118 = vmatpush.bf16.msra.mxu0 %v2051
    %2119 = vmatpush.bf16.msra.mxu0 %v2050
    %2120 = vmatpush.bf16.msra.mxu0 %v2049
    %2121 = vmatmul.bf16.gmra.mxu0 %v1849
    %v2122 = vpop.f32.mrf.mxu0
    %v2123 = vadd.f32 0.0, %v2122
    %v2124 = vpop.f32.mrf.mxu0
    %v2125 = vadd.f32 0.0, %v2124
    %2126 = vmatmul.bf16.gmra.mxu0 %v1853
    %v2127 = vpop.f32.mrf.mxu0
    %v2128 = vadd.f32 0.0, %v2127
    %v2129 = vpop.f32.mrf.mxu0
    %v2130 = vadd.f32 0.0, %v2129
    %2131 = vdwg.mxu0
    %2132 = vmatpush.bf16.msra.mxu0 %v2064
    %2133 = vmatpush.bf16.msra.mxu0 %v2063
    %2134 = vmatpush.bf16.msra.mxu0 %v2062
    %2135 = vmatpush.bf16.msra.mxu0 %v2061
    %2136 = vmatpush.bf16.msra.mxu0 %v2060
    %2137 = vmatpush.bf16.msra.mxu0 %v2059
    %2138 = vmatpush.bf16.msra.mxu0 %v2058
    %2139 = vmatpush.bf16.msra.mxu0 %v2057
    %2140 = vmatmul.bf16.gmra.mxu0 %v1850
    %v2141 = vpop.f32.mrf.mxu0
    %v2142 = vadd.f32 %v2123, %v2141
    %v2143 = vpop.f32.mrf.mxu0
    %v2144 = vadd.f32 %v2125, %v2143
    %2145 = vmatmul.bf16.gmra.mxu0 %v1854
    %v2146 = vpop.f32.mrf.mxu0
    %v2147 = vadd.f32 %v2128, %v2146
    %v2148 = vpop.f32.mrf.mxu0
    %v2149 = vadd.f32 %v2130, %v2148
    %2150 = vdwg.mxu0
    %2151 = vmatpush.bf16.msra.mxu0 %v2072
    %2152 = vmatpush.bf16.msra.mxu0 %v2071
    %2153 = vmatpush.bf16.msra.mxu0 %v2070
    %2154 = vmatpush.bf16.msra.mxu0 %v2069
    %2155 = vmatpush.bf16.msra.mxu0 %v2068
    %2156 = vmatpush.bf16.msra.mxu0 %v2067
    %2157 = vmatpush.bf16.msra.mxu0 %v2066
    %2158 = vmatpush.bf16.msra.mxu0 %v2065
    %2159 = vmatmul.bf16.gmra.mxu0 %v1851
    %v2160 = vpop.f32.mrf.mxu0
    %v2161 = vadd.f32 %v2142, %v2160
    %v2162 = vpop.f32.mrf.mxu0
    %v2163 = vadd.f32 %v2144, %v2162
    %2164 = vmatmul.bf16.gmra.mxu0 %v1855
    %v2165 = vpop.f32.mrf.mxu0
    %v2166 = vadd.f32 %v2147, %v2165
    %v2167 = vpop.f32.mrf.mxu0
    %v2168 = vadd.f32 %v2149, %v2167
    %2169 = vdwg.mxu0
    %2170 = vmatpush.bf16.msra.mxu0 %v2080
    %2171 = vmatpush.bf16.msra.mxu0 %v2079
    %2172 = vmatpush.bf16.msra.mxu0 %v2078
    %2173 = vmatpush.bf16.msra.mxu0 %v2077
    %2174 = vmatpush.bf16.msra.mxu0 %v2076
    %2175 = vmatpush.bf16.msra.mxu0 %v2075
    %2176 = vmatpush.bf16.msra.mxu0 %v2074
    %2177 = vmatpush.bf16.msra.mxu0 %v2073
    %2178 = vmatmul.bf16.gmra.mxu0 %v1852
    %v2179 = vpop.f32.mrf.mxu0
    %v2180 = vadd.f32 %v2161, %v2179
    %v2181 = vpop.f32.mrf.mxu0
    %v2182 = vadd.f32 %v2163, %v2181
    %2183 = vmatmul.bf16.gmra.mxu0 %v1856
    %v2184 = vpop.f32.mrf.mxu0
    %v2185 = vadd.f32 %v2166, %v2184
    %v2186 = vpop.f32.mrf.mxu0
    %v2187 = vadd.f32 %v2168, %v2186
    %2188 = vdwg.mxu0
    %v2189 = vmul.f32 %v2180, 100.0
    %v2190 = vmul.f32 %v2182, 100.0
    %v2191 = vmul.f32 %v2185, 100.0
    %v2192 = vmul.f32 %v2187, 100.0
    %2193 = vst [vmem:[#allocation8] sm:$0xff] %v1833
    %2194 = vst [vmem:[#allocation8 + $0x8] sm:$0xff] %v1834
    %2195 = vst [vmem:[#allocation8 + $0x10] sm:$0xff] %v1835
    %2196 = vst [vmem:[#allocation8 + $0x18] sm:$0xff] %v1836
    %2197 = vst [vmem:[#allocation8 + $0x20] sm:$0xff] %v1837
    %2198 = vst [vmem:[#allocation8 + $0x28] sm:$0xff] %v1838
    %2199 = vst [vmem:[#allocation8 + $0x30] sm:$0xff] %v1839
    %2200 = vst [vmem:[#allocation8 + $0x38] sm:$0xff] %v1840
    %2201 = vst [vmem:[#allocation8 + $0x40] sm:$0xff] %v1841
    %2202 = vst [vmem:[#allocation8 + $0x48] sm:$0xff] %v1842
    %2203 = vst [vmem:[#allocation8 + $0x50] sm:$0xff] %v1843
    %2204 = vst [vmem:[#allocation8 + $0x58] sm:$0xff] %v1844
    %2205 = vst [vmem:[#allocation8 + $0x60] sm:$0xff] %v1845
    %2206 = vst [vmem:[#allocation8 + $0x68] sm:$0xff] %v1846
    %2207 = vst [vmem:[#allocation8 + $0x70] sm:$0xff] %v1847
    %2208 = vst [vmem:[#allocation8 + $0x78] sm:$0xff] %v1848
    %vm2209 = vcmask 7168
    %2210 = vst.msk [vmem:[#allocation9] sm:$0xff] %vm2209, %v1802
    %2211 = vst.msk [vmem:[#allocation9 + $0x8] sm:$0xff] %vm2209, %v1812
    %2212 = vst.msk [vmem:[#allocation9 + $0x10] sm:$0xff] %vm2209, %v1822
    %2213 = vst.msk [vmem:[#allocation9 + $0x18] sm:$0xff] %vm2209, %v1832
    %2214 = vst [vmem:[%s6] sm:$0xff] %v2189
    %2215 = vst [vmem:[%s6 + $0x8] sm:$0xff] %v2190
    %2216 = vst [vmem:[%s6 + $0x10] sm:$0xff] %v2191
    %2217 = vst [vmem:[%s6 + $0x18] sm:$0xff] %v2192
    // Predicated region
    $region30: #{tnt_adapt_and_predict.1} parent=1 // pred_check
      _
    $region31: #{tnt_adapt_and_predict.1} parent=1 // pred_check_branch
      %2219 = sbr.rel (0) target = $region33
    $region32: #{tnt_adapt_and_predict.1} parent=1 // pred_region
      %2221 = vsyncadd [#allocation4], 0
      %s2222 = sshll.u32 [#allocation8], 4
      %s2223 = int_to_ptr.vmem [resolvable:$true] %s2222
      %s2224 = sshll.u32 %s4, 4
      %s2225 = int_to_ptr.hbm [resolvable:$true] %s2224
      %2230 = dma.vmem_to_hbm [thread:$0]  %s2223, 2048, %s2225, [#allocation4], 512, 512, 32
    $region33: #{tnt_adapt_and_predict.1} parent=1 // pred_fallthru
      _
    // Predicated region
    $region34: #{tnt_adapt_and_predict.1} parent=1 // pred_check
      _
    $region35: #{tnt_adapt_and_predict.1} parent=1 // pred_check_branch
      %2232 = sbr.rel (0) target = $region37
    $region36: #{tnt_adapt_and_predict.1} parent=1 // pred_region
      %2234 = vsyncadd [#allocation10], 0
      %s2235 = sshll.u32 [#allocation9], 4
      %s2236 = int_to_ptr.vmem [resolvable:$true] %s2235
      %s2237 = sshll.u32 %s5, 4
      %s2238 = int_to_ptr.hbm [resolvable:$true] %s2237
      %2243 = dma.vmem_to_hbm [thread:$0]  %s2236, 512, %s2238, [#allocation10], 128, 128, 8
    $region37: #{tnt_adapt_and_predict.1} parent=1 // pred_fallthru
      _
    // Predicated region
    $region38: #{tnt_adapt_and_predict.1} parent=1 // pred_check
      _
    $region39: #{tnt_adapt_and_predict.1} parent=1 // pred_check_branch
      %2245 = sbr.rel (0) target = $region41
    $region40: #{tnt_adapt_and_predict.1} parent=1 // pred_region
      _
    $region41: #{tnt_adapt_and_predict.1} parent=1 // pred_fallthru
      _
    // Predicated region
    $region42: #{tnt_adapt_and_predict.1} parent=1 // pred_check
      _
    $region43: #{tnt_adapt_and_predict.1} parent=1 // pred_check_branch
      %2247 = sbr.rel (0) target = $region45
    $region44: #{tnt_adapt_and_predict.1} parent=1 // pred_region
      %2249 = dma.done [#allocation4], 2048
    $region45: #{tnt_adapt_and_predict.1} parent=1 // pred_fallthru
      _
    // Predicated region
    $region46: #{tnt_adapt_and_predict.1} parent=1 // pred_check
      _
    $region47: #{tnt_adapt_and_predict.1} parent=1 // pred_check_branch
      %2251 = sbr.rel (0) target = $region49
    $region48: #{tnt_adapt_and_predict.1} parent=1 // pred_region
      %2253 = dma.done [#allocation10], 512
    $region49: #{tnt_adapt_and_predict.1} parent=1 // pred_fallthru
      _
    // Predicated region
    $region50: #{tnt_adapt_and_predict.1} parent=1 // pred_check
      _
    $region51: #{tnt_adapt_and_predict.1} parent=1 // pred_check_branch
      %2255 = sbr.rel (0) target = $region53
    $region52: #{tnt_adapt_and_predict.1} parent=1 // pred_region
      _
    $region53: #{tnt_adapt_and_predict.1} parent=1 // pred_fallthru
      _
    %2256 = vsyncpa [#allocation3], 1
    %2257 = vsyncpa [#allocation6], 1
    %2258 = vsyncpa [#allocation4], 1
    %2259 = vsyncpa [#allocation10], 1

</llo_original>
